<compile_context>
chip_gen: v5e
topology: v5e:2x2
jax: 0.10.0
libtpu: 0.0.40
codegen_flags: <defaults>
</compile_context>

<pallas_src>
import math
from functools import partial

import jax
import jax.numpy as jnp
from jax.experimental import pallas as pl
from jax.experimental.pallas import tpu as pltpu


# --------------------------- in-kernel helpers -------------------------------

def _add_layer_norm(x, res, gamma, beta, eps=1e-5):
    """Residual add + post-LayerNorm, all in f32."""
    h = x + res
    mean = jnp.mean(h, axis=-1, keepdims=True)
    var = jnp.mean(jnp.square(h - mean), axis=-1, keepdims=True)
    return (h - mean) * jax.lax.rsqrt(var + eps) * gamma + beta


def _multi_head_attention(q, k, v, mask, n_heads, scale):
    """q: [Lq, D], k/v: [Lk, D] (f32), mask: [Lq, Lk] int8 -> [Lq, D] f32."""
    D = q.shape[-1]
    Dh = D // n_heads
    qb = q.astype(jnp.bfloat16)
    kb = k.astype(jnp.bfloat16)
    vb = v.astype(jnp.bfloat16)
    keep = mask != 0
    ctx = []
    for h in range(n_heads):                       # static unroll over heads
        sl = slice(h * Dh, (h + 1) * Dh)
        # scores = q_h @ k_h^T without an explicit transpose of k
        s = jax.lax.dot_general(
            qb[:, sl], kb[:, sl], (((1,), (1,)), ((), ())),
            preferred_element_type=jnp.float32) * scale
        s = jnp.where(keep, s, -1e10)
        m = jnp.max(s, axis=-1, keepdims=True)
        e = jnp.exp(s - m)
        p = e * pl.reciprocal(jnp.sum(e, axis=-1, keepdims=True), approx=True)
        ctx.append(jnp.dot(p.astype(jnp.bfloat16), vb[:, sl],
                           preferred_element_type=jnp.float32))
    return jnp.concatenate(ctx, axis=-1)


# --------------------------- fused layer kernels ------------------------------

def _encoder_layer_kernel(x_ref, mask_ref,
                          wqkv_ref, bqkv_ref, wo_ref, bo_ref,
                          ln1g_ref, ln1b_ref,
                          w1_ref, b1_ref, w2_ref, b2_ref,
                          ln2g_ref, ln2b_ref,
                          o_ref, *, n_heads, scale):
    x = x_ref[0]                                              # [L, D] f32
    D = x.shape[-1]

    # fused QKV projection (bf16 MXU, f32 accumulation)
    qkv = jnp.dot(x.astype(jnp.bfloat16), wqkv_ref[...],
                  preferred_element_type=jnp.float32) + bqkv_ref[...]
    ctx = _multi_head_attention(qkv[:, :D], qkv[:, D:2 * D], qkv[:, 2 * D:],
                                mask_ref[0], n_heads, scale)
    attn = jnp.dot(ctx.astype(jnp.bfloat16), wo_ref[...],
                   preferred_element_type=jnp.float32) + bo_ref[...]
    h = _add_layer_norm(x, attn, ln1g_ref[...], ln1b_ref[...])

    # position-wise FFN (bias + ReLU + second matmul fused)
    f = jnp.dot(h.astype(jnp.bfloat16), w1_ref[...],
                preferred_element_type=jnp.float32) + b1_ref[...]
    f = jnp.maximum(f, 0.0)
    f = jnp.dot(f.astype(jnp.bfloat16), w2_ref[...],
                preferred_element_type=jnp.float32) + b2_ref[...]
    o_ref[0] = _add_layer_norm(h, f, ln2g_ref[...], ln2b_ref[...]).astype(o_ref.dtype)


def _decoder_layer_kernel(x_ref, enc_ref, tmask_ref, smask_ref,
                          sa_wqkv_ref, sa_bqkv_ref, sa_wo_ref, sa_bo_ref,
                          ln1g_ref, ln1b_ref,
                          ca_wqkv_ref, ca_bqkv_ref, ca_wo_ref, ca_bo_ref,
                          ln2g_ref, ln2b_ref,
                          w1_ref, b1_ref, w2_ref, b2_ref,
                          ln3g_ref, ln3b_ref,
                          o_ref, *, n_heads, scale):
    x = x_ref[0]                                              # [Lt, D] f32
    enc = enc_ref[0]                                          # [Ls, D] f32
    D = x.shape[-1]

    # masked self-attention + residual + LN
    qkv = jnp.dot(x.astype(jnp.bfloat16), sa_wqkv_ref[...],
                  preferred_element_type=jnp.float32) + sa_bqkv_ref[...]
    ctx = _multi_head_attention(qkv[:, :D], qkv[:, D:2 * D], qkv[:, 2 * D:],
                                tmask_ref[0], n_heads, scale)
    sa = jnp.dot(ctx.astype(jnp.bfloat16), sa_wo_ref[...],
                 preferred_element_type=jnp.float32) + sa_bo_ref[...]
    h = _add_layer_norm(x, sa, ln1g_ref[...], ln1b_ref[...])

    # cross-attention (queries from decoder, keys/values from encoder output)
    # note: packed QKV matmul run on both inputs; unused thirds are negligible
    qkv_q = jnp.dot(h.astype(jnp.bfloat16), ca_wqkv_ref[...],
                    preferred_element_type=jnp.float32) + ca_bqkv_ref[...]
    qkv_kv = jnp.dot(enc.astype(jnp.bfloat16), ca_wqkv_ref[...],
                     preferred_element_type=jnp.float32) + ca_bqkv_ref[...]
    ctx2 = _multi_head_attention(qkv_q[:, :D], qkv_kv[:, D:2 * D], qkv_kv[:, 2 * D:],
                                 smask_ref[0], n_heads, scale)
    ca = jnp.dot(ctx2.astype(jnp.bfloat16), ca_wo_ref[...],
                 preferred_element_type=jnp.float32) + ca_bo_ref[...]
    h2 = _add_layer_norm(h, ca, ln2g_ref[...], ln2b_ref[...])

    # position-wise FFN + residual + LN
    f = jnp.dot(h2.astype(jnp.bfloat16), w1_ref[...],
                preferred_element_type=jnp.float32) + b1_ref[...]
    f = jnp.maximum(f, 0.0)
    f = jnp.dot(f.astype(jnp.bfloat16), w2_ref[...],
                preferred_element_type=jnp.float32) + b2_ref[...]
    o_ref[0] = _add_layer_norm(h2, f, ln3g_ref[...], ln3b_ref[...]).astype(o_ref.dtype)


def _linear_kernel(x_ref, w_ref, b_ref, o_ref):
    o_ref[...] = (jnp.dot(x_ref[...].astype(jnp.bfloat16), w_ref[...],
                          preferred_element_type=jnp.float32)
                  + b_ref[...]).astype(o_ref.dtype)


# ------------------------------ host wrappers ---------------------------------

def _batched_spec(shape):
    """Per-batch [B, d1, d2] tensor -> block (1, d1, d2) indexed by batch."""
    return pl.BlockSpec((1,) + tuple(shape[1:]), lambda b: (b, 0, 0))


def _resident_spec(shape):
    """Weight resident across the batch grid (same block every step)."""
    nd = len(shape)
    return pl.BlockSpec(tuple(shape), lambda b: (0,) * nd)


def encoder_layer(p, src, mask, n_heads):
    B, L, D = src.shape
    scale = 1.0 / math.sqrt(D // n_heads)
    weights = [p["wqkv"], p["bqkv"], p["wo"], p["bo"],
               p["ln1_g"], p["ln1_b"],
               p["ff_w1"], p["ff_b1"], p["ff_w2"], p["ff_b2"],
               p["ln2_g"], p["ln2_b"]]
    return pl.pallas_call(
        partial(_encoder_layer_kernel, n_heads=n_heads, scale=scale),
        grid=(B,),
        out_shape=jax.ShapeDtypeStruct((B, L, D), jnp.float32),
        in_specs=[_batched_spec(src.shape), _batched_spec(mask.shape)]
                 + [_resident_spec(w.shape) for w in weights],
        out_specs=pl.BlockSpec((1, L, D), lambda b: (b, 0, 0)),
        compiler_params=pltpu.CompilerParams(dimension_semantics=("parallel",)),
    )(src, mask, *weights)


def decoder_layer(p, trg, enc, trg_mask, src_mask, n_heads):
    B, Lt, D = trg.shape
    weights = [p["sa_wqkv"], p["sa_bqkv"], p["sa_wo"], p["sa_bo"],
               p["ln1_g"], p["ln1_b"],
               p["ca_wqkv"], p["ca_bqkv"], p["ca_wo"], p["ca_bo"],
               p["ln2_g"], p["ln2_b"],
               p["ff_w1"], p["ff_b1"], p["ff_w2"], p["ff_b2"],
               p["ln3_g"], p["ln3_b"]]
    scale = 1.0 / math.sqrt(D // n_heads)
    return pl.pallas_call(
        partial(_decoder_layer_kernel, n_heads=n_heads, scale=scale),
        grid=(B,),
        out_shape=jax.ShapeDtypeStruct((B, Lt, D), jnp.float32),
        in_specs=[_batched_spec(trg.shape), _batched_spec(enc.shape),
                  _batched_spec(trg_mask.shape), _batched_spec(src_mask.shape)]
                 + [_resident_spec(w.shape) for w in weights],
        out_specs=pl.BlockSpec((1, Lt, D), lambda b: (b, 0, 0)),
        compiler_params=pltpu.CompilerParams(dimension_semantics=("parallel",)),
    )(trg, enc, trg_mask, src_mask, *weights)


def _fc_out(x, w, b):
    M, K = x.shape
    N = w.shape[1]
    return pl.pallas_call(
        _linear_kernel,
        grid=(1,),
        out_shape=jax.ShapeDtypeStruct((M, N), jnp.float32),
        in_specs=[pl.BlockSpec((M, K), lambda i: (0, 0)),
                  pl.BlockSpec((K, N), lambda i: (0, 0)),
                  pl.BlockSpec((1, N), lambda i: (0, 0))],
        out_specs=pl.BlockSpec((M, N), lambda i: (0, 0)),
    )(x, w, b)


def encoder_stack(p, src_tokens, enc_self_mask, n_heads, hid_dim):
    L = src_tokens.shape[1]
    scale = math.sqrt(hid_dim)
    pos = jnp.arange(L)
    # token/positional embedding gather stays in XLA (data-dependent gather)
    x = jnp.take(p["tok_emb"], src_tokens, axis=0) * scale \
        + jnp.take(p["pos_emb"], pos, axis=0)[None, :, :]
    # TODO(synk): dropout omitted (eval-mode identity)
    for lp in p["layers"]:
        x = encoder_layer(lp, x, enc_self_mask, n_heads)
    return x


def decoder_stack(p, trg_tokens, enc_src, dec_self_mask, cross_mask, n_heads, hid_dim):
    B, L = trg_tokens.shape
    scale = math.sqrt(hid_dim)
    pos = jnp.arange(L)
    x = jnp.take(p["tok_emb"], trg_tokens, axis=0) * scale \
        + jnp.take(p["pos_emb"], pos, axis=0)[None, :, :]
    for lp in p["layers"]:
        x = decoder_layer(lp, x, enc_src, dec_self_mask, cross_mask, n_heads)
    D = x.shape[-1]
    out = _fc_out(x.reshape(B * L, D), p["fc_out_w"], p["fc_out_b"])
    return out.reshape(B, L, -1)


def seq2seq_forward(params, source, target, src_pad_idx, trg_pad_idx,
                    n_heads, hid_dim):
    B, Ls = source.shape
    Lt = target.shape[1]
    # masks built once, int8 (1 = keep, 0 = masked)
    src_keep = source != src_pad_idx                                   # [B, Ls]
    trg_keep = target != trg_pad_idx                                   # [B, Lt]
    causal = jnp.tril(jnp.ones((Lt, Lt), dtype=bool))                  # [Lt, Lt]
    enc_self_mask = jnp.broadcast_to(src_keep[:, None, :], (B, Ls, Ls)).astype(jnp.int8)
    cross_mask = jnp.broadcast_to(src_keep[:, None, :], (B, Lt, Ls)).astype(jnp.int8)
    dec_self_mask = (causal[None, :, :] & trg_keep[:, None, :]).astype(jnp.int8)

    enc_out = encoder_stack(params["encoder"], source, enc_self_mask, n_heads, hid_dim)
    dec_out = decoder_stack(params["decoder"], target, enc_out,
                            dec_self_mask, cross_mask, n_heads, hid_dim)
    return dec_out


# --------------------------- deterministic init ------------------------------

def _init_mha(key, d):
    kq, kk, kv, ko = jax.random.split(key, 4)

    def w(k, i, o):
        return jax.random.normal(k, (i, o), jnp.float32) * 0.02

    wqkv = jnp.concatenate([w(kq, d, d), w(kk, d, d), w(kv, d, d)], axis=1)
    return dict(wqkv=wqkv.astype(jnp.bfloat16),
                bqkv=jnp.zeros((1, 3 * d), jnp.float32),
                wo=w(ko, d, d).astype(jnp.bfloat16),
                bo=jnp.zeros((1, d), jnp.float32))


def _init_ffn(key, d, pf):
    k1, k2 = jax.random.split(key)
    return dict(
        ff_w1=(jax.random.normal(k1, (d, pf), jnp.float32) * 0.02).astype(jnp.bfloat16),
        ff_b1=jnp.zeros((1, pf), jnp.float32),
        ff_w2=(jax.random.normal(k2, (pf, d), jnp.float32) * 0.02).astype(jnp.bfloat16),
        ff_b2=jnp.zeros((1, d), jnp.float32))


def _ln(d):
    return jnp.ones((1, d), jnp.float32), jnp.zeros((1, d), jnp.float32)


def _init_enc_layer(key, d, pf):
    ka, kf = jax.random.split(key)
    mha = _init_mha(ka, d)
    ffn = _init_ffn(kf, d, pf)
    g1, b1 = _ln(d)
    g2, b2 = _ln(d)
    return dict(wqkv=mha["wqkv"], bqkv=mha["bqkv"], wo=mha["wo"], bo=mha["bo"],
                ln1_g=g1, ln1_b=b1, ln2_g=g2, ln2_b=b2, **ffn)


def _init_dec_layer(key, d, pf):
    ka, kc, kf = jax.random.split(key, 3)
    sa = _init_mha(ka, d)
    ca = _init_mha(kc, d)
    ffn = _init_ffn(kf, d, pf)
    g1, b1 = _ln(d)
    g2, b2 = _ln(d)
    g3, b3 = _ln(d)
    return dict(sa_wqkv=sa["wqkv"], sa_bqkv=sa["bqkv"], sa_wo=sa["wo"], sa_bo=sa["bo"],
                ca_wqkv=ca["wqkv"], ca_bqkv=ca["bqkv"], ca_wo=ca["wo"], ca_bo=ca["bo"],
                ln1_g=g1, ln1_b=b1, ln2_g=g2, ln2_b=b2, ln3_g=g3, ln3_b=b3, **ffn)


def init_params(key, input_dim, output_dim, hid_dim, n_layers, pf_dim, max_len):
    ke, kd = jax.random.split(key)
    ks_e = jax.random.split(ke, n_layers + 2)
    ks_d = jax.random.split(kd, n_layers + 3)
    encoder = dict(
        tok_emb=jax.random.normal(ks_e[0], (input_dim, hid_dim), jnp.float32) * 0.02,
        pos_emb=jax.random.normal(ks_e[1], (max_len, hid_dim), jnp.float32) * 0.02,
        layers=[_init_enc_layer(ks_e[2 + i], hid_dim, pf_dim) for i in range(n_layers)],
    )
    fco_w = (jax.random.normal(ks_d[2 + n_layers], (hid_dim, output_dim),
                               jnp.float32) * 0.02).astype(jnp.bfloat16)
    decoder = dict(
        tok_emb=jax.random.normal(ks_d[0], (output_dim, hid_dim), jnp.float32) * 0.02,
        pos_emb=jax.random.normal(ks_d[1], (max_len, hid_dim), jnp.float32) * 0.02,
        layers=[_init_dec_layer(ks_d[2 + i], hid_dim, pf_dim) for i in range(n_layers)],
        fc_out_w=fco_w, fc_out_b=jnp.zeros((1, output_dim), jnp.float32),
    )
    return dict(encoder=encoder, decoder=decoder)


# ----------------------------------- main ------------------------------------

if __name__ == "__main__":
    INPUT_DIM = 20     # source vocab
    OUTPUT_DIM = 22    # target vocab
    HID_DIM = 32
    N_LAYERS = 2
    N_HEADS = 4
    PF_DIM = 64
    MAX_LEN = 16
    SRC_PAD_IDX = 0
    TRG_PAD_IDX = 0

    B, LS, LT = 2, 8, 8

    key = jax.random.PRNGKey(0)
    kp, ks, kt = jax.random.split(key, 3)

    params = init_params(kp, INPUT_DIM, OUTPUT_DIM, HID_DIM, N_LAYERS, PF_DIM, MAX_LEN)

    source = jax.random.randint(ks, (B, LS), 1, INPUT_DIM, dtype=jnp.int32)
    target = jax.random.randint(kt, (B, LT), 1, OUTPUT_DIM, dtype=jnp.int32)
    # add some padding to exercise the masks
    source = source.at[1, 6:].set(SRC_PAD_IDX)
    target = target.at[0, 7:].set(TRG_PAD_IDX)

    fwd = jax.jit(partial(seq2seq_forward,
                          src_pad_idx=SRC_PAD_IDX, trg_pad_idx=TRG_PAD_IDX,
                          n_heads=N_HEADS, hid_dim=HID_DIM))
    out = fwd(params, source, target)
    jax.block_until_ready(out)

    assert out.shape == (B, LT, OUTPUT_DIM)
    assert jnp.all(jnp.isfinite(out))
    print("KERNEL_OK")
</pallas_src>

<mosaic_0001>
module attributes {stable_mosaic.version = 11 : i64} {
  func.func @_encoder_layer_kernel(%arg0: i32, %arg1: memref<1x8x32xf32, #tpu.memory_space<vmem>>, %arg2: memref<1x8x8xi8, #tpu.memory_space<vmem>>, %arg3: memref<32x96xbf16, #tpu.memory_space<vmem>>, %arg4: memref<1x96xf32, #tpu.memory_space<vmem>>, %arg5: memref<32x32xbf16, #tpu.memory_space<vmem>>, %arg6: memref<1x32xf32, #tpu.memory_space<vmem>>, %arg7: memref<1x32xf32, #tpu.memory_space<vmem>>, %arg8: memref<1x32xf32, #tpu.memory_space<vmem>>, %arg9: memref<32x64xbf16, #tpu.memory_space<vmem>>, %arg10: memref<1x64xf32, #tpu.memory_space<vmem>>, %arg11: memref<64x32xbf16, #tpu.memory_space<vmem>>, %arg12: memref<1x32xf32, #tpu.memory_space<vmem>>, %arg13: memref<1x32xf32, #tpu.memory_space<vmem>>, %arg14: memref<1x32xf32, #tpu.memory_space<vmem>>, %arg15: memref<1x8x32xf32, #tpu.memory_space<vmem>>) attributes {dimension_semantics = [#tpu.dimension_semantics<parallel>], iteration_bounds = array<i64: 2>, scalar_prefetch = 0 : i64, scratch_operands = 0 : i64, tpu.core_type = #tpu.core_type<tc>, window_params = [{transform_indices = @transform_0, window_bounds = array<i64: 1, 8, 32>}, {transform_indices = @transform_1, window_bounds = array<i64: 1, 8, 8>}, {pipeline_mode = #tpu.pipeline_mode<synchronous>, transform_indices = @transform_2, window_bounds = array<i64: 32, 96>}, {pipeline_mode = #tpu.pipeline_mode<synchronous>, transform_indices = @transform_3, window_bounds = array<i64: 1, 96>}, {pipeline_mode = #tpu.pipeline_mode<synchronous>, transform_indices = @transform_4, window_bounds = array<i64: 32, 32>}, {pipeline_mode = #tpu.pipeline_mode<synchronous>, transform_indices = @transform_5, window_bounds = array<i64: 1, 32>}, {pipeline_mode = #tpu.pipeline_mode<synchronous>, transform_indices = @transform_6, window_bounds = array<i64: 1, 32>}, {pipeline_mode = #tpu.pipeline_mode<synchronous>, transform_indices = @transform_7, window_bounds = array<i64: 1, 32>}, {pipeline_mode = #tpu.pipeline_mode<synchronous>, transform_indices = @transform_8, window_bounds = array<i64: 32, 64>}, {pipeline_mode = #tpu.pipeline_mode<synchronous>, transform_indices = @transform_9, window_bounds = array<i64: 1, 64>}, {pipeline_mode = #tpu.pipeline_mode<synchronous>, transform_indices = @transform_10, window_bounds = array<i64: 64, 32>}, {pipeline_mode = #tpu.pipeline_mode<synchronous>, transform_indices = @transform_11, window_bounds = array<i64: 1, 32>}, {pipeline_mode = #tpu.pipeline_mode<synchronous>, transform_indices = @transform_12, window_bounds = array<i64: 1, 32>}, {pipeline_mode = #tpu.pipeline_mode<synchronous>, transform_indices = @transform_13, window_bounds = array<i64: 1, 32>}, {transform_indices = @transform_14, window_bounds = array<i64: 1, 8, 32>}]} {
    %c0 = arith.constant 0 : index
    %c0_0 = arith.constant 0 : index
    %c0_1 = arith.constant 0 : index
    %0 = vector.load %arg1[%c0, %c0_0, %c0_1] : memref<1x8x32xf32, #tpu.memory_space<vmem>>, vector<1x8x32xf32>
    %1 = vector.shape_cast %0 : vector<1x8x32xf32> to vector<8x32xf32>
    %2 = arith.truncf %1 : vector<8x32xf32> to vector<8x32xbf16>
    %c0_2 = arith.constant 0 : index
    %c0_3 = arith.constant 0 : index
    %3 = vector.load %arg3[%c0_2, %c0_3] : memref<32x96xbf16, #tpu.memory_space<vmem>>, vector<32x96xbf16>
    %cst = arith.constant dense<0.000000e+00> : vector<8x96xf32>
    %4 = tpu.matmul %2, %3, %cst {dimension_numbers = #tpu.dot_dimension_numbers<[1], [0], [0], [1], [0, 0, 1, 1], [], []>} : vector<8x32xbf16>, vector<32x96xbf16>, vector<8x96xf32> -> vector<8x96xf32>
    %c0_4 = arith.constant 0 : index
    %c0_5 = arith.constant 0 : index
    %5 = vector.load %arg4[%c0_4, %c0_5] : memref<1x96xf32, #tpu.memory_space<vmem>>, vector<1x96xf32>
    %6 = vector.broadcast %5 : vector<1x96xf32> to vector<8x96xf32>
    %7 = arith.addf %4, %6 : vector<8x96xf32>
    %8 = vector.extract_strided_slice %7 {offsets = [0, 0], sizes = [8, 32], strides = [1, 1]} : vector<8x96xf32> to vector<8x32xf32>
    %9 = vector.extract_strided_slice %7 {offsets = [0, 32], sizes = [8, 32], strides = [1, 1]} : vector<8x96xf32> to vector<8x32xf32>
    %10 = vector.extract_strided_slice %7 {offsets = [0, 64], sizes = [8, 32], strides = [1, 1]} : vector<8x96xf32> to vector<8x32xf32>
    %c0_6 = arith.constant 0 : index
    %c0_7 = arith.constant 0 : index
    %c0_8 = arith.constant 0 : index
    %11 = vector.load %arg2[%c0_6, %c0_7, %c0_8] : memref<1x8x8xi8, #tpu.memory_space<vmem>>, vector<1x8x8xi8>
    %12 = vector.shape_cast %11 : vector<1x8x8xi8> to vector<8x8xi8>
    %13 = arith.truncf %8 : vector<8x32xf32> to vector<8x32xbf16>
    %14 = arith.truncf %9 : vector<8x32xf32> to vector<8x32xbf16>
    %15 = arith.truncf %10 : vector<8x32xf32> to vector<8x32xbf16>
    %c0_i8 = arith.constant 0 : i8
    %16 = vector.broadcast %c0_i8 : i8 to vector<8x8xi8>
    %17 = arith.cmpi ne, %12, %16 : vector<8x8xi8>
    %18 = vector.extract_strided_slice %13 {offsets = [0, 0], sizes = [8, 8], strides = [1, 1]} : vector<8x32xbf16> to vector<8x8xbf16>
    %19 = vector.extract_strided_slice %14 {offsets = [0, 0], sizes = [8, 8], strides = [1, 1]} : vector<8x32xbf16> to vector<8x8xbf16>
    %cst_9 = arith.constant dense<0.000000e+00> : vector<8x8xf32>
    %20 = tpu.matmul %18, %19, %cst_9 {dimension_numbers = #tpu.dot_dimension_numbers<[1], [1], [0], [0], [0, 0, 1, 0], [], []>} : vector<8x8xbf16>, vector<8x8xbf16>, vector<8x8xf32> -> vector<8x8xf32>
    %cst_10 = arith.constant 0.353553385 : f32
    %21 = vector.broadcast %cst_10 : f32 to vector<8x8xf32>
    %22 = arith.mulf %20, %21 : vector<8x8xf32>
    %cst_11 = arith.constant -1.000000e+10 : f32
    %23 = vector.broadcast %cst_11 : f32 to vector<8x8xf32>
    %24 = arith.select %17, %22, %23 : vector<8x8xi1>, vector<8x8xf32>
    %cst_12 = arith.constant dense<0xFF800000> : vector<8xf32>
    %25 = vector.multi_reduction <maximumf>, %24, %cst_12 [1] : vector<8x8xf32> to vector<8xf32>
    %26 = vector.shape_cast %25 : vector<8xf32> to vector<8x1xf32>
    %27 = vector.broadcast %26 : vector<8x1xf32> to vector<8x8xf32>
    %28 = arith.subf %24, %27 : vector<8x8xf32>
    %29 = math.exp %28 : vector<8x8xf32>
    %cst_13 = arith.constant dense<0.000000e+00> : vector<8xf32>
    %30 = vector.multi_reduction <add>, %29, %cst_13 [1] : vector<8x8xf32> to vector<8xf32>
    %31 = vector.shape_cast %30 : vector<8xf32> to vector<8x1xf32>
    %32 = tpu.reciprocal %31 {approx = true} : vector<8x1xf32> -> vector<8x1xf32>
    %33 = vector.broadcast %32 : vector<8x1xf32> to vector<8x8xf32>
    %34 = arith.mulf %29, %33 : vector<8x8xf32>
    %35 = arith.truncf %34 : vector<8x8xf32> to vector<8x8xbf16>
    %36 = vector.extract_strided_slice %15 {offsets = [0, 0], sizes = [8, 8], strides = [1, 1]} : vector<8x32xbf16> to vector<8x8xbf16>
    %cst_14 = arith.constant dense<0.000000e+00> : vector<8x8xf32>
    %37 = tpu.matmul %35, %36, %cst_14 {dimension_numbers = #tpu.dot_dimension_numbers<[1], [0], [0], [1], [0, 0, 1, 1], [], []>} : vector<8x8xbf16>, vector<8x8xbf16>, vector<8x8xf32> -> vector<8x8xf32>
    %38 = vector.extract_strided_slice %13 {offsets = [0, 8], sizes = [8, 8], strides = [1, 1]} : vector<8x32xbf16> to vector<8x8xbf16>
    %39 = vector.extract_strided_slice %14 {offsets = [0, 8], sizes = [8, 8], strides = [1, 1]} : vector<8x32xbf16> to vector<8x8xbf16>
    %cst_15 = arith.constant dense<0.000000e+00> : vector<8x8xf32>
    %40 = tpu.matmul %38, %39, %cst_15 {dimension_numbers = #tpu.dot_dimension_numbers<[1], [1], [0], [0], [0, 0, 1, 0], [], []>} : vector<8x8xbf16>, vector<8x8xbf16>, vector<8x8xf32> -> vector<8x8xf32>
    %cst_16 = arith.constant 0.353553385 : f32
    %41 = vector.broadcast %cst_16 : f32 to vector<8x8xf32>
    %42 = arith.mulf %40, %41 : vector<8x8xf32>
    %cst_17 = arith.constant -1.000000e+10 : f32
    %43 = vector.broadcast %cst_17 : f32 to vector<8x8xf32>
    %44 = arith.select %17, %42, %43 : vector<8x8xi1>, vector<8x8xf32>
    %cst_18 = arith.constant dense<0xFF800000> : vector<8xf32>
    %45 = vector.multi_reduction <maximumf>, %44, %cst_18 [1] : vector<8x8xf32> to vector<8xf32>
    %46 = vector.shape_cast %45 : vector<8xf32> to vector<8x1xf32>
    %47 = vector.broadcast %46 : vector<8x1xf32> to vector<8x8xf32>
    %48 = arith.subf %44, %47 : vector<8x8xf32>
    %49 = math.exp %48 : vector<8x8xf32>
    %cst_19 = arith.constant dense<0.000000e+00> : vector<8xf32>
    %50 = vector.multi_reduction <add>, %49, %cst_19 [1] : vector<8x8xf32> to vector<8xf32>
    %51 = vector.shape_cast %50 : vector<8xf32> to vector<8x1xf32>
    %52 = tpu.reciprocal %51 {approx = true} : vector<8x1xf32> -> vector<8x1xf32>
    %53 = vector.broadcast %52 : vector<8x1xf32> to vector<8x8xf32>
    %54 = arith.mulf %49, %53 : vector<8x8xf32>
    %55 = arith.truncf %54 : vector<8x8xf32> to vector<8x8xbf16>
    %56 = vector.extract_strided_slice %15 {offsets = [0, 8], sizes = [8, 8], strides = [1, 1]} : vector<8x32xbf16> to vector<8x8xbf16>
    %cst_20 = arith.constant dense<0.000000e+00> : vector<8x8xf32>
    %57 = tpu.matmul %55, %56, %cst_20 {dimension_numbers = #tpu.dot_dimension_numbers<[1], [0], [0], [1], [0, 0, 1, 1], [], []>} : vector<8x8xbf16>, vector<8x8xbf16>, vector<8x8xf32> -> vector<8x8xf32>
    %58 = vector.extract_strided_slice %13 {offsets = [0, 16], sizes = [8, 8], strides = [1, 1]} : vector<8x32xbf16> to vector<8x8xbf16>
    %59 = vector.extract_strided_slice %14 {offsets = [0, 16], sizes = [8, 8], strides = [1, 1]} : vector<8x32xbf16> to vector<8x8xbf16>
    %cst_21 = arith.constant dense<0.000000e+00> : vector<8x8xf32>
    %60 = tpu.matmul %58, %59, %cst_21 {dimension_numbers = #tpu.dot_dimension_numbers<[1], [1], [0], [0], [0, 0, 1, 0], [], []>} : vector<8x8xbf16>, vector<8x8xbf16>, vector<8x8xf32> -> vector<8x8xf32>
    %cst_22 = arith.constant 0.353553385 : f32
    %61 = vector.broadcast %cst_22 : f32 to vector<8x8xf32>
    %62 = arith.mulf %60, %61 : vector<8x8xf32>
    %cst_23 = arith.constant -1.000000e+10 : f32
    %63 = vector.broadcast %cst_23 : f32 to vector<8x8xf32>
    %64 = arith.select %17, %62, %63 : vector<8x8xi1>, vector<8x8xf32>
    %cst_24 = arith.constant dense<0xFF800000> : vector<8xf32>
    %65 = vector.multi_reduction <maximumf>, %64, %cst_24 [1] : vector<8x8xf32> to vector<8xf32>
    %66 = vector.shape_cast %65 : vector<8xf32> to vector<8x1xf32>
    %67 = vector.broadcast %66 : vector<8x1xf32> to vector<8x8xf32>
    %68 = arith.subf %64, %67 : vector<8x8xf32>
    %69 = math.exp %68 : vector<8x8xf32>
    %cst_25 = arith.constant dense<0.000000e+00> : vector<8xf32>
    %70 = vector.multi_reduction <add>, %69, %cst_25 [1] : vector<8x8xf32> to vector<8xf32>
    %71 = vector.shape_cast %70 : vector<8xf32> to vector<8x1xf32>
    %72 = tpu.reciprocal %71 {approx = true} : vector<8x1xf32> -> vector<8x1xf32>
    %73 = vector.broadcast %72 : vector<8x1xf32> to vector<8x8xf32>
    %74 = arith.mulf %69, %73 : vector<8x8xf32>
    %75 = arith.truncf %74 : vector<8x8xf32> to vector<8x8xbf16>
    %76 = vector.extract_strided_slice %15 {offsets = [0, 16], sizes = [8, 8], strides = [1, 1]} : vector<8x32xbf16> to vector<8x8xbf16>
    %cst_26 = arith.constant dense<0.000000e+00> : vector<8x8xf32>
    %77 = tpu.matmul %75, %76, %cst_26 {dimension_numbers = #tpu.dot_dimension_numbers<[1], [0], [0], [1], [0, 0, 1, 1], [], []>} : vector<8x8xbf16>, vector<8x8xbf16>, vector<8x8xf32> -> vector<8x8xf32>
    %78 = vector.extract_strided_slice %13 {offsets = [0, 24], sizes = [8, 8], strides = [1, 1]} : vector<8x32xbf16> to vector<8x8xbf16>
    %79 = vector.extract_strided_slice %14 {offsets = [0, 24], sizes = [8, 8], strides = [1, 1]} : vector<8x32xbf16> to vector<8x8xbf16>
    %cst_27 = arith.constant dense<0.000000e+00> : vector<8x8xf32>
    %80 = tpu.matmul %78, %79, %cst_27 {dimension_numbers = #tpu.dot_dimension_numbers<[1], [1], [0], [0], [0, 0, 1, 0], [], []>} : vector<8x8xbf16>, vector<8x8xbf16>, vector<8x8xf32> -> vector<8x8xf32>
    %cst_28 = arith.constant 0.353553385 : f32
    %81 = vector.broadcast %cst_28 : f32 to vector<8x8xf32>
    %82 = arith.mulf %80, %81 : vector<8x8xf32>
    %cst_29 = arith.constant -1.000000e+10 : f32
    %83 = vector.broadcast %cst_29 : f32 to vector<8x8xf32>
    %84 = arith.select %17, %82, %83 : vector<8x8xi1>, vector<8x8xf32>
    %cst_30 = arith.constant dense<0xFF800000> : vector<8xf32>
    %85 = vector.multi_reduction <maximumf>, %84, %cst_30 [1] : vector<8x8xf32> to vector<8xf32>
    %86 = vector.shape_cast %85 : vector<8xf32> to vector<8x1xf32>
    %87 = vector.broadcast %86 : vector<8x1xf32> to vector<8x8xf32>
    %88 = arith.subf %84, %87 : vector<8x8xf32>
    %89 = math.exp %88 : vector<8x8xf32>
    %cst_31 = arith.constant dense<0.000000e+00> : vector<8xf32>
    %90 = vector.multi_reduction <add>, %89, %cst_31 [1] : vector<8x8xf32> to vector<8xf32>
    %91 = vector.shape_cast %90 : vector<8xf32> to vector<8x1xf32>
    %92 = tpu.reciprocal %91 {approx = true} : vector<8x1xf32> -> vector<8x1xf32>
    %93 = vector.broadcast %92 : vector<8x1xf32> to vector<8x8xf32>
    %94 = arith.mulf %89, %93 : vector<8x8xf32>
    %95 = arith.truncf %94 : vector<8x8xf32> to vector<8x8xbf16>
    %96 = vector.extract_strided_slice %15 {offsets = [0, 24], sizes = [8, 8], strides = [1, 1]} : vector<8x32xbf16> to vector<8x8xbf16>
    %cst_32 = arith.constant dense<0.000000e+00> : vector<8x8xf32>
    %97 = tpu.matmul %95, %96, %cst_32 {dimension_numbers = #tpu.dot_dimension_numbers<[1], [0], [0], [1], [0, 0, 1, 1], [], []>} : vector<8x8xbf16>, vector<8x8xbf16>, vector<8x8xf32> -> vector<8x8xf32>
    %98 = tpu.concatenate %37, %57, %77, %97 in 1 : vector<8x8xf32>, vector<8x8xf32>, vector<8x8xf32>, vector<8x8xf32> -> vector<8x32xf32>
    %99 = arith.truncf %98 : vector<8x32xf32> to vector<8x32xbf16>
    %c0_33 = arith.constant 0 : index
    %c0_34 = arith.constant 0 : index
    %100 = vector.load %arg5[%c0_33, %c0_34] : memref<32x32xbf16, #tpu.memory_space<vmem>>, vector<32x32xbf16>
    %cst_35 = arith.constant dense<0.000000e+00> : vector<8x32xf32>
    %101 = tpu.matmul %99, %100, %cst_35 {dimension_numbers = #tpu.dot_dimension_numbers<[1], [0], [0], [1], [0, 0, 1, 1], [], []>} : vector<8x32xbf16>, vector<32x32xbf16>, vector<8x32xf32> -> vector<8x32xf32>
    %c0_36 = arith.constant 0 : index
    %c0_37 = arith.constant 0 : index
    %102 = vector.load %arg6[%c0_36, %c0_37] : memref<1x32xf32, #tpu.memory_space<vmem>>, vector<1x32xf32>
    %103 = vector.broadcast %102 : vector<1x32xf32> to vector<8x32xf32>
    %104 = arith.addf %101, %103 : vector<8x32xf32>
    %c0_38 = arith.constant 0 : index
    %c0_39 = arith.constant 0 : index
    %105 = vector.load %arg7[%c0_38, %c0_39] : memref<1x32xf32, #tpu.memory_space<vmem>>, vector<1x32xf32>
    %c0_40 = arith.constant 0 : index
    %c0_41 = arith.constant 0 : index
    %106 = vector.load %arg8[%c0_40, %c0_41] : memref<1x32xf32, #tpu.memory_space<vmem>>, vector<1x32xf32>
    %107 = arith.addf %1, %104 : vector<8x32xf32>
    %cst_42 = arith.constant dense<0.000000e+00> : vector<8xf32>
    %108 = vector.multi_reduction <add>, %107, %cst_42 [1] : vector<8x32xf32> to vector<8xf32>
    %109 = vector.shape_cast %108 : vector<8xf32> to vector<8x1xf32>
    %cst_43 = arith.constant 3.200000e+01 : f32
    %110 = vector.broadcast %cst_43 : f32 to vector<8x1xf32>
    %111 = arith.divf %109, %110 : vector<8x1xf32>
    %112 = vector.broadcast %111 : vector<8x1xf32> to vector<8x32xf32>
    %113 = arith.subf %107, %112 : vector<8x32xf32>
    %114 = arith.mulf %113, %113 : vector<8x32xf32>
    %cst_44 = arith.constant dense<0.000000e+00> : vector<8xf32>
    %115 = vector.multi_reduction <add>, %114, %cst_44 [1] : vector<8x32xf32> to vector<8xf32>
    %116 = vector.shape_cast %115 : vector<8xf32> to vector<8x1xf32>
    %cst_45 = arith.constant 3.200000e+01 : f32
    %117 = vector.broadcast %cst_45 : f32 to vector<8x1xf32>
    %118 = arith.divf %116, %117 : vector<8x1xf32>
    %119 = vector.broadcast %111 : vector<8x1xf32> to vector<8x32xf32>
    %120 = arith.subf %107, %119 : vector<8x32xf32>
    %cst_46 = arith.constant 9.99999974E-6 : f32
    %121 = vector.broadcast %cst_46 : f32 to vector<8x1xf32>
    %122 = arith.addf %118, %121 : vector<8x1xf32>
    %123 = math.rsqrt %122 : vector<8x1xf32>
    %124 = vector.broadcast %123 : vector<8x1xf32> to vector<8x32xf32>
    %125 = arith.mulf %120, %124 : vector<8x32xf32>
    %126 = vector.broadcast %105 : vector<1x32xf32> to vector<8x32xf32>
    %127 = arith.mulf %125, %126 : vector<8x32xf32>
    %128 = vector.broadcast %106 : vector<1x32xf32> to vector<8x32xf32>
    %129 = arith.addf %127, %128 : vector<8x32xf32>
    %130 = arith.truncf %129 : vector<8x32xf32> to vector<8x32xbf16>
    %c0_47 = arith.constant 0 : index
    %c0_48 = arith.constant 0 : index
    %131 = vector.load %arg9[%c0_47, %c0_48] : memref<32x64xbf16, #tpu.memory_space<vmem>>, vector<32x64xbf16>
    %cst_49 = arith.constant dense<0.000000e+00> : vector<8x64xf32>
    %132 = tpu.matmul %130, %131, %cst_49 {dimension_numbers = #tpu.dot_dimension_numbers<[1], [0], [0], [1], [0, 0, 1, 1], [], []>} : vector<8x32xbf16>, vector<32x64xbf16>, vector<8x64xf32> -> vector<8x64xf32>
    %c0_50 = arith.constant 0 : index
    %c0_51 = arith.constant 0 : index
    %133 = vector.load %arg10[%c0_50, %c0_51] : memref<1x64xf32, #tpu.memory_space<vmem>>, vector<1x64xf32>
    %134 = vector.broadcast %133 : vector<1x64xf32> to vector<8x64xf32>
    %135 = arith.addf %132, %134 : vector<8x64xf32>
    %cst_52 = arith.constant 0.000000e+00 : f32
    %136 = vector.broadcast %cst_52 : f32 to vector<8x64xf32>
    %137 = arith.maximumf %135, %136 : vector<8x64xf32>
    %138 = arith.truncf %137 : vector<8x64xf32> to vector<8x64xbf16>
    %c0_53 = arith.constant 0 : index
    %c0_54 = arith.constant 0 : index
    %139 = vector.load %arg11[%c0_53, %c0_54] : memref<64x32xbf16, #tpu.memory_space<vmem>>, vector<64x32xbf16>
    %cst_55 = arith.constant dense<0.000000e+00> : vector<8x32xf32>
    %140 = tpu.matmul %138, %139, %cst_55 {dimension_numbers = #tpu.dot_dimension_numbers<[1], [0], [0], [1], [0, 0, 1, 1], [], []>} : vector<8x64xbf16>, vector<64x32xbf16>, vector<8x32xf32> -> vector<8x32xf32>
    %c0_56 = arith.constant 0 : index
    %c0_57 = arith.constant 0 : index
    %141 = vector.load %arg12[%c0_56, %c0_57] : memref<1x32xf32, #tpu.memory_space<vmem>>, vector<1x32xf32>
    %142 = vector.broadcast %141 : vector<1x32xf32> to vector<8x32xf32>
    %143 = arith.addf %140, %142 : vector<8x32xf32>
    %c0_58 = arith.constant 0 : index
    %c0_59 = arith.constant 0 : index
    %144 = vector.load %arg13[%c0_58, %c0_59] : memref<1x32xf32, #tpu.memory_space<vmem>>, vector<1x32xf32>
    %c0_60 = arith.constant 0 : index
    %c0_61 = arith.constant 0 : index
    %145 = vector.load %arg14[%c0_60, %c0_61] : memref<1x32xf32, #tpu.memory_space<vmem>>, vector<1x32xf32>
    %146 = arith.addf %129, %143 : vector<8x32xf32>
    %cst_62 = arith.constant dense<0.000000e+00> : vector<8xf32>
    %147 = vector.multi_reduction <add>, %146, %cst_62 [1] : vector<8x32xf32> to vector<8xf32>
    %148 = vector.shape_cast %147 : vector<8xf32> to vector<8x1xf32>
    %cst_63 = arith.constant 3.200000e+01 : f32
    %149 = vector.broadcast %cst_63 : f32 to vector<8x1xf32>
    %150 = arith.divf %148, %149 : vector<8x1xf32>
    %151 = vector.broadcast %150 : vector<8x1xf32> to vector<8x32xf32>
    %152 = arith.subf %146, %151 : vector<8x32xf32>
    %153 = arith.mulf %152, %152 : vector<8x32xf32>
    %cst_64 = arith.constant dense<0.000000e+00> : vector<8xf32>
    %154 = vector.multi_reduction <add>, %153, %cst_64 [1] : vector<8x32xf32> to vector<8xf32>
    %155 = vector.shape_cast %154 : vector<8xf32> to vector<8x1xf32>
    %cst_65 = arith.constant 3.200000e+01 : f32
    %156 = vector.broadcast %cst_65 : f32 to vector<8x1xf32>
    %157 = arith.divf %155, %156 : vector<8x1xf32>
    %158 = vector.broadcast %150 : vector<8x1xf32> to vector<8x32xf32>
    %159 = arith.subf %146, %158 : vector<8x32xf32>
    %cst_66 = arith.constant 9.99999974E-6 : f32
    %160 = vector.broadcast %cst_66 : f32 to vector<8x1xf32>
    %161 = arith.addf %157, %160 : vector<8x1xf32>
    %162 = math.rsqrt %161 : vector<8x1xf32>
    %163 = vector.broadcast %162 : vector<8x1xf32> to vector<8x32xf32>
    %164 = arith.mulf %159, %163 : vector<8x32xf32>
    %165 = vector.broadcast %144 : vector<1x32xf32> to vector<8x32xf32>
    %166 = arith.mulf %164, %165 : vector<8x32xf32>
    %167 = vector.broadcast %145 : vector<1x32xf32> to vector<8x32xf32>
    %168 = arith.addf %166, %167 : vector<8x32xf32>
    %c0_67 = arith.constant 0 : index
    %c0_68 = arith.constant 0 : index
    %c0_69 = arith.constant 0 : index
    %169 = vector.load %arg15[%c0_67, %c0_68, %c0_69] : memref<1x8x32xf32, #tpu.memory_space<vmem>>, vector<1x8x32xf32>
    %170 = vector.shape_cast %169 : vector<1x8x32xf32> to vector<8x32xf32>
    %171 = vector.shape_cast %168 : vector<8x32xf32> to vector<1x8x32xf32>
    tpu.vector_store %arg15[%c0_67, %c0_68, %c0_69], %171 {strides = array<i32>} : memref<1x8x32xf32, #tpu.memory_space<vmem>>, vector<1x8x32xf32>,
    return
  }
  func.func @transform_0(%arg0: i32) -> (i32, i32, i32) {
    %c0_i32 = arith.constant 0 : i32
    %c0_i32_0 = arith.constant 0 : i32
    %c0_i32_1 = arith.constant 0 : i32
    return %arg0, %c0_i32, %c0_i32_0 : i32, i32, i32
  }
  func.func @transform_1(%arg0: i32) -> (i32, i32, i32) {
    %c0_i32 = arith.constant 0 : i32
    %c0_i32_0 = arith.constant 0 : i32
    %c0_i32_1 = arith.constant 0 : i32
    return %arg0, %c0_i32, %c0_i32_0 : i32, i32, i32
  }
  func.func @transform_2(%arg0: i32) -> (i32, i32) {
    %c0_i32 = arith.constant 0 : i32
    %c0_i32_0 = arith.constant 0 : i32
    %c0_i32_1 = arith.constant 0 : i32
    return %c0_i32, %c0_i32_0 : i32, i32
  }
  func.func @transform_3(%arg0: i32) -> (i32, i32) {
    %c0_i32 = arith.constant 0 : i32
    %c0_i32_0 = arith.constant 0 : i32
    %c0_i32_1 = arith.constant 0 : i32
    return %c0_i32, %c0_i32_0 : i32, i32
  }
  func.func @transform_4(%arg0: i32) -> (i32, i32) {
    %c0_i32 = arith.constant 0 : i32
    %c0_i32_0 = arith.constant 0 : i32
    %c0_i32_1 = arith.constant 0 : i32
    return %c0_i32, %c0_i32_0 : i32, i32
  }
  func.func @transform_5(%arg0: i32) -> (i32, i32) {
    %c0_i32 = arith.constant 0 : i32
    %c0_i32_0 = arith.constant 0 : i32
    %c0_i32_1 = arith.constant 0 : i32
    return %c0_i32, %c0_i32_0 : i32, i32
  }
  func.func @transform_6(%arg0: i32) -> (i32, i32) {
    %c0_i32 = arith.constant 0 : i32
    %c0_i32_0 = arith.constant 0 : i32
    %c0_i32_1 = arith.constant 0 : i32
    return %c0_i32, %c0_i32_0 : i32, i32
  }
  func.func @transform_7(%arg0: i32) -> (i32, i32) {
    %c0_i32 = arith.constant 0 : i32
    %c0_i32_0 = arith.constant 0 : i32
    %c0_i32_1 = arith.constant 0 : i32
    return %c0_i32, %c0_i32_0 : i32, i32
  }
  func.func @transform_8(%arg0: i32) -> (i32, i32) {
    %c0_i32 = arith.constant 0 : i32
    %c0_i32_0 = arith.constant 0 : i32
    %c0_i32_1 = arith.constant 0 : i32
    return %c0_i32, %c0_i32_0 : i32, i32
  }
  func.func @transform_9(%arg0: i32) -> (i32, i32) {
    %c0_i32 = arith.constant 0 : i32
    %c0_i32_0 = arith.constant 0 : i32
    %c0_i32_1 = arith.constant 0 : i32
    return %c0_i32, %c0_i32_0 : i32, i32
  }
  func.func @transform_10(%arg0: i32) -> (i32, i32) {
    %c0_i32 = arith.constant 0 : i32
    %c0_i32_0 = arith.constant 0 : i32
    %c0_i32_1 = arith.constant 0 : i32
    return %c0_i32, %c0_i32_0 : i32, i32
  }
  func.func @transform_11(%arg0: i32) -> (i32, i32) {
    %c0_i32 = arith.constant 0 : i32
    %c0_i32_0 = arith.constant 0 : i32
    %c0_i32_1 = arith.constant 0 : i32
    return %c0_i32, %c0_i32_0 : i32, i32
  }
  func.func @transform_12(%arg0: i32) -> (i32, i32) {
    %c0_i32 = arith.constant 0 : i32
    %c0_i32_0 = arith.constant 0 : i32
    %c0_i32_1 = arith.constant 0 : i32
    return %c0_i32, %c0_i32_0 : i32, i32
  }
  func.func @transform_13(%arg0: i32) -> (i32, i32) {
    %c0_i32 = arith.constant 0 : i32
    %c0_i32_0 = arith.constant 0 : i32
    %c0_i32_1 = arith.constant 0 : i32
    return %c0_i32, %c0_i32_0 : i32, i32
  }
  func.func @transform_14(%arg0: i32) -> (i32, i32, i32) {
    %c0_i32 = arith.constant 0 : i32
    %c0_i32_0 = arith.constant 0 : i32
    %c0_i32_1 = arith.constant 0 : i32
    return %arg0, %c0_i32, %c0_i32_0 : i32, i32, i32
  }
}

module attributes {stable_mosaic.version = 11 : i64} {
  func.func @_linear_kernel(%arg0: i32, %arg1: memref<16x32xf32, #tpu.memory_space<vmem>>, %arg2: memref<32x22xbf16, #tpu.memory_space<vmem>>, %arg3: memref<1x22xf32, #tpu.memory_space<vmem>>, %arg4: memref<16x22xf32, #tpu.memory_space<vmem>>) attributes {dimension_semantics = [#tpu.dimension_semantics<arbitrary>], iteration_bounds = array<i64: 1>, scalar_prefetch = 0 : i64, scratch_operands = 0 : i64, tpu.core_type = #tpu.core_type<tc>, window_params = [{pipeline_mode = #tpu.pipeline_mode<synchronous>, transform_indices = @transform_0, window_bounds = array<i64: 16, 32>}, {pipeline_mode = #tpu.pipeline_mode<synchronous>, transform_indices = @transform_1, window_bounds = array<i64: 32, 22>}, {pipeline_mode = #tpu.pipeline_mode<synchronous>, transform_indices = @transform_2, window_bounds = array<i64: 1, 22>}, {pipeline_mode = #tpu.pipeline_mode<synchronous>, transform_indices = @transform_3, window_bounds = array<i64: 16, 22>}]} {
    %c0 = arith.constant 0 : index
    %c0_0 = arith.constant 0 : index
    %0 = vector.load %arg1[%c0, %c0_0] : memref<16x32xf32, #tpu.memory_space<vmem>>, vector<16x32xf32>
    %1 = arith.truncf %0 : vector<16x32xf32> to vector<16x32xbf16>
    %c0_1 = arith.constant 0 : index
    %c0_2 = arith.constant 0 : index
    %2 = vector.load %arg2[%c0_1, %c0_2] : memref<32x22xbf16, #tpu.memory_space<vmem>>, vector<32x22xbf16>
    %cst = arith.constant dense<0.000000e+00> : vector<16x22xf32>
    %3 = tpu.matmul %1, %2, %cst {dimension_numbers = #tpu.dot_dimension_numbers<[1], [0], [0], [1], [0, 0, 1, 1], [], []>} : vector<16x32xbf16>, vector<32x22xbf16>, vector<16x22xf32> -> vector<16x22xf32>
    %c0_3 = arith.constant 0 : index
    %c0_4 = arith.constant 0 : index
    %4 = vector.load %arg3[%c0_3, %c0_4] : memref<1x22xf32, #tpu.memory_space<vmem>>, vector<1x22xf32>
    %5 = vector.broadcast %4 : vector<1x22xf32> to vector<16x22xf32>
    %6 = arith.addf %3, %5 : vector<16x22xf32>
    %c0_5 = arith.constant 0 : index
    %c0_6 = arith.constant 0 : index
    %7 = vector.load %arg4[%c0_5, %c0_6] : memref<16x22xf32, #tpu.memory_space<vmem>>, vector<16x22xf32>
    tpu.vector_store %arg4[%c0_5, %c0_6], %6 {strides = array<i32>} : memref<16x22xf32, #tpu.memory_space<vmem>>, vector<16x22xf32>,
    return
  }
  func.func @transform_0(%arg0: i32) -> (i32, i32) {
    %c0_i32 = arith.constant 0 : i32
    %c0_i32_0 = arith.constant 0 : i32
    %c0_i32_1 = arith.constant 0 : i32
    return %c0_i32, %c0_i32_0 : i32, i32
  }
  func.func @transform_1(%arg0: i32) -> (i32, i32) {
    %c0_i32 = arith.constant 0 : i32
    %c0_i32_0 = arith.constant 0 : i32
    %c0_i32_1 = arith.constant 0 : i32
    return %c0_i32, %c0_i32_0 : i32, i32
  }
  func.func @transform_2(%arg0: i32) -> (i32, i32) {
    %c0_i32 = arith.constant 0 : i32
    %c0_i32_0 = arith.constant 0 : i32
    %c0_i32_1 = arith.constant 0 : i32
    return %c0_i32, %c0_i32_0 : i32, i32
  }
  func.func @transform_3(%arg0: i32) -> (i32, i32) {
    %c0_i32 = arith.constant 0 : i32
    %c0_i32_0 = arith.constant 0 : i32
    %c0_i32_1 = arith.constant 0 : i32
    return %c0_i32, %c0_i32_0 : i32, i32
  }
}

module attributes {stable_mosaic.version = 11 : i64} {
  func.func @_decoder_layer_kernel(%arg0: i32, %arg1: memref<1x8x32xf32, #tpu.memory_space<vmem>>, %arg2: memref<1x8x32xf32, #tpu.memory_space<vmem>>, %arg3: memref<1x8x8xi8, #tpu.memory_space<vmem>>, %arg4: memref<1x8x8xi8, #tpu.memory_space<vmem>>, %arg5: memref<32x96xbf16, #tpu.memory_space<vmem>>, %arg6: memref<1x96xf32, #tpu.memory_space<vmem>>, %arg7: memref<32x32xbf16, #tpu.memory_space<vmem>>, %arg8: memref<1x32xf32, #tpu.memory_space<vmem>>, %arg9: memref<1x32xf32, #tpu.memory_space<vmem>>, %arg10: memref<1x32xf32, #tpu.memory_space<vmem>>, %arg11: memref<32x96xbf16, #tpu.memory_space<vmem>>, %arg12: memref<1x96xf32, #tpu.memory_space<vmem>>, %arg13: memref<32x32xbf16, #tpu.memory_space<vmem>>, %arg14: memref<1x32xf32, #tpu.memory_space<vmem>>, %arg15: memref<1x32xf32, #tpu.memory_space<vmem>>, %arg16: memref<1x32xf32, #tpu.memory_space<vmem>>, %arg17: memref<32x64xbf16, #tpu.memory_space<vmem>>, %arg18: memref<1x64xf32, #tpu.memory_space<vmem>>, %arg19: memref<64x32xbf16, #tpu.memory_space<vmem>>, %arg20: memref<1x32xf32, #tpu.memory_space<vmem>>, %arg21: memref<1x32xf32, #tpu.memory_space<vmem>>, %arg22: memref<1x32xf32, #tpu.memory_space<vmem>>, %arg23: memref<1x8x32xf32, #tpu.memory_space<vmem>>) attributes {dimension_semantics = [#tpu.dimension_semantics<parallel>], iteration_bounds = array<i64: 2>, scalar_prefetch = 0 : i64, scratch_operands = 0 : i64, tpu.core_type = #tpu.core_type<tc>, window_params = [{transform_indices = @transform_0, window_bounds = array<i64: 1, 8, 32>}, {transform_indices = @transform_1, window_bounds = array<i64: 1, 8, 32>}, {transform_indices = @transform_2, window_bounds = array<i64: 1, 8, 8>}, {transform_indices = @transform_3, window_bounds = array<i64: 1, 8, 8>}, {pipeline_mode = #tpu.pipeline_mode<synchronous>, transform_indices = @transform_4, window_bounds = array<i64: 32, 96>}, {pipeline_mode = #tpu.pipeline_mode<synchronous>, transform_indices = @transform_5, window_bounds = array<i64: 1, 96>}, {pipeline_mode = #tpu.pipeline_mode<synchronous>, transform_indices = @transform_6, window_bounds = array<i64: 32, 32>}, {pipeline_mode = #tpu.pipeline_mode<synchronous>, transform_indices = @transform_7, window_bounds = array<i64: 1, 32>}, {pipeline_mode = #tpu.pipeline_mode<synchronous>, transform_indices = @transform_8, window_bounds = array<i64: 1, 32>}, {pipeline_mode = #tpu.pipeline_mode<synchronous>, transform_indices = @transform_9, window_bounds = array<i64: 1, 32>}, {pipeline_mode = #tpu.pipeline_mode<synchronous>, transform_indices = @transform_10, window_bounds = array<i64: 32, 96>}, {pipeline_mode = #tpu.pipeline_mode<synchronous>, transform_indices = @transform_11, window_bounds = array<i64: 1, 96>}, {pipeline_mode = #tpu.pipeline_mode<synchronous>, transform_indices = @transform_12, window_bounds = array<i64: 32, 32>}, {pipeline_mode = #tpu.pipeline_mode<synchronous>, transform_indices = @transform_13, window_bounds = array<i64: 1, 32>}, {pipeline_mode = #tpu.pipeline_mode<synchronous>, transform_indices = @transform_14, window_bounds = array<i64: 1, 32>}, {pipeline_mode = #tpu.pipeline_mode<synchronous>, transform_indices = @transform_15, window_bounds = array<i64: 1, 32>}, {pipeline_mode = #tpu.pipeline_mode<synchronous>, transform_indices = @transform_16, window_bounds = array<i64: 32, 64>}, {pipeline_mode = #tpu.pipeline_mode<synchronous>, transform_indices = @transform_17, window_bounds = array<i64: 1, 64>}, {pipeline_mode = #tpu.pipeline_mode<synchronous>, transform_indices = @transform_18, window_bounds = array<i64: 64, 32>}, {pipeline_mode = #tpu.pipeline_mode<synchronous>, transform_indices = @transform_19, window_bounds = array<i64: 1, 32>}, {pipeline_mode = #tpu.pipeline_mode<synchronous>, transform_indices = @transform_20, window_bounds = array<i64: 1, 32>}, {pipeline_mode = #tpu.pipeline_mode<synchronous>, transform_indices = @transform_21, window_bounds = array<i64: 1, 32>}, {transform_indices = @transform_22, window_bounds = array<i64: 1, 8, 32>}]} {
    %c0 = arith.constant 0 : index
    %c0_0 = arith.constant 0 : index
    %c0_1 = arith.constant 0 : index
    %0 = vector.load %arg1[%c0, %c0_0, %c0_1] : memref<1x8x32xf32, #tpu.memory_space<vmem>>, vector<1x8x32xf32>
    %1 = vector.shape_cast %0 : vector<1x8x32xf32> to vector<8x32xf32>
    %c0_2 = arith.constant 0 : index
    %c0_3 = arith.constant 0 : index
    %c0_4 = arith.constant 0 : index
    %2 = vector.load %arg2[%c0_2, %c0_3, %c0_4] : memref<1x8x32xf32, #tpu.memory_space<vmem>>, vector<1x8x32xf32>
    %3 = vector.shape_cast %2 : vector<1x8x32xf32> to vector<8x32xf32>
    %4 = arith.truncf %1 : vector<8x32xf32> to vector<8x32xbf16>
    %c0_5 = arith.constant 0 : index
    %c0_6 = arith.constant 0 : index
    %5 = vector.load %arg5[%c0_5, %c0_6] : memref<32x96xbf16, #tpu.memory_space<vmem>>, vector<32x96xbf16>
    %cst = arith.constant dense<0.000000e+00> : vector<8x96xf32>
    %6 = tpu.matmul %4, %5, %cst {dimension_numbers = #tpu.dot_dimension_numbers<[1], [0], [0], [1], [0, 0, 1, 1], [], []>} : vector<8x32xbf16>, vector<32x96xbf16>, vector<8x96xf32> -> vector<8x96xf32>
    %c0_7 = arith.constant 0 : index
    %c0_8 = arith.constant 0 : index
    %7 = vector.load %arg6[%c0_7, %c0_8] : memref<1x96xf32, #tpu.memory_space<vmem>>, vector<1x96xf32>
    %8 = vector.broadcast %7 : vector<1x96xf32> to vector<8x96xf32>
    %9 = arith.addf %6, %8 : vector<8x96xf32>
    %10 = vector.extract_strided_slice %9 {offsets = [0, 0], sizes = [8, 32], strides = [1, 1]} : vector<8x96xf32> to vector<8x32xf32>
    %11 = vector.extract_strided_slice %9 {offsets = [0, 32], sizes = [8, 32], strides = [1, 1]} : vector<8x96xf32> to vector<8x32xf32>
    %12 = vector.extract_strided_slice %9 {offsets = [0, 64], sizes = [8, 32], strides = [1, 1]} : vector<8x96xf32> to vector<8x32xf32>
    %c0_9 = arith.constant 0 : index
    %c0_10 = arith.constant 0 : index
    %c0_11 = arith.constant 0 : index
    %13 = vector.load %arg3[%c0_9, %c0_10, %c0_11] : memref<1x8x8xi8, #tpu.memory_space<vmem>>, vector<1x8x8xi8>
    %14 = vector.shape_cast %13 : vector<1x8x8xi8> to vector<8x8xi8>
    %15 = arith.truncf %10 : vector<8x32xf32> to vector<8x32xbf16>
    %16 = arith.truncf %11 : vector<8x32xf32> to vector<8x32xbf16>
    %17 = arith.truncf %12 : vector<8x32xf32> to vector<8x32xbf16>
    %c0_i8 = arith.constant 0 : i8
    %18 = vector.broadcast %c0_i8 : i8 to vector<8x8xi8>
    %19 = arith.cmpi ne, %14, %18 : vector<8x8xi8>
    %20 = vector.extract_strided_slice %15 {offsets = [0, 0], sizes = [8, 8], strides = [1, 1]} : vector<8x32xbf16> to vector<8x8xbf16>
    %21 = vector.extract_strided_slice %16 {offsets = [0, 0], sizes = [8, 8], strides = [1, 1]} : vector<8x32xbf16> to vector<8x8xbf16>
    %cst_12 = arith.constant dense<0.000000e+00> : vector<8x8xf32>
    %22 = tpu.matmul %20, %21, %cst_12 {dimension_numbers = #tpu.dot_dimension_numbers<[1], [1], [0], [0], [0, 0, 1, 0], [], []>} : vector<8x8xbf16>, vector<8x8xbf16>, vector<8x8xf32> -> vector<8x8xf32>
    %cst_13 = arith.constant 0.353553385 : f32
    %23 = vector.broadcast %cst_13 : f32 to vector<8x8xf32>
    %24 = arith.mulf %22, %23 : vector<8x8xf32>
    %cst_14 = arith.constant -1.000000e+10 : f32
    %25 = vector.broadcast %cst_14 : f32 to vector<8x8xf32>
    %26 = arith.select %19, %24, %25 : vector<8x8xi1>, vector<8x8xf32>
    %cst_15 = arith.constant dense<0xFF800000> : vector<8xf32>
    %27 = vector.multi_reduction <maximumf>, %26, %cst_15 [1] : vector<8x8xf32> to vector<8xf32>
    %28 = vector.shape_cast %27 : vector<8xf32> to vector<8x1xf32>
    %29 = vector.broadcast %28 : vector<8x1xf32> to vector<8x8xf32>
    %30 = arith.subf %26, %29 : vector<8x8xf32>
    %31 = math.exp %30 : vector<8x8xf32>
    %cst_16 = arith.constant dense<0.000000e+00> : vector<8xf32>
    %32 = vector.multi_reduction <add>, %31, %cst_16 [1] : vector<8x8xf32> to vector<8xf32>
    %33 = vector.shape_cast %32 : vector<8xf32> to vector<8x1xf32>
    %34 = tpu.reciprocal %33 {approx = true} : vector<8x1xf32> -> vector<8x1xf32>
    %35 = vector.broadcast %34 : vector<8x1xf32> to vector<8x8xf32>
    %36 = arith.mulf %31, %35 : vector<8x8xf32>
    %37 = arith.truncf %36 : vector<8x8xf32> to vector<8x8xbf16>
    %38 = vector.extract_strided_slice %17 {offsets = [0, 0], sizes = [8, 8], strides = [1, 1]} : vector<8x32xbf16> to vector<8x8xbf16>
    %cst_17 = arith.constant dense<0.000000e+00> : vector<8x8xf32>
    %39 = tpu.matmul %37, %38, %cst_17 {dimension_numbers = #tpu.dot_dimension_numbers<[1], [0], [0], [1], [0, 0, 1, 1], [], []>} : vector<8x8xbf16>, vector<8x8xbf16>, vector<8x8xf32> -> vector<8x8xf32>
    %40 = vector.extract_strided_slice %15 {offsets = [0, 8], sizes = [8, 8], strides = [1, 1]} : vector<8x32xbf16> to vector<8x8xbf16>
    %41 = vector.extract_strided_slice %16 {offsets = [0, 8], sizes = [8, 8], strides = [1, 1]} : vector<8x32xbf16> to vector<8x8xbf16>
    %cst_18 = arith.constant dense<0.000000e+00> : vector<8x8xf32>
    %42 = tpu.matmul %40, %41, %cst_18 {dimension_numbers = #tpu.dot_dimension_numbers<[1], [1], [0], [0], [0, 0, 1, 0], [], []>} : vector<8x8xbf16>, vector<8x8xbf16>, vector<8x8xf32> -> vector<8x8xf32>
    %cst_19 = arith.constant 0.353553385 : f32
    %43 = vector.broadcast %cst_19 : f32 to vector<8x8xf32>
    %44 = arith.mulf %42, %43 : vector<8x8xf32>
    %cst_20 = arith.constant -1.000000e+10 : f32
    %45 = vector.broadcast %cst_20 : f32 to vector<8x8xf32>
    %46 = arith.select %19, %44, %45 : vector<8x8xi1>, vector<8x8xf32>
    %cst_21 = arith.constant dense<0xFF800000> : vector<8xf32>
    %47 = vector.multi_reduction <maximumf>, %46, %cst_21 [1] : vector<8x8xf32> to vector<8xf32>
    %48 = vector.shape_cast %47 : vector<8xf32> to vector<8x1xf32>
    %49 = vector.broadcast %48 : vector<8x1xf32> to vector<8x8xf32>
    %50 = arith.subf %46, %49 : vector<8x8xf32>
    %51 = math.exp %50 : vector<8x8xf32>
    %cst_22 = arith.constant dense<0.000000e+00> : vector<8xf32>
    %52 = vector.multi_reduction <add>, %51, %cst_22 [1] : vector<8x8xf32> to vector<8xf32>
    %53 = vector.shape_cast %52 : vector<8xf32> to vector<8x1xf32>
    %54 = tpu.reciprocal %53 {approx = true} : vector<8x1xf32> -> vector<8x1xf32>
    %55 = vector.broadcast %54 : vector<8x1xf32> to vector<8x8xf32>
    %56 = arith.mulf %51, %55 : vector<8x8xf32>
    %57 = arith.truncf %56 : vector<8x8xf32> to vector<8x8xbf16>
    %58 = vector.extract_strided_slice %17 {offsets = [0, 8], sizes = [8, 8], strides = [1, 1]} : vector<8x32xbf16> to vector<8x8xbf16>
    %cst_23 = arith.constant dense<0.000000e+00> : vector<8x8xf32>
    %59 = tpu.matmul %57, %58, %cst_23 {dimension_numbers = #tpu.dot_dimension_numbers<[1], [0], [0], [1], [0, 0, 1, 1], [], []>} : vector<8x8xbf16>, vector<8x8xbf16>, vector<8x8xf32> -> vector<8x8xf32>
    %60 = vector.extract_strided_slice %15 {offsets = [0, 16], sizes = [8, 8], strides = [1, 1]} : vector<8x32xbf16> to vector<8x8xbf16>
    %61 = vector.extract_strided_slice %16 {offsets = [0, 16], sizes = [8, 8], strides = [1, 1]} : vector<8x32xbf16> to vector<8x8xbf16>
    %cst_24 = arith.constant dense<0.000000e+00> : vector<8x8xf32>
    %62 = tpu.matmul %60, %61, %cst_24 {dimension_numbers = #tpu.dot_dimension_numbers<[1], [1], [0], [0], [0, 0, 1, 0], [], []>} : vector<8x8xbf16>, vector<8x8xbf16>, vector<8x8xf32> -> vector<8x8xf32>
    %cst_25 = arith.constant 0.353553385 : f32
    %63 = vector.broadcast %cst_25 : f32 to vector<8x8xf32>
    %64 = arith.mulf %62, %63 : vector<8x8xf32>
    %cst_26 = arith.constant -1.000000e+10 : f32
    %65 = vector.broadcast %cst_26 : f32 to vector<8x8xf32>
    %66 = arith.select %19, %64, %65 : vector<8x8xi1>, vector<8x8xf32>
    %cst_27 = arith.constant dense<0xFF800000> : vector<8xf32>
    %67 = vector.multi_reduction <maximumf>, %66, %cst_27 [1] : vector<8x8xf32> to vector<8xf32>
    %68 = vector.shape_cast %67 : vector<8xf32> to vector<8x1xf32>
    %69 = vector.broadcast %68 : vector<8x1xf32> to vector<8x8xf32>
    %70 = arith.subf %66, %69 : vector<8x8xf32>
    %71 = math.exp %70 : vector<8x8xf32>
    %cst_28 = arith.constant dense<0.000000e+00> : vector<8xf32>
    %72 = vector.multi_reduction <add>, %71, %cst_28 [1] : vector<8x8xf32> to vector<8xf32>
    %73 = vector.shape_cast %72 : vector<8xf32> to vector<8x1xf32>
    %74 = tpu.reciprocal %73 {approx = true} : vector<8x1xf32> -> vector<8x1xf32>
    %75 = vector.broadcast %74 : vector<8x1xf32> to vector<8x8xf32>
    %76 = arith.mulf %71, %75 : vector<8x8xf32>
    %77 = arith.truncf %76 : vector<8x8xf32> to vector<8x8xbf16>
    %78 = vector.extract_strided_slice %17 {offsets = [0, 16], sizes = [8, 8], strides = [1, 1]} : vector<8x32xbf16> to vector<8x8xbf16>
    %cst_29 = arith.constant dense<0.000000e+00> : vector<8x8xf32>
    %79 = tpu.matmul %77, %78, %cst_29 {dimension_numbers = #tpu.dot_dimension_numbers<[1], [0], [0], [1], [0, 0, 1, 1], [], []>} : vector<8x8xbf16>, vector<8x8xbf16>, vector<8x8xf32> -> vector<8x8xf32>
    %80 = vector.extract_strided_slice %15 {offsets = [0, 24], sizes = [8, 8], strides = [1, 1]} : vector<8x32xbf16> to vector<8x8xbf16>
    %81 = vector.extract_strided_slice %16 {offsets = [0, 24], sizes = [8, 8], strides = [1, 1]} : vector<8x32xbf16> to vector<8x8xbf16>
    %cst_30 = arith.constant dense<0.000000e+00> : vector<8x8xf32>
    %82 = tpu.matmul %80, %81, %cst_30 {dimension_numbers = #tpu.dot_dimension_numbers<[1], [1], [0], [0], [0, 0, 1, 0], [], []>} : vector<8x8xbf16>, vector<8x8xbf16>, vector<8x8xf32> -> vector<8x8xf32>
    %cst_31 = arith.constant 0.353553385 : f32
    %83 = vector.broadcast %cst_31 : f32 to vector<8x8xf32>
    %84 = arith.mulf %82, %83 : vector<8x8xf32>
    %cst_32 = arith.constant -1.000000e+10 : f32
    %85 = vector.broadcast %cst_32 : f32 to vector<8x8xf32>
    %86 = arith.select %19, %84, %85 : vector<8x8xi1>, vector<8x8xf32>
    %cst_33 = arith.constant dense<0xFF800000> : vector<8xf32>
    %87 = vector.multi_reduction <maximumf>, %86, %cst_33 [1] : vector<8x8xf32> to vector<8xf32>
    %88 = vector.shape_cast %87 : vector<8xf32> to vector<8x1xf32>
    %89 = vector.broadcast %88 : vector<8x1xf32> to vector<8x8xf32>
    %90 = arith.subf %86, %89 : vector<8x8xf32>
    %91 = math.exp %90 : vector<8x8xf32>
    %cst_34 = arith.constant dense<0.000000e+00> : vector<8xf32>
    %92 = vector.multi_reduction <add>, %91, %cst_34 [1] : vector<8x8xf32> to vector<8xf32>
    %93 = vector.shape_cast %92 : vector<8xf32> to vector<8x1xf32>
    %94 = tpu.reciprocal %93 {approx = true} : vector<8x1xf32> -> vector<8x1xf32>
    %95 = vector.broadcast %94 : vector<8x1xf32> to vector<8x8xf32>
    %96 = arith.mulf %91, %95 : vector<8x8xf32>
    %97 = arith.truncf %96 : vector<8x8xf32> to vector<8x8xbf16>
    %98 = vector.extract_strided_slice %17 {offsets = [0, 24], sizes = [8, 8], strides = [1, 1]} : vector<8x32xbf16> to vector<8x8xbf16>
    %cst_35 = arith.constant dense<0.000000e+00> : vector<8x8xf32>
    %99 = tpu.matmul %97, %98, %cst_35 {dimension_numbers = #tpu.dot_dimension_numbers<[1], [0], [0], [1], [0, 0, 1, 1], [], []>} : vector<8x8xbf16>, vector<8x8xbf16>, vector<8x8xf32> -> vector<8x8xf32>
    %100 = tpu.concatenate %39, %59, %79, %99 in 1 : vector<8x8xf32>, vector<8x8xf32>, vector<8x8xf32>, vector<8x8xf32> -> vector<8x32xf32>
    %101 = arith.truncf %100 : vector<8x32xf32> to vector<8x32xbf16>
    %c0_36 = arith.constant 0 : index
    %c0_37 = arith.constant 0 : index
    %102 = vector.load %arg7[%c0_36, %c0_37] : memref<32x32xbf16, #tpu.memory_space<vmem>>, vector<32x32xbf16>
    %cst_38 = arith.constant dense<0.000000e+00> : vector<8x32xf32>
    %103 = tpu.matmul %101, %102, %cst_38 {dimension_numbers = #tpu.dot_dimension_numbers<[1], [0], [0], [1], [0, 0, 1, 1], [], []>} : vector<8x32xbf16>, vector<32x32xbf16>, vector<8x32xf32> -> vector<8x32xf32>
    %c0_39 = arith.constant 0 : index
    %c0_40 = arith.constant 0 : index
    %104 = vector.load %arg8[%c0_39, %c0_40] : memref<1x32xf32, #tpu.memory_space<vmem>>, vector<1x32xf32>
    %105 = vector.broadcast %104 : vector<1x32xf32> to vector<8x32xf32>
    %106 = arith.addf %103, %105 : vector<8x32xf32>
    %c0_41 = arith.constant 0 : index
    %c0_42 = arith.constant 0 : index
    %107 = vector.load %arg9[%c0_41, %c0_42] : memref<1x32xf32, #tpu.memory_space<vmem>>, vector<1x32xf32>
    %c0_43 = arith.constant 0 : index
    %c0_44 = arith.constant 0 : index
    %108 = vector.load %arg10[%c0_43, %c0_44] : memref<1x32xf32, #tpu.memory_space<vmem>>, vector<1x32xf32>
    %109 = arith.addf %1, %106 : vector<8x32xf32>
    %cst_45 = arith.constant dense<0.000000e+00> : vector<8xf32>
    %110 = vector.multi_reduction <add>, %109, %cst_45 [1] : vector<8x32xf32> to vector<8xf32>
    %111 = vector.shape_cast %110 : vector<8xf32> to vector<8x1xf32>
    %cst_46 = arith.constant 3.200000e+01 : f32
    %112 = vector.broadcast %cst_46 : f32 to vector<8x1xf32>
    %113 = arith.divf %111, %112 : vector<8x1xf32>
    %114 = vector.broadcast %113 : vector<8x1xf32> to vector<8x32xf32>
    %115 = arith.subf %109, %114 : vector<8x32xf32>
    %116 = arith.mulf %115, %115 : vector<8x32xf32>
    %cst_47 = arith.constant dense<0.000000e+00> : vector<8xf32>
    %117 = vector.multi_reduction <add>, %116, %cst_47 [1] : vector<8x32xf32> to vector<8xf32>
    %118 = vector.shape_cast %117 : vector<8xf32> to vector<8x1xf32>
    %cst_48 = arith.constant 3.200000e+01 : f32
    %119 = vector.broadcast %cst_48 : f32 to vector<8x1xf32>
    %120 = arith.divf %118, %119 : vector<8x1xf32>
    %121 = vector.broadcast %113 : vector<8x1xf32> to vector<8x32xf32>
    %122 = arith.subf %109, %121 : vector<8x32xf32>
    %cst_49 = arith.constant 9.99999974E-6 : f32
    %123 = vector.broadcast %cst_49 : f32 to vector<8x1xf32>
    %124 = arith.addf %120, %123 : vector<8x1xf32>
    %125 = math.rsqrt %124 : vector<8x1xf32>
    %126 = vector.broadcast %125 : vector<8x1xf32> to vector<8x32xf32>
    %127 = arith.mulf %122, %126 : vector<8x32xf32>
    %128 = vector.broadcast %107 : vector<1x32xf32> to vector<8x32xf32>
    %129 = arith.mulf %127, %128 : vector<8x32xf32>
    %130 = vector.broadcast %108 : vector<1x32xf32> to vector<8x32xf32>
    %131 = arith.addf %129, %130 : vector<8x32xf32>
    %132 = arith.truncf %131 : vector<8x32xf32> to vector<8x32xbf16>
    %c0_50 = arith.constant 0 : index
    %c0_51 = arith.constant 0 : index
    %133 = vector.load %arg11[%c0_50, %c0_51] : memref<32x96xbf16, #tpu.memory_space<vmem>>, vector<32x96xbf16>
    %cst_52 = arith.constant dense<0.000000e+00> : vector<8x96xf32>
    %134 = tpu.matmul %132, %133, %cst_52 {dimension_numbers = #tpu.dot_dimension_numbers<[1], [0], [0], [1], [0, 0, 1, 1], [], []>} : vector<8x32xbf16>, vector<32x96xbf16>, vector<8x96xf32> -> vector<8x96xf32>
    %c0_53 = arith.constant 0 : index
    %c0_54 = arith.constant 0 : index
    %135 = vector.load %arg12[%c0_53, %c0_54] : memref<1x96xf32, #tpu.memory_space<vmem>>, vector<1x96xf32>
    %136 = vector.broadcast %135 : vector<1x96xf32> to vector<8x96xf32>
    %137 = arith.addf %134, %136 : vector<8x96xf32>
    %138 = arith.truncf %3 : vector<8x32xf32> to vector<8x32xbf16>
    %c0_55 = arith.constant 0 : index
    %c0_56 = arith.constant 0 : index
    %139 = vector.load %arg11[%c0_55, %c0_56] : memref<32x96xbf16, #tpu.memory_space<vmem>>, vector<32x96xbf16>
    %cst_57 = arith.constant dense<0.000000e+00> : vector<8x96xf32>
    %140 = tpu.matmul %138, %139, %cst_57 {dimension_numbers = #tpu.dot_dimension_numbers<[1], [0], [0], [1], [0, 0, 1, 1], [], []>} : vector<8x32xbf16>, vector<32x96xbf16>, vector<8x96xf32> -> vector<8x96xf32>
    %c0_58 = arith.constant 0 : index
    %c0_59 = arith.constant 0 : index
    %141 = vector.load %arg12[%c0_58, %c0_59] : memref<1x96xf32, #tpu.memory_space<vmem>>, vector<1x96xf32>
    %142 = vector.broadcast %141 : vector<1x96xf32> to vector<8x96xf32>
    %143 = arith.addf %140, %142 : vector<8x96xf32>
    %144 = vector.extract_strided_slice %137 {offsets = [0, 0], sizes = [8, 32], strides = [1, 1]} : vector<8x96xf32> to vector<8x32xf32>
    %145 = vector.extract_strided_slice %143 {offsets = [0, 32], sizes = [8, 32], strides = [1, 1]} : vector<8x96xf32> to vector<8x32xf32>
    %146 = vector.extract_strided_slice %143 {offsets = [0, 64], sizes = [8, 32], strides = [1, 1]} : vector<8x96xf32> to vector<8x32xf32>
    %c0_60 = arith.constant 0 : index
    %c0_61 = arith.constant 0 : index
    %c0_62 = arith.constant 0 : index
    %147 = vector.load %arg4[%c0_60, %c0_61, %c0_62] : memref<1x8x8xi8, #tpu.memory_space<vmem>>, vector<1x8x8xi8>
    %148 = vector.shape_cast %147 : vector<1x8x8xi8> to vector<8x8xi8>
    %149 = arith.truncf %144 : vector<8x32xf32> to vector<8x32xbf16>
    %150 = arith.truncf %145 : vector<8x32xf32> to vector<8x32xbf16>
    %151 = arith.truncf %146 : vector<8x32xf32> to vector<8x32xbf16>
    %c0_i8_63 = arith.constant 0 : i8
    %152 = vector.broadcast %c0_i8_63 : i8 to vector<8x8xi8>
    %153 = arith.cmpi ne, %148, %152 : vector<8x8xi8>
    %154 = vector.extract_strided_slice %149 {offsets = [0, 0], sizes = [8, 8], strides = [1, 1]} : vector<8x32xbf16> to vector<8x8xbf16>
    %155 = vector.extract_strided_slice %150 {offsets = [0, 0], sizes = [8, 8], strides = [1, 1]} : vector<8x32xbf16> to vector<8x8xbf16>
    %cst_64 = arith.constant dense<0.000000e+00> : vector<8x8xf32>
    %156 = tpu.matmul %154, %155, %cst_64 {dimension_numbers = #tpu.dot_dimension_numbers<[1], [1], [0], [0], [0, 0, 1, 0], [], []>} : vector<8x8xbf16>, vector<8x8xbf16>, vector<8x8xf32> -> vector<8x8xf32>
    %cst_65 = arith.constant 0.353553385 : f32
    %157 = vector.broadcast %cst_65 : f32 to vector<8x8xf32>
    %158 = arith.mulf %156, %157 : vector<8x8xf32>
    %cst_66 = arith.constant -1.000000e+10 : f32
    %159 = vector.broadcast %cst_66 : f32 to vector<8x8xf32>
    %160 = arith.select %153, %158, %159 : vector<8x8xi1>, vector<8x8xf32>
    %cst_67 = arith.constant dense<0xFF800000> : vector<8xf32>
    %161 = vector.multi_reduction <maximumf>, %160, %cst_67 [1] : vector<8x8xf32> to vector<8xf32>
    %162 = vector.shape_cast %161 : vector<8xf32> to vector<8x1xf32>
    %163 = vector.broadcast %162 : vector<8x1xf32> to vector<8x8xf32>
    %164 = arith.subf %160, %163 : vector<8x8xf32>
    %165 = math.exp %164 : vector<8x8xf32>
    %cst_68 = arith.constant dense<0.000000e+00> : vector<8xf32>
    %166 = vector.multi_reduction <add>, %165, %cst_68 [1] : vector<8x8xf32> to vector<8xf32>
    %167 = vector.shape_cast %166 : vector<8xf32> to vector<8x1xf32>
    %168 = tpu.reciprocal %167 {approx = true} : vector<8x1xf32> -> vector<8x1xf32>
    %169 = vector.broadcast %168 : vector<8x1xf32> to vector<8x8xf32>
    %170 = arith.mulf %165, %169 : vector<8x8xf32>
    %171 = arith.truncf %170 : vector<8x8xf32> to vector<8x8xbf16>
    %172 = vector.extract_strided_slice %151 {offsets = [0, 0], sizes = [8, 8], strides = [1, 1]} : vector<8x32xbf16> to vector<8x8xbf16>
    %cst_69 = arith.constant dense<0.000000e+00> : vector<8x8xf32>
    %173 = tpu.matmul %171, %172, %cst_69 {dimension_numbers = #tpu.dot_dimension_numbers<[1], [0], [0], [1], [0, 0, 1, 1], [], []>} : vector<8x8xbf16>, vector<8x8xbf16>, vector<8x8xf32> -> vector<8x8xf32>
    %174 = vector.extract_strided_slice %149 {offsets = [0, 8], sizes = [8, 8], strides = [1, 1]} : vector<8x32xbf16> to vector<8x8xbf16>
    %175 = vector.extract_strided_slice %150 {offsets = [0, 8], sizes = [8, 8], strides = [1, 1]} : vector<8x32xbf16> to vector<8x8xbf16>
    %cst_70 = arith.constant dense<0.000000e+00> : vector<8x8xf32>
    %176 = tpu.matmul %174, %175, %cst_70 {dimension_numbers = #tpu.dot_dimension_numbers<[1], [1], [0], [0], [0, 0, 1, 0], [], []>} : vector<8x8xbf16>, vector<8x8xbf16>, vector<8x8xf32> -> vector<8x8xf32>
    %cst_71 = arith.constant 0.353553385 : f32
    %177 = vector.broadcast %cst_71 : f32 to vector<8x8xf32>
    %178 = arith.mulf %176, %177 : vector<8x8xf32>
    %cst_72 = arith.constant -1.000000e+10 : f32
    %179 = vector.broadcast %cst_72 : f32 to vector<8x8xf32>
    %180 = arith.select %153, %178, %179 : vector<8x8xi1>, vector<8x8xf32>
    %cst_73 = arith.constant dense<0xFF800000> : vector<8xf32>
    %181 = vector.multi_reduction <maximumf>, %180, %cst_73 [1] : vector<8x8xf32> to vector<8xf32>
    %182 = vector.shape_cast %181 : vector<8xf32> to vector<8x1xf32>
    %183 = vector.broadcast %182 : vector<8x1xf32> to vector<8x8xf32>
    %184 = arith.subf %180, %183 : vector<8x8xf32>
    %185 = math.exp %184 : vector<8x8xf32>
    %cst_74 = arith.constant dense<0.000000e+00> : vector<8xf32>
    %186 = vector.multi_reduction <add>, %185, %cst_74 [1] : vector<8x8xf32> to vector<8xf32>
    %187 = vector.shape_cast %186 : vector<8xf32> to vector<8x1xf32>
    %188 = tpu.reciprocal %187 {approx = true} : vector<8x1xf32> -> vector<8x1xf32>
    %189 = vector.broadcast %188 : vector<8x1xf32> to vector<8x8xf32>
    %190 = arith.mulf %185, %189 : vector<8x8xf32>
    %191 = arith.truncf %190 : vector<8x8xf32> to vector<8x8xbf16>
    %192 = vector.extract_strided_slice %151 {offsets = [0, 8], sizes = [8, 8], strides = [1, 1]} : vector<8x32xbf16> to vector<8x8xbf16>
    %cst_75 = arith.constant dense<0.000000e+00> : vector<8x8xf32>
    %193 = tpu.matmul %191, %192, %cst_75 {dimension_numbers = #tpu.dot_dimension_numbers<[1], [0], [0], [1], [0, 0, 1, 1], [], []>} : vector<8x8xbf16>, vector<8x8xbf16>, vector<8x8xf32> -> vector<8x8xf32>
    %194 = vector.extract_strided_slice %149 {offsets = [0, 16], sizes = [8, 8], strides = [1, 1]} : vector<8x32xbf16> to vector<8x8xbf16>
    %195 = vector.extract_strided_slice %150 {offsets = [0, 16], sizes = [8, 8], strides = [1, 1]} : vector<8x32xbf16> to vector<8x8xbf16>
    %cst_76 = arith.constant dense<0.000000e+00> : vector<8x8xf32>
    %196 = tpu.matmul %194, %195, %cst_76 {dimension_numbers = #tpu.dot_dimension_numbers<[1], [1], [0], [0], [0, 0, 1, 0], [], []>} : vector<8x8xbf16>, vector<8x8xbf16>, vector<8x8xf32> -> vector<8x8xf32>
    %cst_77 = arith.constant 0.353553385 : f32
    %197 = vector.broadcast %cst_77 : f32 to vector<8x8xf32>
    %198 = arith.mulf %196, %197 : vector<8x8xf32>
    %cst_78 = arith.constant -1.000000e+10 : f32
    %199 = vector.broadcast %cst_78 : f32 to vector<8x8xf32>
    %200 = arith.select %153, %198, %199 : vector<8x8xi1>, vector<8x8xf32>
    %cst_79 = arith.constant dense<0xFF800000> : vector<8xf32>
    %201 = vector.multi_reduction <maximumf>, %200, %cst_79 [1] : vector<8x8xf32> to vector<8xf32>
    %202 = vector.shape_cast %201 : vector<8xf32> to vector<8x1xf32>
    %203 = vector.broadcast %202 : vector<8x1xf32> to vector<8x8xf32>
    %204 = arith.subf %200, %203 : vector<8x8xf32>
    %205 = math.exp %204 : vector<8x8xf32>
    %cst_80 = arith.constant dense<0.000000e+00> : vector<8xf32>
    %206 = vector.multi_reduction <add>, %205, %cst_80 [1] : vector<8x8xf32> to vector<8xf32>
    %207 = vector.shape_cast %206 : vector<8xf32> to vector<8x1xf32>
    %208 = tpu.reciprocal %207 {approx = true} : vector<8x1xf32> -> vector<8x1xf32>
    %209 = vector.broadcast %208 : vector<8x1xf32> to vector<8x8xf32>
    %210 = arith.mulf %205, %209 : vector<8x8xf32>
    %211 = arith.truncf %210 : vector<8x8xf32> to vector<8x8xbf16>
    %212 = vector.extract_strided_slice %151 {offsets = [0, 16], sizes = [8, 8], strides = [1, 1]} : vector<8x32xbf16> to vector<8x8xbf16>
    %cst_81 = arith.constant dense<0.000000e+00> : vector<8x8xf32>
    %213 = tpu.matmul %211, %212, %cst_81 {dimension_numbers = #tpu.dot_dimension_numbers<[1], [0], [0], [1], [0, 0, 1, 1], [], []>} : vector<8x8xbf16>, vector<8x8xbf16>, vector<8x8xf32> -> vector<8x8xf32>
    %214 = vector.extract_strided_slice %149 {offsets = [0, 24], sizes = [8, 8], strides = [1, 1]} : vector<8x32xbf16> to vector<8x8xbf16>
    %215 = vector.extract_strided_slice %150 {offsets = [0, 24], sizes = [8, 8], strides = [1, 1]} : vector<8x32xbf16> to vector<8x8xbf16>
    %cst_82 = arith.constant dense<0.000000e+00> : vector<8x8xf32>
    %216 = tpu.matmul %214, %215, %cst_82 {dimension_numbers = #tpu.dot_dimension_numbers<[1], [1], [0], [0], [0, 0, 1, 0], [], []>} : vector<8x8xbf16>, vector<8x8xbf16>, vector<8x8xf32> -> vector<8x8xf32>
    %cst_83 = arith.constant 0.353553385 : f32
    %217 = vector.broadcast %cst_83 : f32 to vector<8x8xf32>
    %218 = arith.mulf %216, %217 : vector<8x8xf32>
    %cst_84 = arith.constant -1.000000e+10 : f32
    %219 = vector.broadcast %cst_84 : f32 to vector<8x8xf32>
    %220 = arith.select %153, %218, %219 : vector<8x8xi1>, vector<8x8xf32>
    %cst_85 = arith.constant dense<0xFF800000> : vector<8xf32>
    %221 = vector.multi_reduction <maximumf>, %220, %cst_85 [1] : vector<8x8xf32> to vector<8xf32>
    %222 = vector.shape_cast %221 : vector<8xf32> to vector<8x1xf32>
    %223 = vector.broadcast %222 : vector<8x1xf32> to vector<8x8xf32>
    %224 = arith.subf %220, %223 : vector<8x8xf32>
    %225 = math.exp %224 : vector<8x8xf32>
    %cst_86 = arith.constant dense<0.000000e+00> : vector<8xf32>
    %226 = vector.multi_reduction <add>, %225, %cst_86 [1] : vector<8x8xf32> to vector<8xf32>
    %227 = vector.shape_cast %226 : vector<8xf32> to vector<8x1xf32>
    %228 = tpu.reciprocal %227 {approx = true} : vector<8x1xf32> -> vector<8x1xf32>
    %229 = vector.broadcast %228 : vector<8x1xf32> to vector<8x8xf32>
    %230 = arith.mulf %225, %229 : vector<8x8xf32>
    %231 = arith.truncf %230 : vector<8x8xf32> to vector<8x8xbf16>
    %232 = vector.extract_strided_slice %151 {offsets = [0, 24], sizes = [8, 8], strides = [1, 1]} : vector<8x32xbf16> to vector<8x8xbf16>
    %cst_87 = arith.constant dense<0.000000e+00> : vector<8x8xf32>
    %233 = tpu.matmul %231, %232, %cst_87 {dimension_numbers = #tpu.dot_dimension_numbers<[1], [0], [0], [1], [0, 0, 1, 1], [], []>} : vector<8x8xbf16>, vector<8x8xbf16>, vector<8x8xf32> -> vector<8x8xf32>
    %234 = tpu.concatenate %173, %193, %213, %233 in 1 : vector<8x8xf32>, vector<8x8xf32>, vector<8x8xf32>, vector<8x8xf32> -> vector<8x32xf32>
    %235 = arith.truncf %234 : vector<8x32xf32> to vector<8x32xbf16>
    %c0_88 = arith.constant 0 : index
    %c0_89 = arith.constant 0 : index
    %236 = vector.load %arg13[%c0_88, %c0_89] : memref<32x32xbf16, #tpu.memory_space<vmem>>, vector<32x32xbf16>
    %cst_90 = arith.constant dense<0.000000e+00> : vector<8x32xf32>
    %237 = tpu.matmul %235, %236, %cst_90 {dimension_numbers = #tpu.dot_dimension_numbers<[1], [0], [0], [1], [0, 0, 1, 1], [], []>} : vector<8x32xbf16>, vector<32x32xbf16>, vector<8x32xf32> -> vector<8x32xf32>
    %c0_91 = arith.constant 0 : index
    %c0_92 = arith.constant 0 : index
    %238 = vector.load %arg14[%c0_91, %c0_92] : memref<1x32xf32, #tpu.memory_space<vmem>>, vector<1x32xf32>
    %239 = vector.broadcast %238 : vector<1x32xf32> to vector<8x32xf32>
    %240 = arith.addf %237, %239 : vector<8x32xf32>
    %c0_93 = arith.constant 0 : index
    %c0_94 = arith.constant 0 : index
    %241 = vector.load %arg15[%c0_93, %c0_94] : memref<1x32xf32, #tpu.memory_space<vmem>>, vector<1x32xf32>
    %c0_95 = arith.constant 0 : index
    %c0_96 = arith.constant 0 : index
    %242 = vector.load %arg16[%c0_95, %c0_96] : memref<1x32xf32, #tpu.memory_space<vmem>>, vector<1x32xf32>
    %243 = arith.addf %131, %240 : vector<8x32xf32>
    %cst_97 = arith.constant dense<0.000000e+00> : vector<8xf32>
    %244 = vector.multi_reduction <add>, %243, %cst_97 [1] : vector<8x32xf32> to vector<8xf32>
    %245 = vector.shape_cast %244 : vector<8xf32> to vector<8x1xf32>
    %cst_98 = arith.constant 3.200000e+01 : f32
    %246 = vector.broadcast %cst_98 : f32 to vector<8x1xf32>
    %247 = arith.divf %245, %246 : vector<8x1xf32>
    %248 = vector.broadcast %247 : vector<8x1xf32> to vector<8x32xf32>
    %249 = arith.subf %243, %248 : vector<8x32xf32>
    %250 = arith.mulf %249, %249 : vector<8x32xf32>
    %cst_99 = arith.constant dense<0.000000e+00> : vector<8xf32>
    %251 = vector.multi_reduction <add>, %250, %cst_99 [1] : vector<8x32xf32> to vector<8xf32>
    %252 = vector.shape_cast %251 : vector<8xf32> to vector<8x1xf32>
    %cst_100 = arith.constant 3.200000e+01 : f32
    %253 = vector.broadcast %cst_100 : f32 to vector<8x1xf32>
    %254 = arith.divf %252, %253 : vector<8x1xf32>
    %255 = vector.broadcast %247 : vector<8x1xf32> to vector<8x32xf32>
    %256 = arith.subf %243, %255 : vector<8x32xf32>
    %cst_101 = arith.constant 9.99999974E-6 : f32
    %257 = vector.broadcast %cst_101 : f32 to vector<8x1xf32>
    %258 = arith.addf %254, %257 : vector<8x1xf32>
    %259 = math.rsqrt %258 : vector<8x1xf32>
    %260 = vector.broadcast %259 : vector<8x1xf32> to vector<8x32xf32>
    %261 = arith.mulf %256, %260 : vector<8x32xf32>
    %262 = vector.broadcast %241 : vector<1x32xf32> to vector<8x32xf32>
    %263 = arith.mulf %261, %262 : vector<8x32xf32>
    %264 = vector.broadcast %242 : vector<1x32xf32> to vector<8x32xf32>
    %265 = arith.addf %263, %264 : vector<8x32xf32>
    %266 = arith.truncf %265 : vector<8x32xf32> to vector<8x32xbf16>
    %c0_102 = arith.constant 0 : index
    %c0_103 = arith.constant 0 : index
    %267 = vector.load %arg17[%c0_102, %c0_103] : memref<32x64xbf16, #tpu.memory_space<vmem>>, vector<32x64xbf16>
    %cst_104 = arith.constant dense<0.000000e+00> : vector<8x64xf32>
    %268 = tpu.matmul %266, %267, %cst_104 {dimension_numbers = #tpu.dot_dimension_numbers<[1], [0], [0], [1], [0, 0, 1, 1], [], []>} : vector<8x32xbf16>, vector<32x64xbf16>, vector<8x64xf32> -> vector<8x64xf32>
    %c0_105 = arith.constant 0 : index
    %c0_106 = arith.constant 0 : index
    %269 = vector.load %arg18[%c0_105, %c0_106] : memref<1x64xf32, #tpu.memory_space<vmem>>, vector<1x64xf32>
    %270 = vector.broadcast %269 : vector<1x64xf32> to vector<8x64xf32>
    %271 = arith.addf %268, %270 : vector<8x64xf32>
    %cst_107 = arith.constant 0.000000e+00 : f32
    %272 = vector.broadcast %cst_107 : f32 to vector<8x64xf32>
    %273 = arith.maximumf %271, %272 : vector<8x64xf32>
    %274 = arith.truncf %273 : vector<8x64xf32> to vector<8x64xbf16>
    %c0_108 = arith.constant 0 : index
    %c0_109 = arith.constant 0 : index
    %275 = vector.load %arg19[%c0_108, %c0_109] : memref<64x32xbf16, #tpu.memory_space<vmem>>, vector<64x32xbf16>
    %cst_110 = arith.constant dense<0.000000e+00> : vector<8x32xf32>
    %276 = tpu.matmul %274, %275, %cst_110 {dimension_numbers = #tpu.dot_dimension_numbers<[1], [0], [0], [1], [0, 0, 1, 1], [], []>} : vector<8x64xbf16>, vector<64x32xbf16>, vector<8x32xf32> -> vector<8x32xf32>
    %c0_111 = arith.constant 0 : index
    %c0_112 = arith.constant 0 : index
    %277 = vector.load %arg20[%c0_111, %c0_112] : memref<1x32xf32, #tpu.memory_space<vmem>>, vector<1x32xf32>
    %278 = vector.broadcast %277 : vector<1x32xf32> to vector<8x32xf32>
    %279 = arith.addf %276, %278 : vector<8x32xf32>
    %c0_113 = arith.constant 0 : index
    %c0_114 = arith.constant 0 : index
    %280 = vector.load %arg21[%c0_113, %c0_114] : memref<1x32xf32, #tpu.memory_space<vmem>>, vector<1x32xf32>
    %c0_115 = arith.constant 0 : index
    %c0_116 = arith.constant 0 : index
    %281 = vector.load %arg22[%c0_115, %c0_116] : memref<1x32xf32, #tpu.memory_space<vmem>>, vector<1x32xf32>
    %282 = arith.addf %265, %279 : vector<8x32xf32>
    %cst_117 = arith.constant dense<0.000000e+00> : vector<8xf32>
    %283 = vector.multi_reduction <add>, %282, %cst_117 [1] : vector<8x32xf32> to vector<8xf32>
    %284 = vector.shape_cast %283 : vector<8xf32> to vector<8x1xf32>
    %cst_118 = arith.constant 3.200000e+01 : f32
    %285 = vector.broadcast %cst_118 : f32 to vector<8x1xf32>
    %286 = arith.divf %284, %285 : vector<8x1xf32>
    %287 = vector.broadcast %286 : vector<8x1xf32> to vector<8x32xf32>
    %288 = arith.subf %282, %287 : vector<8x32xf32>
    %289 = arith.mulf %288, %288 : vector<8x32xf32>
    %cst_119 = arith.constant dense<0.000000e+00> : vector<8xf32>
    %290 = vector.multi_reduction <add>, %289, %cst_119 [1] : vector<8x32xf32> to vector<8xf32>
    %291 = vector.shape_cast %290 : vector<8xf32> to vector<8x1xf32>
    %cst_120 = arith.constant 3.200000e+01 : f32
    %292 = vector.broadcast %cst_120 : f32 to vector<8x1xf32>
    %293 = arith.divf %291, %292 : vector<8x1xf32>
    %294 = vector.broadcast %286 : vector<8x1xf32> to vector<8x32xf32>
    %295 = arith.subf %282, %294 : vector<8x32xf32>
    %cst_121 = arith.constant 9.99999974E-6 : f32
    %296 = vector.broadcast %cst_121 : f32 to vector<8x1xf32>
    %297 = arith.addf %293, %296 : vector<8x1xf32>
    %298 = math.rsqrt %297 : vector<8x1xf32>
    %299 = vector.broadcast %298 : vector<8x1xf32> to vector<8x32xf32>
    %300 = arith.mulf %295, %299 : vector<8x32xf32>
    %301 = vector.broadcast %280 : vector<1x32xf32> to vector<8x32xf32>
    %302 = arith.mulf %300, %301 : vector<8x32xf32>
    %303 = vector.broadcast %281 : vector<1x32xf32> to vector<8x32xf32>
    %304 = arith.addf %302, %303 : vector<8x32xf32>
    %c0_122 = arith.constant 0 : index
    %c0_123 = arith.constant 0 : index
    %c0_124 = arith.constant 0 : index
    %305 = vector.load %arg23[%c0_122, %c0_123, %c0_124] : memref<1x8x32xf32, #tpu.memory_space<vmem>>, vector<1x8x32xf32>
    %306 = vector.shape_cast %305 : vector<1x8x32xf32> to vector<8x32xf32>
    %307 = vector.shape_cast %304 : vector<8x32xf32> to vector<1x8x32xf32>
    tpu.vector_store %arg23[%c0_122, %c0_123, %c0_124], %307 {strides = array<i32>} : memref<1x8x32xf32, #tpu.memory_space<vmem>>, vector<1x8x32xf32>,
    return
  }
  func.func @transform_0(%arg0: i32) -> (i32, i32, i32) {
    %c0_i32 = arith.constant 0 : i32
    %c0_i32_0 = arith.constant 0 : i32
    %c0_i32_1 = arith.constant 0 : i32
    return %arg0, %c0_i32, %c0_i32_0 : i32, i32, i32
  }
  func.func @transform_1(%arg0: i32) -> (i32, i32, i32) {
    %c0_i32 = arith.constant 0 : i32
    %c0_i32_0 = arith.constant 0 : i32
    %c0_i32_1 = arith.constant 0 : i32
    return %arg0, %c0_i32, %c0_i32_0 : i32, i32, i32
  }
  func.func @transform_2(%arg0: i32) -> (i32, i32, i32) {
    %c0_i32 = arith.constant 0 : i32
    %c0_i32_0 = arith.constant 0 : i32
    %c0_i32_1 = arith.constant 0 : i32
    return %arg0, %c0_i32, %c0_i32_0 : i32, i32, i32
  }
  func.func @transform_3(%arg0: i32) -> (i32, i32, i32) {
    %c0_i32 = arith.constant 0 : i32
    %c0_i32_0 = arith.constant 0 : i32
    %c0_i32_1 = arith.constant 0 : i32
    return %arg0, %c0_i32, %c0_i32_0 : i32, i32, i32
  }
  func.func @transform_4(%arg0: i32) -> (i32, i32) {
    %c0_i32 = arith.constant 0 : i32
    %c0_i32_0 = arith.constant 0 : i32
    %c0_i32_1 = arith.constant 0 : i32
    return %c0_i32, %c0_i32_0 : i32, i32
  }
  func.func @transform_5(%arg0: i32) -> (i32, i32) {
    %c0_i32 = arith.constant 0 : i32
    %c0_i32_0 = arith.constant 0 : i32
    %c0_i32_1 = arith.constant 0 : i32
    return %c0_i32, %c0_i32_0 : i32, i32
  }
  func.func @transform_6(%arg0: i32) -> (i32, i32) {
    %c0_i32 = arith.constant 0 : i32
    %c0_i32_0 = arith.constant 0 : i32
    %c0_i32_1 = arith.constant 0 : i32
    return %c0_i32, %c0_i32_0 : i32, i32
  }
  func.func @transform_7(%arg0: i32) -> (i32, i32) {
    %c0_i32 = arith.constant 0 : i32
    %c0_i32_0 = arith.constant 0 : i32
    %c0_i32_1 = arith.constant 0 : i32
    return %c0_i32, %c0_i32_0 : i32, i32
  }
  func.func @transform_8(%arg0: i32) -> (i32, i32) {
    %c0_i32 = arith.constant 0 : i32
    %c0_i32_0 = arith.constant 0 : i32
    %c0_i32_1 = arith.constant 0 : i32
    return %c0_i32, %c0_i32_0 : i32, i32
  }
  func.func @transform_9(%arg0: i32) -> (i32, i32) {
    %c0_i32 = arith.constant 0 : i32
    %c0_i32_0 = arith.constant 0 : i32
    %c0_i32_1 = arith.constant 0 : i32
    return %c0_i32, %c0_i32_0 : i32, i32
  }
  func.func @transform_10(%arg0: i32) -> (i32, i32) {
    %c0_i32 = arith.constant 0 : i32
    %c0_i32_0 = arith.constant 0 : i32
    %c0_i32_1 = arith.constant 0 : i32
    return %c0_i32, %c0_i32_0 : i32, i32
  }
  func.func @transform_11(%arg0: i32) -> (i32, i32) {
    %c0_i32 = arith.constant 0 : i32
    %c0_i32_0 = arith.constant 0 : i32
    %c0_i32_1 = arith.constant 0 : i32
    return %c0_i32, %c0_i32_0 : i32, i32
  }
  func.func @transform_12(%arg0: i32) -> (i32, i32) {
    %c0_i32 = arith.constant 0 : i32
    %c0_i32_0 = arith.constant 0 : i32
    %c0_i32_1 = arith.constant 0 : i32
    return %c0_i32, %c0_i32_0 : i32, i32
  }
  func.func @transform_13(%arg0: i32) -> (i32, i32) {
    %c0_i32 = arith.constant 0 : i32
    %c0_i32_0 = arith.constant 0 : i32
    %c0_i32_1 = arith.constant 0 : i32
    return %c0_i32, %c0_i32_0 : i32, i32
  }
  func.func @transform_14(%arg0: i32) -> (i32, i32) {
    %c0_i32 = arith.constant 0 : i32
    %c0_i32_0 = arith.constant 0 : i32
    %c0_i32_1 = arith.constant 0 : i32
    return %c0_i32, %c0_i32_0 : i32, i32
  }
  func.func @transform_15(%arg0: i32) -> (i32, i32) {
    %c0_i32 = arith.constant 0 : i32
    %c0_i32_0 = arith.constant 0 : i32
    %c0_i32_1 = arith.constant 0 : i32
    return %c0_i32, %c0_i32_0 : i32, i32
  }
  func.func @transform_16(%arg0: i32) -> (i32, i32) {
    %c0_i32 = arith.constant 0 : i32
    %c0_i32_0 = arith.constant 0 : i32
    %c0_i32_1 = arith.constant 0 : i32
    return %c0_i32, %c0_i32_0 : i32, i32
  }
  func.func @transform_17(%arg0: i32) -> (i32, i32) {
    %c0_i32 = arith.constant 0 : i32
    %c0_i32_0 = arith.constant 0 : i32
    %c0_i32_1 = arith.constant 0 : i32
    return %c0_i32, %c0_i32_0 : i32, i32
  }
  func.func @transform_18(%arg0: i32) -> (i32, i32) {
    %c0_i32 = arith.constant 0 : i32
    %c0_i32_0 = arith.constant 0 : i32
    %c0_i32_1 = arith.constant 0 : i32
    return %c0_i32, %c0_i32_0 : i32, i32
  }
  func.func @transform_19(%arg0: i32) -> (i32, i32) {
    %c0_i32 = arith.constant 0 : i32
    %c0_i32_0 = arith.constant 0 : i32
    %c0_i32_1 = arith.constant 0 : i32
    return %c0_i32, %c0_i32_0 : i32, i32
  }
  func.func @transform_20(%arg0: i32) -> (i32, i32) {
    %c0_i32 = arith.constant 0 : i32
    %c0_i32_0 = arith.constant 0 : i32
    %c0_i32_1 = arith.constant 0 : i32
    return %c0_i32, %c0_i32_0 : i32, i32
  }
  func.func @transform_21(%arg0: i32) -> (i32, i32) {
    %c0_i32 = arith.constant 0 : i32
    %c0_i32_0 = arith.constant 0 : i32
    %c0_i32_1 = arith.constant 0 : i32
    return %c0_i32, %c0_i32_0 : i32, i32
  }
  func.func @transform_22(%arg0: i32) -> (i32, i32, i32) {
    %c0_i32 = arith.constant 0 : i32
    %c0_i32_0 = arith.constant 0 : i32
    %c0_i32_1 = arith.constant 0 : i32
    return %arg0, %c0_i32, %c0_i32_0 : i32, i32, i32
  }
}

</mosaic_0001>

<llo_original>
// kernel: seq2seq_forward.9
$region0: #{seq2seq_forward.9}
  #allocation0 [shape = 'u32[]', space=smem, size = 0x4, offset = 0x4, fixed_abs, tag = 'smem constant byte address 0x4 - core index']
  #allocation1 [shape = 'u32[72,128]{1,0:T(1,128)}', space=vmem, size = 0x9000, scoped, tag = 'internal scratch']
  %s0 = inlined_call_operand.vmem [shape: f32[16,32], index: 0, kind: input, shape index: {}]
  %s1 = inlined_call_operand.vmem [shape: bf16[32,22], index: 1, kind: input, shape index: {}]
  %s2 = inlined_call_operand.vmem [shape: f32[1,22], index: 2, kind: input, shape index: {}]
  %s3 = inlined_call_operand.hbm [shape: f32[16,22], index: 3, kind: output, shape index: {}]
  %s4 = sld [smem:[#allocation0]]
  $region22: #{seq2seq_forward.9} parent=0
    _
  %s6 = ssub.s32 1, %s4
  %s7 = scalar_select 0, %s6, %s4
  $region1: #{seq2seq_forward.9} parent=0
    #allocation2 [shape = 'u8[8192]{0}', space=vmem, size = 0x2000, scoped, tag = 'output window, operand 0, single buffered']
    #allocation3 [shape = 's32[1]{0}', space=sflag, size = 0x4, scoped, tag = 'scoped memory for seq2seq_forward.9']
    %8 = vsyncpa [#allocation3], 0
    // Predicated region
    $region2: #{seq2seq_forward.9} parent=1 // pred_check
      _
    $region3: #{seq2seq_forward.9} parent=1 // pred_check_branch
      %10 = sbr.rel (0) target = $region5
    $region4: #{seq2seq_forward.9} parent=1 // pred_region
      _
    $region5: #{seq2seq_forward.9} parent=1 // pred_fallthru
      _
    // Predicated region
    $region6: #{seq2seq_forward.9} parent=1 // pred_check
      _
    $region7: #{seq2seq_forward.9} parent=1 // pred_check_branch
      %12 = sbr.rel (0) target = $region9
    $region8: #{seq2seq_forward.9} parent=1 // pred_region
      _
    $region9: #{seq2seq_forward.9} parent=1 // pred_fallthru
      _
    // Predicated region
    $region10: #{seq2seq_forward.9} parent=1 // pred_check
      _
    $region11: #{seq2seq_forward.9} parent=1 // pred_check_branch
      %14 = sbr.rel (0) target = $region13
    $region12: #{seq2seq_forward.9} parent=1 // pred_region
      _
    $region13: #{seq2seq_forward.9} parent=1 // pred_fallthru
      _
    %v16 = vld [vmem:[%s0] sm:$0xff]
    %v17 = vld [vmem:[%s0 + $0x8] sm:$0xff]
    %v18 = vpack.c.bf16 %v17, %v16
    %v19 = vld [vmem:[%s1] sm:$0xf]
    %v20 = vld [vmem:[%s1 + $0x4] sm:$0xf]
    %v21 = vld [vmem:[%s1 + $0x8] sm:$0xf]
    %v22 = vld [vmem:[%s1 + $0xc] sm:$0xf]
    %v23 = vld [vmem:[%s2] sm:$0x1]
    %v25 = vperm.slane %v23, 0
    %v31 = vunpack.c.l.b16 %v19
    %v32 = vunpack.c.l.b16 %v20
    %v33 = vunpack.c.l.b16 %v21
    %v34 = vunpack.c.l.b16 %v22
    %v35 = vpack.c.b16 %v32, %v31
    %v36 = vpack.c.b16 %v34, %v33
    %vm39 = vcmask 261120
    %v41 = vsel %vm39, %v18, 0
    %43 = vmatpush.bf16.msra.mxu0 0
    %44 = vmatpush.bf16.msra.mxu0 0
    %45 = vmatpush.bf16.msra.mxu0 0
    %46 = vmatpush.bf16.msra.mxu0 0
    %47 = vmatpush.bf16.msra.mxu0 0
    %48 = vmatpush.bf16.msra.mxu0 0
    %49 = vmatpush.bf16.msra.mxu0 %v36
    %50 = vmatpush.bf16.msra.mxu0 %v35
    %51 = vmatmul.bf16.gmra.mxu0 %v41
    %v52 = vpop.f32.mrf.mxu0
    %v53 = vadd.f32 %v25, %v52
    %v54 = vpop.f32.mrf.mxu0
    %v55 = vadd.f32 %v25, %v54
    %56 = vdwg.mxu0
    %vm57 = vcmask 179200
    %58 = vst.msk [vmem:[#allocation2] sm:$0xff] %vm57, %v53
    %59 = vst.msk [vmem:[#allocation2 + $0x8] sm:$0xff] %vm57, %v55
    // Predicated region
    $region14: #{seq2seq_forward.9} parent=1 // pred_check
      _
    $region15: #{seq2seq_forward.9} parent=1 // pred_check_branch
      %61 = sbr.rel (0) target = $region17
    $region16: #{seq2seq_forward.9} parent=1 // pred_region
      %63 = vsyncadd [#allocation3], 0
      %s64 = sshll.u32 [#allocation2], 4
      %s65 = int_to_ptr.vmem [resolvable:$true] %s64
      %s66 = sshll.u32 %s3, 4
      %s67 = int_to_ptr.hbm [resolvable:$true] %s66
      %72 = dma.vmem_to_hbm [thread:$0]  %s65, 256, %s67, [#allocation3], 128, 128, 8
    $region17: #{seq2seq_forward.9} parent=1 // pred_fallthru
      _
    // Predicated region
    $region18: #{seq2seq_forward.9} parent=1 // pred_check
      _
    $region19: #{seq2seq_forward.9} parent=1 // pred_check_branch
      %74 = sbr.rel (0) target = $region21
    $region20: #{seq2seq_forward.9} parent=1 // pred_region
      %76 = dma.done [#allocation3], 256
    $region21: #{seq2seq_forward.9} parent=1 // pred_fallthru
      _
    %77 = vsyncpa [#allocation3], 1

// kernel: seq2seq_forward.5
$region0: #{seq2seq_forward.5}
  #allocation0 [shape = 'u32[]', space=smem, size = 0x4, offset = 0x4, fixed_abs, tag = 'smem constant byte address 0x4 - core index']
  #allocation1 [shape = 'u32[72,128]{1,0:T(1,128)}', space=vmem, size = 0x9000, scoped, tag = 'internal scratch']
  %s0 = inlined_call_operand.vmem [shape: f32[2,8,32], index: 0, kind: input, shape index: {}]
  %s1 = inlined_call_operand.vmem [shape: s8[2,8,8], index: 1, kind: input, shape index: {}]
  %s2 = inlined_call_operand.vmem [shape: bf16[32,96], index: 2, kind: input, shape index: {}]
  %s3 = inlined_call_operand.vmem [shape: f32[1,96], index: 3, kind: input, shape index: {}]
  %s4 = inlined_call_operand.vmem [shape: bf16[32,32], index: 4, kind: input, shape index: {}]
  %s5 = inlined_call_operand.vmem [shape: f32[1,32], index: 5, kind: input, shape index: {}]
  %s6 = inlined_call_operand.vmem [shape: f32[1,32], index: 6, kind: input, shape index: {}]
  %s7 = inlined_call_operand.vmem [shape: f32[1,32], index: 7, kind: input, shape index: {}]
  %s8 = inlined_call_operand.vmem [shape: bf16[32,64], index: 8, kind: input, shape index: {}]
  %s9 = inlined_call_operand.vmem [shape: f32[1,64], index: 9, kind: input, shape index: {}]
  %s10 = inlined_call_operand.vmem [shape: bf16[64,32], index: 10, kind: input, shape index: {}]
  %s11 = inlined_call_operand.vmem [shape: f32[1,32], index: 11, kind: input, shape index: {}]
  %s12 = inlined_call_operand.vmem [shape: f32[1,32], index: 12, kind: input, shape index: {}]
  %s13 = inlined_call_operand.vmem [shape: f32[1,32], index: 13, kind: input, shape index: {}]
  %s14 = inlined_call_operand.vmem [shape: f32[2,8,32], index: 14, kind: output, shape index: {}]
  %s15 = sld [smem:[#allocation0]]
  $region89: #{seq2seq_forward.5} parent=0
    _
  %s17 = ssub.s32 1, %s15
  %s18 = scalar_select 0, %s17, %s15
  loop: start=0, step=1, limit=4
  $region2: #{seq2seq_forward.5} parent=0 // loop_pre_header
    _
  $region3: #{seq2seq_forward.5} parent=0 // loop_header
    %s20 = sphi 0, %s24
    %p21 = scmp.ge.s32.totalorder %s20, 4
    %s30 = sphi 0, %s32
    %s33 = sphi 0, %s30
    %s34 = sphi 0, %s33
    %s50 = sphi 0, %s34
    %s56 = sphi 0, %s58
    %s59 = sphi 0, %s56
    %s60 = sphi 0, %s59
    %s76 = sphi 0, %s60
    %s80 = sphi 0, %s80
    %s82 = sphi 0, %s80
    %s83 = sphi 0, %s82
    %s97 = sphi 0, %s83
    %s101 = sphi 0, %s101
    %s103 = sphi 0, %s101
    %s104 = sphi 0, %s103
    %s118 = sphi 0, %s104
    %s122 = sphi 0, %s122
    %s124 = sphi 0, %s122
    %s125 = sphi 0, %s124
    %s139 = sphi 0, %s125
    %s143 = sphi 0, %s143
    %s145 = sphi 0, %s143
    %s146 = sphi 0, %s145
    %s160 = sphi 0, %s146
    %s164 = sphi 0, %s164
    %s166 = sphi 0, %s164
    %s167 = sphi 0, %s166
    %s181 = sphi 0, %s167
    %s185 = sphi 0, %s185
    %s187 = sphi 0, %s185
    %s188 = sphi 0, %s187
    %s202 = sphi 0, %s188
    %s206 = sphi 0, %s206
    %s208 = sphi 0, %s206
    %s209 = sphi 0, %s208
    %s223 = sphi 0, %s209
    %s227 = sphi 0, %s227
    %s229 = sphi 0, %s227
    %s230 = sphi 0, %s229
    %s244 = sphi 0, %s230
    %s248 = sphi 0, %s248
    %s250 = sphi 0, %s248
    %s251 = sphi 0, %s250
    %s265 = sphi 0, %s251
    %s269 = sphi 0, %s269
    %s271 = sphi 0, %s269
    %s272 = sphi 0, %s271
    %s286 = sphi 0, %s272
    %s290 = sphi 0, %s290
    %s292 = sphi 0, %s290
    %s293 = sphi 0, %s292
    %s307 = sphi 0, %s293
    %s311 = sphi 0, %s311
    %s313 = sphi 0, %s311
    %s314 = sphi 0, %s313
    %s328 = sphi 0, %s314
    %s334 = sphi 0, %s336
    %s337 = sphi 0, %s334
    %s338 = sphi 0, %s337
    %s354 = sphi 0, %s338
  $region4: #{seq2seq_forward.5} parent=0 // loop_header_branch
    %23 = sbr.rel (%p21) target = $region8
  $region5: #{seq2seq_forward.5} parent=0 // loop_body
    %s25 = ssub.s32 %s20, 1
    %s26 = ssub.s32 %s20, 2
    %s27 = sadd.s32 %s20, 1
    %s28 = ssub.s32 %s20, %s27
    %p29 = scmp.eq.s32.totalorder %s28, 0
    %s31 = sadd.s32 %s30, 1
    %s32 = scalar_select %p29, %s30, %s31
    %p35 = pneg %p29
    %p36 = scmp.eq.s32.totalorder %s20, 1
    %p37 = por %p35, %p36
    %p38 = scmp.ne.s32.totalorder %s30, %s33
    %p39 = scmp.eq.s32.totalorder %s20, 0
    %p40 = por %p38, %p39
    %p41 = scmp.ne.s32.totalorder %s30, %s33
    %p42 = scmp.eq.s32.totalorder %s25, 1
    %p43 = por %p41, %p42
    %p44 = scmp.ne.s32.totalorder %s33, %s34
    %p45 = scmp.eq.s32.totalorder %s25, 0
    %p46 = por %p44, %p45
    %p47 = scmp.ne.s32.totalorder %s33, %s34
    %p48 = scmp.eq.s32.totalorder %s26, 1
    %p49 = por %p47, %p48
    %p51 = scmp.ne.s32.totalorder %s34, %s50
    %p52 = scmp.eq.s32.totalorder %s26, 0
    %p53 = por %p51, %p52
    %s54 = ssub.s32 %s20, %s27
    %p55 = scmp.eq.s32.totalorder %s54, 0
    %s57 = sadd.s32 %s56, 1
    %s58 = scalar_select %p55, %s56, %s57
    %p61 = pneg %p55
    %p62 = scmp.eq.s32.totalorder %s20, 1
    %p63 = por %p61, %p62
    %p64 = scmp.ne.s32.totalorder %s56, %s59
    %p65 = scmp.eq.s32.totalorder %s20, 0
    %p66 = por %p64, %p65
    %p67 = scmp.ne.s32.totalorder %s56, %s59
    %p68 = scmp.eq.s32.totalorder %s25, 1
    %p69 = por %p67, %p68
    %p70 = scmp.ne.s32.totalorder %s59, %s60
    %p71 = scmp.eq.s32.totalorder %s25, 0
    %p72 = por %p70, %p71
    %p73 = scmp.ne.s32.totalorder %s59, %s60
    %p74 = scmp.eq.s32.totalorder %s26, 1
    %p75 = por %p73, %p74
    %p77 = scmp.ne.s32.totalorder %s60, %s76
    %p78 = scmp.eq.s32.totalorder %s26, 0
    %p79 = por %p77, %p78
    %s81 = sadd.s32 %s80, 1
    %p84 = scmp.eq.s32.totalorder %s20, 1
    %p85 = scmp.ne.s32.totalorder %s80, %s82
    %p86 = scmp.eq.s32.totalorder %s20, 0
    %p87 = por %p85, %p86
    %p88 = scmp.ne.s32.totalorder %s80, %s82
    %p89 = scmp.eq.s32.totalorder %s25, 1
    %p90 = por %p88, %p89
    %p91 = scmp.ne.s32.totalorder %s82, %s83
    %p92 = scmp.eq.s32.totalorder %s25, 0
    %p93 = por %p91, %p92
    %p94 = scmp.ne.s32.totalorder %s82, %s83
    %p95 = scmp.eq.s32.totalorder %s26, 1
    %p96 = por %p94, %p95
    %p98 = scmp.ne.s32.totalorder %s83, %s97
    %p99 = scmp.eq.s32.totalorder %s26, 0
    %p100 = por %p98, %p99
    %s102 = sadd.s32 %s101, 1
    %p105 = scmp.eq.s32.totalorder %s20, 1
    %p106 = scmp.ne.s32.totalorder %s101, %s103
    %p107 = scmp.eq.s32.totalorder %s20, 0
    %p108 = por %p106, %p107
    %p109 = scmp.ne.s32.totalorder %s101, %s103
    %p110 = scmp.eq.s32.totalorder %s25, 1
    %p111 = por %p109, %p110
    %p112 = scmp.ne.s32.totalorder %s103, %s104
    %p113 = scmp.eq.s32.totalorder %s25, 0
    %p114 = por %p112, %p113
    %p115 = scmp.ne.s32.totalorder %s103, %s104
    %p116 = scmp.eq.s32.totalorder %s26, 1
    %p117 = por %p115, %p116
    %p119 = scmp.ne.s32.totalorder %s104, %s118
    %p120 = scmp.eq.s32.totalorder %s26, 0
    %p121 = por %p119, %p120
    %s123 = sadd.s32 %s122, 1
    %p126 = scmp.eq.s32.totalorder %s20, 1
    %p127 = scmp.ne.s32.totalorder %s122, %s124
    %p128 = scmp.eq.s32.totalorder %s20, 0
    %p129 = por %p127, %p128
    %p130 = scmp.ne.s32.totalorder %s122, %s124
    %p131 = scmp.eq.s32.totalorder %s25, 1
    %p132 = por %p130, %p131
    %p133 = scmp.ne.s32.totalorder %s124, %s125
    %p134 = scmp.eq.s32.totalorder %s25, 0
    %p135 = por %p133, %p134
    %p136 = scmp.ne.s32.totalorder %s124, %s125
    %p137 = scmp.eq.s32.totalorder %s26, 1
    %p138 = por %p136, %p137
    %p140 = scmp.ne.s32.totalorder %s125, %s139
    %p141 = scmp.eq.s32.totalorder %s26, 0
    %p142 = por %p140, %p141
    %s144 = sadd.s32 %s143, 1
    %p147 = scmp.eq.s32.totalorder %s20, 1
    %p148 = scmp.ne.s32.totalorder %s143, %s145
    %p149 = scmp.eq.s32.totalorder %s20, 0
    %p150 = por %p148, %p149
    %p151 = scmp.ne.s32.totalorder %s143, %s145
    %p152 = scmp.eq.s32.totalorder %s25, 1
    %p153 = por %p151, %p152
    %p154 = scmp.ne.s32.totalorder %s145, %s146
    %p155 = scmp.eq.s32.totalorder %s25, 0
    %p156 = por %p154, %p155
    %p157 = scmp.ne.s32.totalorder %s145, %s146
    %p158 = scmp.eq.s32.totalorder %s26, 1
    %p159 = por %p157, %p158
    %p161 = scmp.ne.s32.totalorder %s146, %s160
    %p162 = scmp.eq.s32.totalorder %s26, 0
    %p163 = por %p161, %p162
    %s165 = sadd.s32 %s164, 1
    %p168 = scmp.eq.s32.totalorder %s20, 1
    %p169 = scmp.ne.s32.totalorder %s164, %s166
    %p170 = scmp.eq.s32.totalorder %s20, 0
    %p171 = por %p169, %p170
    %p172 = scmp.ne.s32.totalorder %s164, %s166
    %p173 = scmp.eq.s32.totalorder %s25, 1
    %p174 = por %p172, %p173
    %p175 = scmp.ne.s32.totalorder %s166, %s167
    %p176 = scmp.eq.s32.totalorder %s25, 0
    %p177 = por %p175, %p176
    %p178 = scmp.ne.s32.totalorder %s166, %s167
    %p179 = scmp.eq.s32.totalorder %s26, 1
    %p180 = por %p178, %p179
    %p182 = scmp.ne.s32.totalorder %s167, %s181
    %p183 = scmp.eq.s32.totalorder %s26, 0
    %p184 = por %p182, %p183
    %s186 = sadd.s32 %s185, 1
    %p189 = scmp.eq.s32.totalorder %s20, 1
    %p190 = scmp.ne.s32.totalorder %s185, %s187
    %p191 = scmp.eq.s32.totalorder %s20, 0
    %p192 = por %p190, %p191
    %p193 = scmp.ne.s32.totalorder %s185, %s187
    %p194 = scmp.eq.s32.totalorder %s25, 1
    %p195 = por %p193, %p194
    %p196 = scmp.ne.s32.totalorder %s187, %s188
    %p197 = scmp.eq.s32.totalorder %s25, 0
    %p198 = por %p196, %p197
    %p199 = scmp.ne.s32.totalorder %s187, %s188
    %p200 = scmp.eq.s32.totalorder %s26, 1
    %p201 = por %p199, %p200
    %p203 = scmp.ne.s32.totalorder %s188, %s202
    %p204 = scmp.eq.s32.totalorder %s26, 0
    %p205 = por %p203, %p204
    %s207 = sadd.s32 %s206, 1
    %p210 = scmp.eq.s32.totalorder %s20, 1
    %p211 = scmp.ne.s32.totalorder %s206, %s208
    %p212 = scmp.eq.s32.totalorder %s20, 0
    %p213 = por %p211, %p212
    %p214 = scmp.ne.s32.totalorder %s206, %s208
    %p215 = scmp.eq.s32.totalorder %s25, 1
    %p216 = por %p214, %p215
    %p217 = scmp.ne.s32.totalorder %s208, %s209
    %p218 = scmp.eq.s32.totalorder %s25, 0
    %p219 = por %p217, %p218
    %p220 = scmp.ne.s32.totalorder %s208, %s209
    %p221 = scmp.eq.s32.totalorder %s26, 1
    %p222 = por %p220, %p221
    %p224 = scmp.ne.s32.totalorder %s209, %s223
    %p225 = scmp.eq.s32.totalorder %s26, 0
    %p226 = por %p224, %p225
    %s228 = sadd.s32 %s227, 1
    %p231 = scmp.eq.s32.totalorder %s20, 1
    %p232 = scmp.ne.s32.totalorder %s227, %s229
    %p233 = scmp.eq.s32.totalorder %s20, 0
    %p234 = por %p232, %p233
    %p235 = scmp.ne.s32.totalorder %s227, %s229
    %p236 = scmp.eq.s32.totalorder %s25, 1
    %p237 = por %p235, %p236
    %p238 = scmp.ne.s32.totalorder %s229, %s230
    %p239 = scmp.eq.s32.totalorder %s25, 0
    %p240 = por %p238, %p239
    %p241 = scmp.ne.s32.totalorder %s229, %s230
    %p242 = scmp.eq.s32.totalorder %s26, 1
    %p243 = por %p241, %p242
    %p245 = scmp.ne.s32.totalorder %s230, %s244
    %p246 = scmp.eq.s32.totalorder %s26, 0
    %p247 = por %p245, %p246
    %s249 = sadd.s32 %s248, 1
    %p252 = scmp.eq.s32.totalorder %s20, 1
    %p253 = scmp.ne.s32.totalorder %s248, %s250
    %p254 = scmp.eq.s32.totalorder %s20, 0
    %p255 = por %p253, %p254
    %p256 = scmp.ne.s32.totalorder %s248, %s250
    %p257 = scmp.eq.s32.totalorder %s25, 1
    %p258 = por %p256, %p257
    %p259 = scmp.ne.s32.totalorder %s250, %s251
    %p260 = scmp.eq.s32.totalorder %s25, 0
    %p261 = por %p259, %p260
    %p262 = scmp.ne.s32.totalorder %s250, %s251
    %p263 = scmp.eq.s32.totalorder %s26, 1
    %p264 = por %p262, %p263
    %p266 = scmp.ne.s32.totalorder %s251, %s265
    %p267 = scmp.eq.s32.totalorder %s26, 0
    %p268 = por %p266, %p267
    %s270 = sadd.s32 %s269, 1
    %p273 = scmp.eq.s32.totalorder %s20, 1
    %p274 = scmp.ne.s32.totalorder %s269, %s271
    %p275 = scmp.eq.s32.totalorder %s20, 0
    %p276 = por %p274, %p275
    %p277 = scmp.ne.s32.totalorder %s269, %s271
    %p278 = scmp.eq.s32.totalorder %s25, 1
    %p279 = por %p277, %p278
    %p280 = scmp.ne.s32.totalorder %s271, %s272
    %p281 = scmp.eq.s32.totalorder %s25, 0
    %p282 = por %p280, %p281
    %p283 = scmp.ne.s32.totalorder %s271, %s272
    %p284 = scmp.eq.s32.totalorder %s26, 1
    %p285 = por %p283, %p284
    %p287 = scmp.ne.s32.totalorder %s272, %s286
    %p288 = scmp.eq.s32.totalorder %s26, 0
    %p289 = por %p287, %p288
    %s291 = sadd.s32 %s290, 1
    %p294 = scmp.eq.s32.totalorder %s20, 1
    %p295 = scmp.ne.s32.totalorder %s290, %s292
    %p296 = scmp.eq.s32.totalorder %s20, 0
    %p297 = por %p295, %p296
    %p298 = scmp.ne.s32.totalorder %s290, %s292
    %p299 = scmp.eq.s32.totalorder %s25, 1
    %p300 = por %p298, %p299
    %p301 = scmp.ne.s32.totalorder %s292, %s293
    %p302 = scmp.eq.s32.totalorder %s25, 0
    %p303 = por %p301, %p302
    %p304 = scmp.ne.s32.totalorder %s292, %s293
    %p305 = scmp.eq.s32.totalorder %s26, 1
    %p306 = por %p304, %p305
    %p308 = scmp.ne.s32.totalorder %s293, %s307
    %p309 = scmp.eq.s32.totalorder %s26, 0
    %p310 = por %p308, %p309
    %s312 = sadd.s32 %s311, 1
    %p315 = scmp.eq.s32.totalorder %s20, 1
    %p316 = scmp.ne.s32.totalorder %s311, %s313
    %p317 = scmp.eq.s32.totalorder %s20, 0
    %p318 = por %p316, %p317
    %p319 = scmp.ne.s32.totalorder %s311, %s313
    %p320 = scmp.eq.s32.totalorder %s25, 1
    %p321 = por %p319, %p320
    %p322 = scmp.ne.s32.totalorder %s313, %s314
    %p323 = scmp.eq.s32.totalorder %s25, 0
    %p324 = por %p322, %p323
    %p325 = scmp.ne.s32.totalorder %s313, %s314
    %p326 = scmp.eq.s32.totalorder %s26, 1
    %p327 = por %p325, %p326
    %p329 = scmp.ne.s32.totalorder %s314, %s328
    %p330 = scmp.eq.s32.totalorder %s26, 0
    %p331 = por %p329, %p330
    %s332 = ssub.s32 %s20, %s27
    %p333 = scmp.eq.s32.totalorder %s332, 0
    %s335 = sadd.s32 %s334, 1
    %s336 = scalar_select %p333, %s334, %s335
    %p339 = pneg %p333
    %p340 = scmp.eq.s32.totalorder %s20, 1
    %p341 = por %p339, %p340
    %p342 = scmp.ne.s32.totalorder %s334, %s337
    %p343 = scmp.eq.s32.totalorder %s20, 0
    %p344 = por %p342, %p343
    %p345 = scmp.ne.s32.totalorder %s334, %s337
    %p346 = scmp.eq.s32.totalorder %s25, 1
    %p347 = por %p345, %p346
    %p348 = scmp.ne.s32.totalorder %s337, %s338
    %p349 = scmp.eq.s32.totalorder %s25, 0
    %p350 = por %p348, %p349
    %p351 = scmp.ne.s32.totalorder %s337, %s338
    %p352 = scmp.eq.s32.totalorder %s26, 1
    %p353 = por %p351, %p352
    %p355 = scmp.ne.s32.totalorder %s338, %s354
    %p356 = scmp.eq.s32.totalorder %s26, 0
    %p357 = por %p355, %p356
    %p358 = scmp.le.s32.totalorder 1, %s20
    %p359 = scmp.lt.s32.totalorder %s20, 3
    %p360 = pnand %p358, %p359
    %p361 = pneg %p360
    // Predicated region
    $region9: #{seq2seq_forward.5} parent=5 // pred_check
      _
    $region10: #{seq2seq_forward.5} parent=5 // pred_check_branch
      %363 = sbr.rel (%p360) target = $region12
    $region11: #{seq2seq_forward.5} parent=5 // pred_region
      %s364 = ssub.s32 %s20, 1
      // Predicated region
      $region13: #{seq2seq_forward.5} parent=11 // pred_check
        %p365 = pneg %p93
      $region14: #{seq2seq_forward.5} parent=11 // pred_check_branch
        %367 = sbr.rel (%p365) target = $region16
      $region15: #{seq2seq_forward.5} parent=11 // pred_region
        _
      $region16: #{seq2seq_forward.5} parent=11 // pred_fallthru
        _
      // Predicated region
      $region17: #{seq2seq_forward.5} parent=11 // pred_check
        %p368 = pneg %p114
      $region18: #{seq2seq_forward.5} parent=11 // pred_check_branch
        %370 = sbr.rel (%p368) target = $region20
      $region19: #{seq2seq_forward.5} parent=11 // pred_region
        _
      $region20: #{seq2seq_forward.5} parent=11 // pred_fallthru
        _
      // Predicated region
      $region21: #{seq2seq_forward.5} parent=11 // pred_check
        %p371 = pneg %p135
      $region22: #{seq2seq_forward.5} parent=11 // pred_check_branch
        %373 = sbr.rel (%p371) target = $region24
      $region23: #{seq2seq_forward.5} parent=11 // pred_region
        _
      $region24: #{seq2seq_forward.5} parent=11 // pred_fallthru
        _
      // Predicated region
      $region25: #{seq2seq_forward.5} parent=11 // pred_check
        %p374 = pneg %p156
      $region26: #{seq2seq_forward.5} parent=11 // pred_check_branch
        %376 = sbr.rel (%p374) target = $region28
      $region27: #{seq2seq_forward.5} parent=11 // pred_region
        _
      $region28: #{seq2seq_forward.5} parent=11 // pred_fallthru
        _
      // Predicated region
      $region29: #{seq2seq_forward.5} parent=11 // pred_check
        %p377 = pneg %p177
      $region30: #{seq2seq_forward.5} parent=11 // pred_check_branch
        %379 = sbr.rel (%p377) target = $region32
      $region31: #{seq2seq_forward.5} parent=11 // pred_region
        _
      $region32: #{seq2seq_forward.5} parent=11 // pred_fallthru
        _
      // Predicated region
      $region33: #{seq2seq_forward.5} parent=11 // pred_check
        %p380 = pneg %p198
      $region34: #{seq2seq_forward.5} parent=11 // pred_check_branch
        %382 = sbr.rel (%p380) target = $region36
      $region35: #{seq2seq_forward.5} parent=11 // pred_region
        _
      $region36: #{seq2seq_forward.5} parent=11 // pred_fallthru
        _
      // Predicated region
      $region37: #{seq2seq_forward.5} parent=11 // pred_check
        %p383 = pneg %p219
      $region38: #{seq2seq_forward.5} parent=11 // pred_check_branch
        %385 = sbr.rel (%p383) target = $region40
      $region39: #{seq2seq_forward.5} parent=11 // pred_region
        _
      $region40: #{seq2seq_forward.5} parent=11 // pred_fallthru
        _
      // Predicated region
      $region41: #{seq2seq_forward.5} parent=11 // pred_check
        %p386 = pneg %p240
      $region42: #{seq2seq_forward.5} parent=11 // pred_check_branch
        %388 = sbr.rel (%p386) target = $region44
      $region43: #{seq2seq_forward.5} parent=11 // pred_region
        _
      $region44: #{seq2seq_forward.5} parent=11 // pred_fallthru
        _
      // Predicated region
      $region45: #{seq2seq_forward.5} parent=11 // pred_check
        %p389 = pneg %p261
      $region46: #{seq2seq_forward.5} parent=11 // pred_check_branch
        %391 = sbr.rel (%p389) target = $region48
      $region47: #{seq2seq_forward.5} parent=11 // pred_region
        _
      $region48: #{seq2seq_forward.5} parent=11 // pred_fallthru
        _
      // Predicated region
      $region49: #{seq2seq_forward.5} parent=11 // pred_check
        %p392 = pneg %p282
      $region50: #{seq2seq_forward.5} parent=11 // pred_check_branch
        %394 = sbr.rel (%p392) target = $region52
      $region51: #{seq2seq_forward.5} parent=11 // pred_region
        _
      $region52: #{seq2seq_forward.5} parent=11 // pred_fallthru
        _
      // Predicated region
      $region53: #{seq2seq_forward.5} parent=11 // pred_check
        %p395 = pneg %p303
      $region54: #{seq2seq_forward.5} parent=11 // pred_check_branch
        %397 = sbr.rel (%p395) target = $region56
      $region55: #{seq2seq_forward.5} parent=11 // pred_region
        _
      $region56: #{seq2seq_forward.5} parent=11 // pred_fallthru
        _
      // Predicated region
      $region57: #{seq2seq_forward.5} parent=11 // pred_check
        %p398 = pneg %p324
      $region58: #{seq2seq_forward.5} parent=11 // pred_check_branch
        %400 = sbr.rel (%p398) target = $region60
      $region59: #{seq2seq_forward.5} parent=11 // pred_region
        _
      $region60: #{seq2seq_forward.5} parent=11 // pred_fallthru
        _
    $region12: #{seq2seq_forward.5} parent=5 // pred_fallthru
      _
    %p401 = scmp.lt.s32.totalorder %s20, 2
    // Predicated region
    $region61: #{seq2seq_forward.5} parent=5 // pred_check
      %p402 = pneg %p401
    $region62: #{seq2seq_forward.5} parent=5 // pred_check_branch
      %404 = sbr.rel (%p402) target = $region64
    $region63: #{seq2seq_forward.5} parent=5 // pred_region
      // Predicated region
      $region65: #{seq2seq_forward.5} parent=63 // pred_check
        %p405 = pneg %p40
      $region66: #{seq2seq_forward.5} parent=63 // pred_check_branch
        %407 = sbr.rel (%p405) target = $region68
      $region67: #{seq2seq_forward.5} parent=63 // pred_region
        %p408 = scmp.lt.s32.totalorder %s20, 1
        %s409 = scalar_select %p408, %s20, 1
        %s410 = smul.addr %s409, 8
        %s411 = scalar_lea.vmem %s0, %s410
      $region68: #{seq2seq_forward.5} parent=63 // pred_fallthru
        _
      // Predicated region
      $region69: #{seq2seq_forward.5} parent=63 // pred_check
        %p412 = pneg %p66
      $region70: #{seq2seq_forward.5} parent=63 // pred_check_branch
        %414 = sbr.rel (%p412) target = $region72
      $region71: #{seq2seq_forward.5} parent=63 // pred_region
        %p415 = scmp.lt.s32.totalorder %s20, 1
        %s416 = scalar_select %p415, %s20, 1
        %s417 = smul.addr %s416, 2
        %s418 = scalar_lea.vmem %s1, %s417
      $region72: #{seq2seq_forward.5} parent=63 // pred_fallthru
        _
    $region64: #{seq2seq_forward.5} parent=5 // pred_fallthru
      _
    %p419 = scmp.le.s32.totalorder 1, %s20
    %p420 = scmp.lt.s32.totalorder %s20, 3
    %p421 = pnand %p419, %p420
    %p422 = pneg %p421
    // Predicated region
    $region73: #{seq2seq_forward.5} parent=5 // pred_check
      _
    $region74: #{seq2seq_forward.5} parent=5 // pred_check_branch
      %424 = sbr.rel (%p421) target = $region76
    $region75: #{seq2seq_forward.5} parent=5 // pred_region
      %s425 = ssub.s32 %s20, 1
      %p426 = scmp.lt.s32.totalorder %s25, 1
      %s427 = scalar_select %p426, %s25, 1
      %s428 = smul.addr %s427, 8
      %s429 = scalar_lea.vmem %s0, %s428
      %p430 = pneg %p46
      %p431 = pneg %p43
      %p432 = scmp.lt.s32.totalorder %s25, 1
      %s433 = scalar_select %p432, %s25, 1
      %s434 = smul.addr %s433, 2
      %s435 = scalar_lea.vmem %s1, %s434
      %p436 = pneg %p72
      %p437 = pneg %p69
      %p438 = pneg %p93
      %p439 = pneg %p90
      %p440 = pneg %p114
      %p441 = pneg %p111
      %p442 = pneg %p135
      %p443 = pneg %p132
      %p444 = pneg %p156
      %p445 = pneg %p153
      %p446 = pneg %p177
      %p447 = pneg %p174
      %p448 = pneg %p198
      %p449 = pneg %p195
      %p450 = pneg %p219
      %p451 = pneg %p216
      %p452 = pneg %p240
      %p453 = pneg %p237
      %p454 = pneg %p261
      %p455 = pneg %p258
      %p456 = pneg %p282
      %p457 = pneg %p279
      %p458 = pneg %p303
      %p459 = pneg %p300
      %p460 = pneg %p324
      %p461 = pneg %p321
      %p462 = pneg %p350
      %p463 = pneg %p347
      %p464 = scmp.lt.s32.totalorder %s25, 1
      %s465 = scalar_select %p464, %s25, 1
      %s466 = smul.addr %s465, 8
      %s467 = scalar_lea.vmem %s14, %s466
      %p468 = scmp.lt.s32.totalorder %s25, 1
      %s469 = scalar_select %p468, %s25, 1
      %s470 = smul.addr %s469, 8
      %s471 = scalar_lea.vmem %s0, %s470
      %p472 = scmp.lt.s32.totalorder %s25, 1
      %s473 = scalar_select %p472, %s25, 1
      %s474 = smul.addr %s473, 2
      %s475 = scalar_lea.vmem %s1, %s474
      %p476 = scmp.lt.s32.totalorder %s25, 1
      %s477 = scalar_select %p476, %s25, 1
      %s478 = smul.addr %s477, 8
      %s479 = scalar_lea.vmem %s14, %s478
      %v483 = vld [vmem:[%s471] sm:$0xff]
      %v484 = vpack.c.bf16 %v483, %v483
      %v485 = vld [vmem:[%s2] sm:$0xf]
      %v486 = vld [vmem:[%s2 + $0x4] sm:$0xf]
      %v487 = vld [vmem:[%s2 + $0x8] sm:$0xf]
      %v488 = vld [vmem:[%s2 + $0xc] sm:$0xf]
      %v489 = vld [vmem:[%s3] sm:$0x1]
      %v491 = vperm.slane %v489, 0
      %v497 = vunpack.c.l.b16 %v485
      %v498 = vunpack.c.l.b16 %v486
      %v499 = vunpack.c.l.b16 %v487
      %v500 = vunpack.c.l.b16 %v488
      %v501 = vpack.c.b16 %v498, %v497
      %v502 = vpack.c.b16 %v500, %v499
      %vm505 = vcmask 261120
      %v507 = vsel %vm505, %v484, 0
      %509 = vmatpush.bf16.msra.mxu0 0
      %510 = vmatpush.bf16.msra.mxu0 0
      %511 = vmatpush.bf16.msra.mxu0 0
      %512 = vmatpush.bf16.msra.mxu0 0
      %513 = vmatpush.bf16.msra.mxu0 0
      %514 = vmatpush.bf16.msra.mxu0 0
      %515 = vmatpush.bf16.msra.mxu0 %v502
      %516 = vmatpush.bf16.msra.mxu0 %v501
      %517 = vmatmul.bf16.gmra.mxu0 %v507
      %v518 = vpop.f32.mrf.mxu0
      %v519 = vadd.f32 %v491, %v518
      %v520 = vpop.f32.mrf.mxu0
      %521 = vdwg.mxu0
      %v522 = vld [vmem:[%s475] sm:$0x3]
      %v523 = vpack.c.bf16 %v519, %v519
      %vm524 = vnez %v522
      %v526 = vunpack.c.l.b16 %v523
      %v527 = vpack.c.b16 %v526, %v526
      %528 = vrot.lane.b32.xlu0 %v527, 96
      %v529 = vpop.permute.xlu0 %528
      %vm530 = vcmask 64512
      %v532 = vsel %vm530, %v523, 0
      %v535 = vsel %vm530, %v529, 0
      %537 = vmatpush.bf16.xpose.msra.mxu0 0
      %538 = vmatpush.bf16.xpose.msra.mxu0 0
      %539 = vmatpush.bf16.xpose.msra.mxu0 0
      %540 = vmatpush.bf16.xpose.msra.mxu0 0
      %541 = vmatpush.bf16.xpose.msra.mxu0 0
      %542 = vmatpush.bf16.xpose.msra.mxu0 0
      %543 = vmatpush.bf16.xpose.msra.mxu0 0
      %544 = vmatpush.bf16.xpose.msra.mxu0 %v535
      %545 = vmatmul.bf16.gmra.mxu0 %v532
      %v546 = vpop.f32.mrf.mxu0
      %v547 = vadd.f32 0.0, %v546
      %v548 = vpop.f32.mrf.mxu0
      %549 = vdwg.mxu0
      %v550 = vmul.f32 %v547, 0.35355338
      %v551 = vsel %vm524, 16843009, 0
      %v552 = vunpack.c.0.s8 %v551
      %vm553 = vcmp.ne.s32.totalorder %v552, 0
      %v554 = vsel %vm553, %v550, -1e+10
      %v555 = vsel %vm530, %v554, -inf
      %556 = vmax.xlane.f32.xlu0 %v555
      %v557 = vpop.xlane.xlu0 %556
      %v558 = vsub.f32 %v554, %v557
      %v559 = vmul.f32 %v558, 1.442695
      %v560 = vpow.pop %v559
      %v561 = vsel %vm530, %v560, 0.0
      %562 = vadd.xlane.f32.xlu0 %v561
      %v563 = vpop.xlane.xlu0 %562
      %v564 = vrcp.pop %v563
      %v565 = vmul.f32 %v560, %v564
      %v566 = vpack.c.bf16 %v565, %v565
      %567 = vrot.lane.b32.xlu0 %v527, 64
      %v568 = vpop.permute.xlu0 %567
      %v570 = vsel %vm530, %v566, 0
      %vm572 = vcmask 1043456
      %v574 = vsel %vm572, %v568, 0
      %576 = vmatpush.bf16.msra.mxu0 0
      %577 = vmatpush.bf16.msra.mxu0 0
      %578 = vmatpush.bf16.msra.mxu0 0
      %579 = vmatpush.bf16.msra.mxu0 0
      %580 = vmatpush.bf16.msra.mxu0 0
      %581 = vmatpush.bf16.msra.mxu0 0
      %582 = vmatpush.bf16.msra.mxu0 0
      %583 = vmatpush.bf16.msra.mxu0 %v574
      %584 = vmatmul.bf16.gmra.mxu0 %v570
      %v585 = vpop.f32.mrf.mxu0
      %v586 = vadd.f32 0.0, %v585
      %v587 = vpop.f32.mrf.mxu0
      %588 = vdwg.mxu0
      %589 = vrot.lane.b32.xlu0 %v527, 120
      %v590 = vpop.permute.xlu0 %589
      %591 = vrot.lane.b32.xlu0 %v527, 88
      %v592 = vpop.permute.xlu0 %591
      %v594 = vsel %vm530, %v590, 0
      %v597 = vsel %vm530, %v592, 0
      %599 = vmatpush.bf16.xpose.msra.mxu0 0
      %600 = vmatpush.bf16.xpose.msra.mxu0 0
      %601 = vmatpush.bf16.xpose.msra.mxu0 0
      %602 = vmatpush.bf16.xpose.msra.mxu0 0
      %603 = vmatpush.bf16.xpose.msra.mxu0 0
      %604 = vmatpush.bf16.xpose.msra.mxu0 0
      %605 = vmatpush.bf16.xpose.msra.mxu0 0
      %606 = vmatpush.bf16.xpose.msra.mxu0 %v597
      %607 = vmatmul.bf16.gmra.mxu0 %v594
      %v608 = vpop.f32.mrf.mxu0
      %v609 = vadd.f32 0.0, %v608
      %v610 = vpop.f32.mrf.mxu0
      %611 = vdwg.mxu0
      %v612 = vmul.f32 %v609, 0.35355338
      %v613 = vsel %vm553, %v612, -1e+10
      %v614 = vsel %vm530, %v613, -inf
      %615 = vmax.xlane.f32.xlu0 %v614
      %v616 = vpop.xlane.xlu0 %615
      %v617 = vsub.f32 %v613, %v616
      %v618 = vmul.f32 %v617, 1.442695
      %v619 = vpow.pop %v618
      %v620 = vsel %vm530, %v619, 0.0
      %621 = vadd.xlane.f32.xlu0 %v620
      %v622 = vpop.xlane.xlu0 %621
      %v623 = vrcp.pop %v622
      %v624 = vmul.f32 %v619, %v623
      %v625 = vpack.c.bf16 %v624, %v624
      %626 = vrot.lane.b32.xlu0 %v527, 56
      %v627 = vpop.permute.xlu0 %626
      %v629 = vsel %vm530, %v625, 0
      %v632 = vsel %vm572, %v627, 0
      %634 = vmatpush.bf16.msra.mxu0 0
      %635 = vmatpush.bf16.msra.mxu0 0
      %636 = vmatpush.bf16.msra.mxu0 0
      %637 = vmatpush.bf16.msra.mxu0 0
      %638 = vmatpush.bf16.msra.mxu0 0
      %639 = vmatpush.bf16.msra.mxu0 0
      %640 = vmatpush.bf16.msra.mxu0 0
      %641 = vmatpush.bf16.msra.mxu0 %v632
      %642 = vmatmul.bf16.gmra.mxu0 %v629
      %v643 = vpop.f32.mrf.mxu0
      %v644 = vadd.f32 0.0, %v643
      %v645 = vpop.f32.mrf.mxu0
      %646 = vdwg.mxu0
      %647 = vrot.lane.b32.xlu0 %v527, 112
      %v648 = vpop.permute.xlu0 %647
      %649 = vrot.lane.b32.xlu0 %v527, 80
      %v650 = vpop.permute.xlu0 %649
      %v652 = vsel %vm530, %v648, 0
      %v655 = vsel %vm530, %v650, 0
      %657 = vmatpush.bf16.xpose.msra.mxu0 0
      %658 = vmatpush.bf16.xpose.msra.mxu0 0
      %659 = vmatpush.bf16.xpose.msra.mxu0 0
      %660 = vmatpush.bf16.xpose.msra.mxu0 0
      %661 = vmatpush.bf16.xpose.msra.mxu0 0
      %662 = vmatpush.bf16.xpose.msra.mxu0 0
      %663 = vmatpush.bf16.xpose.msra.mxu0 0
      %664 = vmatpush.bf16.xpose.msra.mxu0 %v655
      %665 = vmatmul.bf16.gmra.mxu0 %v652
      %v666 = vpop.f32.mrf.mxu0
      %v667 = vadd.f32 0.0, %v666
      %v668 = vpop.f32.mrf.mxu0
      %669 = vdwg.mxu0
      %v670 = vmul.f32 %v667, 0.35355338
      %v671 = vsel %vm553, %v670, -1e+10
      %v672 = vsel %vm530, %v671, -inf
      %673 = vmax.xlane.f32.xlu0 %v672
      %v674 = vpop.xlane.xlu0 %673
      %v675 = vsub.f32 %v671, %v674
      %v676 = vmul.f32 %v675, 1.442695
      %v677 = vpow.pop %v676
      %v678 = vsel %vm530, %v677, 0.0
      %679 = vadd.xlane.f32.xlu0 %v678
      %v680 = vpop.xlane.xlu0 %679
      %v681 = vrcp.pop %v680
      %v682 = vmul.f32 %v677, %v681
      %v683 = vpack.c.bf16 %v682, %v682
      %684 = vrot.lane.b32.xlu0 %v527, 48
      %v685 = vpop.permute.xlu0 %684
      %v687 = vsel %vm530, %v683, 0
      %v690 = vsel %vm572, %v685, 0
      %692 = vmatpush.bf16.msra.mxu0 0
      %693 = vmatpush.bf16.msra.mxu0 0
      %694 = vmatpush.bf16.msra.mxu0 0
      %695 = vmatpush.bf16.msra.mxu0 0
      %696 = vmatpush.bf16.msra.mxu0 0
      %697 = vmatpush.bf16.msra.mxu0 0
      %698 = vmatpush.bf16.msra.mxu0 0
      %699 = vmatpush.bf16.msra.mxu0 %v690
      %700 = vmatmul.bf16.gmra.mxu0 %v687
      %v701 = vpop.f32.mrf.mxu0
      %v702 = vadd.f32 0.0, %v701
      %v703 = vpop.f32.mrf.mxu0
      %704 = vdwg.mxu0
      %705 = vrot.lane.b32.xlu0 %v527, 104
      %v706 = vpop.permute.xlu0 %705
      %707 = vrot.lane.b32.xlu0 %v527, 72
      %v708 = vpop.permute.xlu0 %707
      %v710 = vsel %vm530, %v706, 0
      %v713 = vsel %vm530, %v708, 0
      %715 = vmatpush.bf16.xpose.msra.mxu0 0
      %716 = vmatpush.bf16.xpose.msra.mxu0 0
      %717 = vmatpush.bf16.xpose.msra.mxu0 0
      %718 = vmatpush.bf16.xpose.msra.mxu0 0
      %719 = vmatpush.bf16.xpose.msra.mxu0 0
      %720 = vmatpush.bf16.xpose.msra.mxu0 0
      %721 = vmatpush.bf16.xpose.msra.mxu0 0
      %722 = vmatpush.bf16.xpose.msra.mxu0 %v713
      %723 = vmatmul.bf16.gmra.mxu0 %v710
      %v724 = vpop.f32.mrf.mxu0
      %v725 = vadd.f32 0.0, %v724
      %v726 = vpop.f32.mrf.mxu0
      %727 = vdwg.mxu0
      %v728 = vmul.f32 %v725, 0.35355338
      %v729 = vsel %vm553, %v728, -1e+10
      %v730 = vsel %vm530, %v729, -inf
      %731 = vmax.xlane.f32.xlu0 %v730
      %v732 = vpop.xlane.xlu0 %731
      %v733 = vsub.f32 %v729, %v732
      %v734 = vmul.f32 %v733, 1.442695
      %v735 = vpow.pop %v734
      %v736 = vsel %vm530, %v735, 0.0
      %737 = vadd.xlane.f32.xlu0 %v736
      %v738 = vpop.xlane.xlu0 %737
      %v739 = vrcp.pop %v738
      %v740 = vmul.f32 %v735, %v739
      %v741 = vpack.c.bf16 %v740, %v740
      %742 = vrot.lane.b32.xlu0 %v527, 40
      %v743 = vpop.permute.xlu0 %742
      %v745 = vsel %vm530, %v741, 0
      %v748 = vsel %vm572, %v743, 0
      %750 = vmatpush.bf16.msra.mxu0 0
      %751 = vmatpush.bf16.msra.mxu0 0
      %752 = vmatpush.bf16.msra.mxu0 0
      %753 = vmatpush.bf16.msra.mxu0 0
      %754 = vmatpush.bf16.msra.mxu0 0
      %755 = vmatpush.bf16.msra.mxu0 0
      %756 = vmatpush.bf16.msra.mxu0 0
      %757 = vmatpush.bf16.msra.mxu0 %v748
      %758 = vmatmul.bf16.gmra.mxu0 %v745
      %v759 = vpop.f32.mrf.mxu0
      %v760 = vadd.f32 0.0, %v759
      %v761 = vpop.f32.mrf.mxu0
      %762 = vdwg.mxu0
      %764 = vrot.lane.b32.xlu0 %v644, 8
      %v765 = vpop.permute.xlu0 %764
      %768 = vrot.lane.b32.xlu0 %v702, 16
      %v769 = vpop.permute.xlu0 %768
      %772 = vrot.lane.b32.xlu0 %v760, 24
      %v773 = vpop.permute.xlu0 %772
      %v775 = vsel %vm530, %v586, %v765
      %vm776 = vcmask 130048
      %v777 = vsel %vm776, %v775, %v769
      %vm778 = vcmask 195584
      %v779 = vsel %vm778, %v777, %v773
      %v780 = vpack.c.bf16 %v779, %v779
      %v781 = vld [vmem:[%s4] sm:$0xf]
      %v782 = vld [vmem:[%s4 + $0x4] sm:$0xf]
      %v783 = vld [vmem:[%s4 + $0x8] sm:$0xf]
      %v784 = vld [vmem:[%s4 + $0xc] sm:$0xf]
      %v785 = vld [vmem:[%s5] sm:$0x1]
      %v787 = vperm.slane %v785, 0
      %v793 = vunpack.c.l.b16 %v781
      %v794 = vunpack.c.l.b16 %v782
      %v795 = vunpack.c.l.b16 %v783
      %v796 = vunpack.c.l.b16 %v784
      %v797 = vpack.c.b16 %v794, %v793
      %v798 = vpack.c.b16 %v796, %v795
      %v802 = vsel %vm505, %v780, 0
      %804 = vmatpush.bf16.msra.mxu0 0
      %805 = vmatpush.bf16.msra.mxu0 0
      %806 = vmatpush.bf16.msra.mxu0 0
      %807 = vmatpush.bf16.msra.mxu0 0
      %808 = vmatpush.bf16.msra.mxu0 0
      %809 = vmatpush.bf16.msra.mxu0 0
      %810 = vmatpush.bf16.msra.mxu0 %v798
      %811 = vmatpush.bf16.msra.mxu0 %v797
      %812 = vmatmul.bf16.gmra.mxu0 %v802
      %v813 = vpop.f32.mrf.mxu0
      %v814 = vadd.f32 %v787, %v813
      %v815 = vpop.f32.mrf.mxu0
      %816 = vdwg.mxu0
      %v817 = vld [vmem:[%s6] sm:$0x1]
      %v818 = vld [vmem:[%s7] sm:$0x1]
      %v819 = vadd.f32 %v483, %v814
      %v820 = vsel %vm505, %v819, 0.0
      %821 = vadd.xlane.f32.xlu0 %v820
      %v822 = vpop.xlane.xlu0 %821
      %v823 = vrcp.pop 32.0
      %v824 = vmul.f32 32.0, %v823
      %v825 = vsub.f32 1.0, %v824
      %v826 = vmul.f32 %v823, %v825
      %v827 = vadd.f32 %v823, %v826
      %vm828 = vweird.f32 %v823
      %v829 = vsel %vm828, %v823, %v827
      %v830 = vmul.f32 %v822, %v829
      %v831 = vsub.f32 %v819, %v830
      %v832 = vmul.f32 %v831, %v831
      %v833 = vsel %vm505, %v832, 0.0
      %834 = vadd.xlane.f32.xlu0 %v833
      %v835 = vpop.xlane.xlu0 %834
      %v836 = vmul.f32 %v835, %v829
      %v837 = vadd.f32 %v836, 1e-05
      %v838 = vrsqrt.pop %v837
      %v839 = vmul.f32 %v838, %v837
      %v840 = vmul.f32 %v839, %v838
      %v841 = vmul.f32 0.5, %v840
      %v842 = vsub.f32 1.5, %v841
      %v843 = vmul.f32 %v838, %v842
      %vm844 = vweird.f32 %v837
      %vm845 = vweird.f32 %v838
      %vm846 = vmor %vm844, %vm845
      %v847 = vsel %vm846, %v838, %v843
      %v848 = vmul.f32 %v831, %v847
      %v850 = vperm.slane %v817, 0
      %v852 = vmul.f32 %v848, %v850
      %v854 = vperm.slane %v818, 0
      %v856 = vadd.f32 %v852, %v854
      %v857 = vpack.c.bf16 %v856, %v856
      %v858 = vld [vmem:[%s8] sm:$0xf]
      %v859 = vld [vmem:[%s8 + $0x4] sm:$0xf]
      %v860 = vld [vmem:[%s8 + $0x8] sm:$0xf]
      %v861 = vld [vmem:[%s8 + $0xc] sm:$0xf]
      %v862 = vld [vmem:[%s9] sm:$0x1]
      %v864 = vperm.slane %v862, 0
      %v870 = vunpack.c.l.b16 %v858
      %v871 = vunpack.c.l.b16 %v859
      %v872 = vunpack.c.l.b16 %v860
      %v873 = vunpack.c.l.b16 %v861
      %v874 = vpack.c.b16 %v871, %v870
      %v875 = vpack.c.b16 %v873, %v872
      %v879 = vsel %vm505, %v857, 0
      %881 = vmatpush.bf16.msra.mxu0 0
      %882 = vmatpush.bf16.msra.mxu0 0
      %883 = vmatpush.bf16.msra.mxu0 0
      %884 = vmatpush.bf16.msra.mxu0 0
      %885 = vmatpush.bf16.msra.mxu0 0
      %886 = vmatpush.bf16.msra.mxu0 0
      %887 = vmatpush.bf16.msra.mxu0 %v875
      %888 = vmatpush.bf16.msra.mxu0 %v874
      %889 = vmatmul.bf16.gmra.mxu0 %v879
      %v890 = vpop.f32.mrf.mxu0
      %v891 = vadd.f32 %v864, %v890
      %v892 = vpop.f32.mrf.mxu0
      %893 = vdwg.mxu0
      %v894 = vmax.f32 %v891, 0.0
      %v895 = vpack.c.bf16 %v894, %v894
      %v896 = vld [vmem:[%s10] sm:$0xf]
      %v897 = vld [vmem:[%s10 + $0x4] sm:$0xf]
      %v898 = vld [vmem:[%s10 + $0x8] sm:$0xf]
      %v899 = vld [vmem:[%s10 + $0xc] sm:$0xf]
      %v900 = vld [vmem:[%s10 + $0x10] sm:$0xf]
      %v901 = vld [vmem:[%s10 + $0x14] sm:$0xf]
      %v902 = vld [vmem:[%s10 + $0x18] sm:$0xf]
      %v903 = vld [vmem:[%s10 + $0x1c] sm:$0xf]
      %v904 = vld [vmem:[%s11] sm:$0x1]
      %v906 = vperm.slane %v904, 0
      %v916 = vunpack.c.l.b16 %v896
      %v917 = vunpack.c.l.b16 %v897
      %v918 = vunpack.c.l.b16 %v898
      %v919 = vunpack.c.l.b16 %v899
      %v920 = vunpack.c.l.b16 %v900
      %v921 = vunpack.c.l.b16 %v901
      %v922 = vunpack.c.l.b16 %v902
      %v923 = vunpack.c.l.b16 %v903
      %v924 = vpack.c.b16 %v917, %v916
      %v925 = vpack.c.b16 %v919, %v918
      %v926 = vpack.c.b16 %v921, %v920
      %v927 = vpack.c.b16 %v923, %v922
      %vm932 = vcmask 523264
      %v934 = vsel %vm932, %v895, 0
      %936 = vmatpush.bf16.msra.mxu0 0
      %937 = vmatpush.bf16.msra.mxu0 0
      %938 = vmatpush.bf16.msra.mxu0 0
      %939 = vmatpush.bf16.msra.mxu0 0
      %940 = vmatpush.bf16.msra.mxu0 %v927
      %941 = vmatpush.bf16.msra.mxu0 %v926
      %942 = vmatpush.bf16.msra.mxu0 %v925
      %943 = vmatpush.bf16.msra.mxu0 %v924
      %944 = vmatmul.bf16.gmra.mxu0 %v934
      %v945 = vpop.f32.mrf.mxu0
      %v946 = vadd.f32 %v906, %v945
      %v947 = vpop.f32.mrf.mxu0
      %948 = vdwg.mxu0
      %v949 = vld [vmem:[%s12] sm:$0x1]
      %v950 = vld [vmem:[%s13] sm:$0x1]
      %v951 = vadd.f32 %v856, %v946
      %v952 = vsel %vm505, %v951, 0.0
      %953 = vadd.xlane.f32.xlu0 %v952
      %v954 = vpop.xlane.xlu0 %953
      %v955 = vmul.f32 %v954, %v829
      %v956 = vsub.f32 %v951, %v955
      %v957 = vmul.f32 %v956, %v956
      %v958 = vsel %vm505, %v957, 0.0
      %959 = vadd.xlane.f32.xlu0 %v958
      %v960 = vpop.xlane.xlu0 %959
      %v961 = vmul.f32 %v960, %v829
      %v962 = vadd.f32 %v961, 1e-05
      %v963 = vrsqrt.pop %v962
      %v964 = vmul.f32 %v963, %v962
      %v965 = vmul.f32 %v964, %v963
      %v966 = vmul.f32 0.5, %v965
      %v967 = vsub.f32 1.5, %v966
      %v968 = vmul.f32 %v963, %v967
      %vm969 = vweird.f32 %v962
      %vm970 = vweird.f32 %v963
      %vm971 = vmor %vm969, %vm970
      %v972 = vsel %vm971, %v963, %v968
      %v973 = vmul.f32 %v956, %v972
      %v975 = vperm.slane %v949, 0
      %v977 = vmul.f32 %v973, %v975
      %v979 = vperm.slane %v950, 0
      %v981 = vadd.f32 %v977, %v979
      %982 = vst.msk [vmem:[%s479] sm:$0xff] %vm505, %v981
      %p983 = scmp.lt.s32.totalorder %s25, 1
      %s984 = scalar_select %p983, %s25, 1
      %s985 = smul.addr %s984, 8
      %s986 = scalar_lea.vmem %s14, %s985
      // Predicated region
      $region77: #{seq2seq_forward.5} parent=75 // pred_check
        %p987 = pneg %p347
      $region78: #{seq2seq_forward.5} parent=75 // pred_check_branch
        %989 = sbr.rel (%p987) target = $region80
      $region79: #{seq2seq_forward.5} parent=75 // pred_region
        _
      $region80: #{seq2seq_forward.5} parent=75 // pred_fallthru
        _
    $region76: #{seq2seq_forward.5} parent=5 // pred_fallthru
      _
    %p990 = scmp.le.s32.totalorder 2, %s20
    // Predicated region
    $region81: #{seq2seq_forward.5} parent=5 // pred_check
      %p991 = pneg %p990
    $region82: #{seq2seq_forward.5} parent=5 // pred_check_branch
      %993 = sbr.rel (%p991) target = $region84
    $region83: #{seq2seq_forward.5} parent=5 // pred_region
      %s994 = ssub.s32 %s20, 2
      // Predicated region
      $region85: #{seq2seq_forward.5} parent=83 // pred_check
        %p995 = pneg %p353
      $region86: #{seq2seq_forward.5} parent=83 // pred_check_branch
        %997 = sbr.rel (%p995) target = $region88
      $region87: #{seq2seq_forward.5} parent=83 // pred_region
        %p998 = scmp.lt.s32.totalorder %s26, 1
        %s999 = scalar_select %p998, %s26, 1
        %s1000 = smul.addr %s999, 8
        %s1001 = scalar_lea.vmem %s14, %s1000
      $region88: #{seq2seq_forward.5} parent=83 // pred_fallthru
        _
    $region84: #{seq2seq_forward.5} parent=5 // pred_fallthru
      _
  $region6: #{seq2seq_forward.5} parent=0 // loop_footer
    %s24 = sadd.s32 1, %s20
  $region7: #{seq2seq_forward.5} parent=0 // loop_footer_branch
    %19 = sbr.rel target = $region3
  $region8: #{seq2seq_forward.5} parent=0 // loop_exit
    _

// kernel: seq2seq_forward.7
$region0: #{seq2seq_forward.7}
  #allocation0 [shape = 'u32[]', space=smem, size = 0x4, offset = 0x4, fixed_abs, tag = 'smem constant byte address 0x4 - core index']
  #allocation1 [shape = 'u32[72,128]{1,0:T(1,128)}', space=vmem, size = 0x9000, scoped, tag = 'internal scratch']
  %s0 = inlined_call_operand.vmem [shape: f32[2,8,32], index: 0, kind: input, shape index: {}]
  %s1 = inlined_call_operand.vmem [shape: f32[2,8,32], index: 1, kind: input, shape index: {}]
  %s2 = inlined_call_operand.vmem [shape: s8[2,8,8], index: 2, kind: input, shape index: {}]
  %s3 = inlined_call_operand.vmem [shape: s8[2,8,8], index: 3, kind: input, shape index: {}]
  %s4 = inlined_call_operand.vmem [shape: bf16[32,96], index: 4, kind: input, shape index: {}]
  %s5 = inlined_call_operand.vmem [shape: f32[1,96], index: 5, kind: input, shape index: {}]
  %s6 = inlined_call_operand.vmem [shape: bf16[32,32], index: 6, kind: input, shape index: {}]
  %s7 = inlined_call_operand.vmem [shape: f32[1,32], index: 7, kind: input, shape index: {}]
  %s8 = inlined_call_operand.vmem [shape: f32[1,32], index: 8, kind: input, shape index: {}]
  %s9 = inlined_call_operand.vmem [shape: f32[1,32], index: 9, kind: input, shape index: {}]
  %s10 = inlined_call_operand.vmem [shape: bf16[32,96], index: 10, kind: input, shape index: {}]
  %s11 = inlined_call_operand.vmem [shape: f32[1,96], index: 11, kind: input, shape index: {}]
  %s12 = inlined_call_operand.vmem [shape: bf16[32,32], index: 12, kind: input, shape index: {}]
  %s13 = inlined_call_operand.vmem [shape: f32[1,32], index: 13, kind: input, shape index: {}]
  %s14 = inlined_call_operand.vmem [shape: f32[1,32], index: 14, kind: input, shape index: {}]
  %s15 = inlined_call_operand.vmem [shape: f32[1,32], index: 15, kind: input, shape index: {}]
  %s16 = inlined_call_operand.vmem [shape: bf16[32,64], index: 16, kind: input, shape index: {}]
  %s17 = inlined_call_operand.vmem [shape: f32[1,64], index: 17, kind: input, shape index: {}]
  %s18 = inlined_call_operand.vmem [shape: bf16[64,32], index: 18, kind: input, shape index: {}]
  %s19 = inlined_call_operand.vmem [shape: f32[1,32], index: 19, kind: input, shape index: {}]
  %s20 = inlined_call_operand.vmem [shape: f32[1,32], index: 20, kind: input, shape index: {}]
  %s21 = inlined_call_operand.vmem [shape: f32[1,32], index: 21, kind: input, shape index: {}]
  %s22 = inlined_call_operand.vmem [shape: f32[2,8,32], index: 22, kind: output, shape index: {}]
  %s23 = sld [smem:[#allocation0]]
  $region121: #{seq2seq_forward.7} parent=0
    _
  %s25 = ssub.s32 1, %s23
  %s26 = scalar_select 0, %s25, %s23
  loop: start=0, step=1, limit=4
  $region2: #{seq2seq_forward.7} parent=0 // loop_pre_header
    _
  $region3: #{seq2seq_forward.7} parent=0 // loop_header
    %s28 = sphi 0, %s32
    %p29 = scmp.ge.s32.totalorder %s28, 4
    %s38 = sphi 0, %s40
    %s41 = sphi 0, %s38
    %s42 = sphi 0, %s41
    %s58 = sphi 0, %s42
    %s64 = sphi 0, %s66
    %s67 = sphi 0, %s64
    %s68 = sphi 0, %s67
    %s84 = sphi 0, %s68
    %s90 = sphi 0, %s92
    %s93 = sphi 0, %s90
    %s94 = sphi 0, %s93
    %s110 = sphi 0, %s94
    %s116 = sphi 0, %s118
    %s119 = sphi 0, %s116
    %s120 = sphi 0, %s119
    %s136 = sphi 0, %s120
    %s140 = sphi 0, %s140
    %s142 = sphi 0, %s140
    %s143 = sphi 0, %s142
    %s157 = sphi 0, %s143
    %s161 = sphi 0, %s161
    %s163 = sphi 0, %s161
    %s164 = sphi 0, %s163
    %s178 = sphi 0, %s164
    %s182 = sphi 0, %s182
    %s184 = sphi 0, %s182
    %s185 = sphi 0, %s184
    %s199 = sphi 0, %s185
    %s203 = sphi 0, %s203
    %s205 = sphi 0, %s203
    %s206 = sphi 0, %s205
    %s220 = sphi 0, %s206
    %s224 = sphi 0, %s224
    %s226 = sphi 0, %s224
    %s227 = sphi 0, %s226
    %s241 = sphi 0, %s227
    %s245 = sphi 0, %s245
    %s247 = sphi 0, %s245
    %s248 = sphi 0, %s247
    %s262 = sphi 0, %s248
    %s266 = sphi 0, %s266
    %s268 = sphi 0, %s266
    %s269 = sphi 0, %s268
    %s283 = sphi 0, %s269
    %s287 = sphi 0, %s287
    %s289 = sphi 0, %s287
    %s290 = sphi 0, %s289
    %s304 = sphi 0, %s290
    %s308 = sphi 0, %s308
    %s310 = sphi 0, %s308
    %s311 = sphi 0, %s310
    %s325 = sphi 0, %s311
    %s329 = sphi 0, %s329
    %s331 = sphi 0, %s329
    %s332 = sphi 0, %s331
    %s346 = sphi 0, %s332
    %s350 = sphi 0, %s350
    %s352 = sphi 0, %s350
    %s353 = sphi 0, %s352
    %s367 = sphi 0, %s353
    %s371 = sphi 0, %s371
    %s373 = sphi 0, %s371
    %s374 = sphi 0, %s373
    %s388 = sphi 0, %s374
    %s392 = sphi 0, %s392
    %s394 = sphi 0, %s392
    %s395 = sphi 0, %s394
    %s409 = sphi 0, %s395
    %s413 = sphi 0, %s413
    %s415 = sphi 0, %s413
    %s416 = sphi 0, %s415
    %s430 = sphi 0, %s416
    %s434 = sphi 0, %s434
    %s436 = sphi 0, %s434
    %s437 = sphi 0, %s436
    %s451 = sphi 0, %s437
    %s455 = sphi 0, %s455
    %s457 = sphi 0, %s455
    %s458 = sphi 0, %s457
    %s472 = sphi 0, %s458
    %s476 = sphi 0, %s476
    %s478 = sphi 0, %s476
    %s479 = sphi 0, %s478
    %s493 = sphi 0, %s479
    %s497 = sphi 0, %s497
    %s499 = sphi 0, %s497
    %s500 = sphi 0, %s499
    %s514 = sphi 0, %s500
    %s520 = sphi 0, %s522
    %s523 = sphi 0, %s520
    %s524 = sphi 0, %s523
    %s540 = sphi 0, %s524
  $region4: #{seq2seq_forward.7} parent=0 // loop_header_branch
    %31 = sbr.rel (%p29) target = $region8
  $region5: #{seq2seq_forward.7} parent=0 // loop_body
    %s33 = ssub.s32 %s28, 1
    %s34 = ssub.s32 %s28, 2
    %s35 = sadd.s32 %s28, 1
    %s36 = ssub.s32 %s28, %s35
    %p37 = scmp.eq.s32.totalorder %s36, 0
    %s39 = sadd.s32 %s38, 1
    %s40 = scalar_select %p37, %s38, %s39
    %p43 = pneg %p37
    %p44 = scmp.eq.s32.totalorder %s28, 1
    %p45 = por %p43, %p44
    %p46 = scmp.ne.s32.totalorder %s38, %s41
    %p47 = scmp.eq.s32.totalorder %s28, 0
    %p48 = por %p46, %p47
    %p49 = scmp.ne.s32.totalorder %s38, %s41
    %p50 = scmp.eq.s32.totalorder %s33, 1
    %p51 = por %p49, %p50
    %p52 = scmp.ne.s32.totalorder %s41, %s42
    %p53 = scmp.eq.s32.totalorder %s33, 0
    %p54 = por %p52, %p53
    %p55 = scmp.ne.s32.totalorder %s41, %s42
    %p56 = scmp.eq.s32.totalorder %s34, 1
    %p57 = por %p55, %p56
    %p59 = scmp.ne.s32.totalorder %s42, %s58
    %p60 = scmp.eq.s32.totalorder %s34, 0
    %p61 = por %p59, %p60
    %s62 = ssub.s32 %s28, %s35
    %p63 = scmp.eq.s32.totalorder %s62, 0
    %s65 = sadd.s32 %s64, 1
    %s66 = scalar_select %p63, %s64, %s65
    %p69 = pneg %p63
    %p70 = scmp.eq.s32.totalorder %s28, 1
    %p71 = por %p69, %p70
    %p72 = scmp.ne.s32.totalorder %s64, %s67
    %p73 = scmp.eq.s32.totalorder %s28, 0
    %p74 = por %p72, %p73
    %p75 = scmp.ne.s32.totalorder %s64, %s67
    %p76 = scmp.eq.s32.totalorder %s33, 1
    %p77 = por %p75, %p76
    %p78 = scmp.ne.s32.totalorder %s67, %s68
    %p79 = scmp.eq.s32.totalorder %s33, 0
    %p80 = por %p78, %p79
    %p81 = scmp.ne.s32.totalorder %s67, %s68
    %p82 = scmp.eq.s32.totalorder %s34, 1
    %p83 = por %p81, %p82
    %p85 = scmp.ne.s32.totalorder %s68, %s84
    %p86 = scmp.eq.s32.totalorder %s34, 0
    %p87 = por %p85, %p86
    %s88 = ssub.s32 %s28, %s35
    %p89 = scmp.eq.s32.totalorder %s88, 0
    %s91 = sadd.s32 %s90, 1
    %s92 = scalar_select %p89, %s90, %s91
    %p95 = pneg %p89
    %p96 = scmp.eq.s32.totalorder %s28, 1
    %p97 = por %p95, %p96
    %p98 = scmp.ne.s32.totalorder %s90, %s93
    %p99 = scmp.eq.s32.totalorder %s28, 0
    %p100 = por %p98, %p99
    %p101 = scmp.ne.s32.totalorder %s90, %s93
    %p102 = scmp.eq.s32.totalorder %s33, 1
    %p103 = por %p101, %p102
    %p104 = scmp.ne.s32.totalorder %s93, %s94
    %p105 = scmp.eq.s32.totalorder %s33, 0
    %p106 = por %p104, %p105
    %p107 = scmp.ne.s32.totalorder %s93, %s94
    %p108 = scmp.eq.s32.totalorder %s34, 1
    %p109 = por %p107, %p108
    %p111 = scmp.ne.s32.totalorder %s94, %s110
    %p112 = scmp.eq.s32.totalorder %s34, 0
    %p113 = por %p111, %p112
    %s114 = ssub.s32 %s28, %s35
    %p115 = scmp.eq.s32.totalorder %s114, 0
    %s117 = sadd.s32 %s116, 1
    %s118 = scalar_select %p115, %s116, %s117
    %p121 = pneg %p115
    %p122 = scmp.eq.s32.totalorder %s28, 1
    %p123 = por %p121, %p122
    %p124 = scmp.ne.s32.totalorder %s116, %s119
    %p125 = scmp.eq.s32.totalorder %s28, 0
    %p126 = por %p124, %p125
    %p127 = scmp.ne.s32.totalorder %s116, %s119
    %p128 = scmp.eq.s32.totalorder %s33, 1
    %p129 = por %p127, %p128
    %p130 = scmp.ne.s32.totalorder %s119, %s120
    %p131 = scmp.eq.s32.totalorder %s33, 0
    %p132 = por %p130, %p131
    %p133 = scmp.ne.s32.totalorder %s119, %s120
    %p134 = scmp.eq.s32.totalorder %s34, 1
    %p135 = por %p133, %p134
    %p137 = scmp.ne.s32.totalorder %s120, %s136
    %p138 = scmp.eq.s32.totalorder %s34, 0
    %p139 = por %p137, %p138
    %s141 = sadd.s32 %s140, 1
    %p144 = scmp.eq.s32.totalorder %s28, 1
    %p145 = scmp.ne.s32.totalorder %s140, %s142
    %p146 = scmp.eq.s32.totalorder %s28, 0
    %p147 = por %p145, %p146
    %p148 = scmp.ne.s32.totalorder %s140, %s142
    %p149 = scmp.eq.s32.totalorder %s33, 1
    %p150 = por %p148, %p149
    %p151 = scmp.ne.s32.totalorder %s142, %s143
    %p152 = scmp.eq.s32.totalorder %s33, 0
    %p153 = por %p151, %p152
    %p154 = scmp.ne.s32.totalorder %s142, %s143
    %p155 = scmp.eq.s32.totalorder %s34, 1
    %p156 = por %p154, %p155
    %p158 = scmp.ne.s32.totalorder %s143, %s157
    %p159 = scmp.eq.s32.totalorder %s34, 0
    %p160 = por %p158, %p159
    %s162 = sadd.s32 %s161, 1
    %p165 = scmp.eq.s32.totalorder %s28, 1
    %p166 = scmp.ne.s32.totalorder %s161, %s163
    %p167 = scmp.eq.s32.totalorder %s28, 0
    %p168 = por %p166, %p167
    %p169 = scmp.ne.s32.totalorder %s161, %s163
    %p170 = scmp.eq.s32.totalorder %s33, 1
    %p171 = por %p169, %p170
    %p172 = scmp.ne.s32.totalorder %s163, %s164
    %p173 = scmp.eq.s32.totalorder %s33, 0
    %p174 = por %p172, %p173
    %p175 = scmp.ne.s32.totalorder %s163, %s164
    %p176 = scmp.eq.s32.totalorder %s34, 1
    %p177 = por %p175, %p176
    %p179 = scmp.ne.s32.totalorder %s164, %s178
    %p180 = scmp.eq.s32.totalorder %s34, 0
    %p181 = por %p179, %p180
    %s183 = sadd.s32 %s182, 1
    %p186 = scmp.eq.s32.totalorder %s28, 1
    %p187 = scmp.ne.s32.totalorder %s182, %s184
    %p188 = scmp.eq.s32.totalorder %s28, 0
    %p189 = por %p187, %p188
    %p190 = scmp.ne.s32.totalorder %s182, %s184
    %p191 = scmp.eq.s32.totalorder %s33, 1
    %p192 = por %p190, %p191
    %p193 = scmp.ne.s32.totalorder %s184, %s185
    %p194 = scmp.eq.s32.totalorder %s33, 0
    %p195 = por %p193, %p194
    %p196 = scmp.ne.s32.totalorder %s184, %s185
    %p197 = scmp.eq.s32.totalorder %s34, 1
    %p198 = por %p196, %p197
    %p200 = scmp.ne.s32.totalorder %s185, %s199
    %p201 = scmp.eq.s32.totalorder %s34, 0
    %p202 = por %p200, %p201
    %s204 = sadd.s32 %s203, 1
    %p207 = scmp.eq.s32.totalorder %s28, 1
    %p208 = scmp.ne.s32.totalorder %s203, %s205
    %p209 = scmp.eq.s32.totalorder %s28, 0
    %p210 = por %p208, %p209
    %p211 = scmp.ne.s32.totalorder %s203, %s205
    %p212 = scmp.eq.s32.totalorder %s33, 1
    %p213 = por %p211, %p212
    %p214 = scmp.ne.s32.totalorder %s205, %s206
    %p215 = scmp.eq.s32.totalorder %s33, 0
    %p216 = por %p214, %p215
    %p217 = scmp.ne.s32.totalorder %s205, %s206
    %p218 = scmp.eq.s32.totalorder %s34, 1
    %p219 = por %p217, %p218
    %p221 = scmp.ne.s32.totalorder %s206, %s220
    %p222 = scmp.eq.s32.totalorder %s34, 0
    %p223 = por %p221, %p222
    %s225 = sadd.s32 %s224, 1
    %p228 = scmp.eq.s32.totalorder %s28, 1
    %p229 = scmp.ne.s32.totalorder %s224, %s226
    %p230 = scmp.eq.s32.totalorder %s28, 0
    %p231 = por %p229, %p230
    %p232 = scmp.ne.s32.totalorder %s224, %s226
    %p233 = scmp.eq.s32.totalorder %s33, 1
    %p234 = por %p232, %p233
    %p235 = scmp.ne.s32.totalorder %s226, %s227
    %p236 = scmp.eq.s32.totalorder %s33, 0
    %p237 = por %p235, %p236
    %p238 = scmp.ne.s32.totalorder %s226, %s227
    %p239 = scmp.eq.s32.totalorder %s34, 1
    %p240 = por %p238, %p239
    %p242 = scmp.ne.s32.totalorder %s227, %s241
    %p243 = scmp.eq.s32.totalorder %s34, 0
    %p244 = por %p242, %p243
    %s246 = sadd.s32 %s245, 1
    %p249 = scmp.eq.s32.totalorder %s28, 1
    %p250 = scmp.ne.s32.totalorder %s245, %s247
    %p251 = scmp.eq.s32.totalorder %s28, 0
    %p252 = por %p250, %p251
    %p253 = scmp.ne.s32.totalorder %s245, %s247
    %p254 = scmp.eq.s32.totalorder %s33, 1
    %p255 = por %p253, %p254
    %p256 = scmp.ne.s32.totalorder %s247, %s248
    %p257 = scmp.eq.s32.totalorder %s33, 0
    %p258 = por %p256, %p257
    %p259 = scmp.ne.s32.totalorder %s247, %s248
    %p260 = scmp.eq.s32.totalorder %s34, 1
    %p261 = por %p259, %p260
    %p263 = scmp.ne.s32.totalorder %s248, %s262
    %p264 = scmp.eq.s32.totalorder %s34, 0
    %p265 = por %p263, %p264
    %s267 = sadd.s32 %s266, 1
    %p270 = scmp.eq.s32.totalorder %s28, 1
    %p271 = scmp.ne.s32.totalorder %s266, %s268
    %p272 = scmp.eq.s32.totalorder %s28, 0
    %p273 = por %p271, %p272
    %p274 = scmp.ne.s32.totalorder %s266, %s268
    %p275 = scmp.eq.s32.totalorder %s33, 1
    %p276 = por %p274, %p275
    %p277 = scmp.ne.s32.totalorder %s268, %s269
    %p278 = scmp.eq.s32.totalorder %s33, 0
    %p279 = por %p277, %p278
    %p280 = scmp.ne.s32.totalorder %s268, %s269
    %p281 = scmp.eq.s32.totalorder %s34, 1
    %p282 = por %p280, %p281
    %p284 = scmp.ne.s32.totalorder %s269, %s283
    %p285 = scmp.eq.s32.totalorder %s34, 0
    %p286 = por %p284, %p285
    %s288 = sadd.s32 %s287, 1
    %p291 = scmp.eq.s32.totalorder %s28, 1
    %p292 = scmp.ne.s32.totalorder %s287, %s289
    %p293 = scmp.eq.s32.totalorder %s28, 0
    %p294 = por %p292, %p293
    %p295 = scmp.ne.s32.totalorder %s287, %s289
    %p296 = scmp.eq.s32.totalorder %s33, 1
    %p297 = por %p295, %p296
    %p298 = scmp.ne.s32.totalorder %s289, %s290
    %p299 = scmp.eq.s32.totalorder %s33, 0
    %p300 = por %p298, %p299
    %p301 = scmp.ne.s32.totalorder %s289, %s290
    %p302 = scmp.eq.s32.totalorder %s34, 1
    %p303 = por %p301, %p302
    %p305 = scmp.ne.s32.totalorder %s290, %s304
    %p306 = scmp.eq.s32.totalorder %s34, 0
    %p307 = por %p305, %p306
    %s309 = sadd.s32 %s308, 1
    %p312 = scmp.eq.s32.totalorder %s28, 1
    %p313 = scmp.ne.s32.totalorder %s308, %s310
    %p314 = scmp.eq.s32.totalorder %s28, 0
    %p315 = por %p313, %p314
    %p316 = scmp.ne.s32.totalorder %s308, %s310
    %p317 = scmp.eq.s32.totalorder %s33, 1
    %p318 = por %p316, %p317
    %p319 = scmp.ne.s32.totalorder %s310, %s311
    %p320 = scmp.eq.s32.totalorder %s33, 0
    %p321 = por %p319, %p320
    %p322 = scmp.ne.s32.totalorder %s310, %s311
    %p323 = scmp.eq.s32.totalorder %s34, 1
    %p324 = por %p322, %p323
    %p326 = scmp.ne.s32.totalorder %s311, %s325
    %p327 = scmp.eq.s32.totalorder %s34, 0
    %p328 = por %p326, %p327
    %s330 = sadd.s32 %s329, 1
    %p333 = scmp.eq.s32.totalorder %s28, 1
    %p334 = scmp.ne.s32.totalorder %s329, %s331
    %p335 = scmp.eq.s32.totalorder %s28, 0
    %p336 = por %p334, %p335
    %p337 = scmp.ne.s32.totalorder %s329, %s331
    %p338 = scmp.eq.s32.totalorder %s33, 1
    %p339 = por %p337, %p338
    %p340 = scmp.ne.s32.totalorder %s331, %s332
    %p341 = scmp.eq.s32.totalorder %s33, 0
    %p342 = por %p340, %p341
    %p343 = scmp.ne.s32.totalorder %s331, %s332
    %p344 = scmp.eq.s32.totalorder %s34, 1
    %p345 = por %p343, %p344
    %p347 = scmp.ne.s32.totalorder %s332, %s346
    %p348 = scmp.eq.s32.totalorder %s34, 0
    %p349 = por %p347, %p348
    %s351 = sadd.s32 %s350, 1
    %p354 = scmp.eq.s32.totalorder %s28, 1
    %p355 = scmp.ne.s32.totalorder %s350, %s352
    %p356 = scmp.eq.s32.totalorder %s28, 0
    %p357 = por %p355, %p356
    %p358 = scmp.ne.s32.totalorder %s350, %s352
    %p359 = scmp.eq.s32.totalorder %s33, 1
    %p360 = por %p358, %p359
    %p361 = scmp.ne.s32.totalorder %s352, %s353
    %p362 = scmp.eq.s32.totalorder %s33, 0
    %p363 = por %p361, %p362
    %p364 = scmp.ne.s32.totalorder %s352, %s353
    %p365 = scmp.eq.s32.totalorder %s34, 1
    %p366 = por %p364, %p365
    %p368 = scmp.ne.s32.totalorder %s353, %s367
    %p369 = scmp.eq.s32.totalorder %s34, 0
    %p370 = por %p368, %p369
    %s372 = sadd.s32 %s371, 1
    %p375 = scmp.eq.s32.totalorder %s28, 1
    %p376 = scmp.ne.s32.totalorder %s371, %s373
    %p377 = scmp.eq.s32.totalorder %s28, 0
    %p378 = por %p376, %p377
    %p379 = scmp.ne.s32.totalorder %s371, %s373
    %p380 = scmp.eq.s32.totalorder %s33, 1
    %p381 = por %p379, %p380
    %p382 = scmp.ne.s32.totalorder %s373, %s374
    %p383 = scmp.eq.s32.totalorder %s33, 0
    %p384 = por %p382, %p383
    %p385 = scmp.ne.s32.totalorder %s373, %s374
    %p386 = scmp.eq.s32.totalorder %s34, 1
    %p387 = por %p385, %p386
    %p389 = scmp.ne.s32.totalorder %s374, %s388
    %p390 = scmp.eq.s32.totalorder %s34, 0
    %p391 = por %p389, %p390
    %s393 = sadd.s32 %s392, 1
    %p396 = scmp.eq.s32.totalorder %s28, 1
    %p397 = scmp.ne.s32.totalorder %s392, %s394
    %p398 = scmp.eq.s32.totalorder %s28, 0
    %p399 = por %p397, %p398
    %p400 = scmp.ne.s32.totalorder %s392, %s394
    %p401 = scmp.eq.s32.totalorder %s33, 1
    %p402 = por %p400, %p401
    %p403 = scmp.ne.s32.totalorder %s394, %s395
    %p404 = scmp.eq.s32.totalorder %s33, 0
    %p405 = por %p403, %p404
    %p406 = scmp.ne.s32.totalorder %s394, %s395
    %p407 = scmp.eq.s32.totalorder %s34, 1
    %p408 = por %p406, %p407
    %p410 = scmp.ne.s32.totalorder %s395, %s409
    %p411 = scmp.eq.s32.totalorder %s34, 0
    %p412 = por %p410, %p411
    %s414 = sadd.s32 %s413, 1
    %p417 = scmp.eq.s32.totalorder %s28, 1
    %p418 = scmp.ne.s32.totalorder %s413, %s415
    %p419 = scmp.eq.s32.totalorder %s28, 0
    %p420 = por %p418, %p419
    %p421 = scmp.ne.s32.totalorder %s413, %s415
    %p422 = scmp.eq.s32.totalorder %s33, 1
    %p423 = por %p421, %p422
    %p424 = scmp.ne.s32.totalorder %s415, %s416
    %p425 = scmp.eq.s32.totalorder %s33, 0
    %p426 = por %p424, %p425
    %p427 = scmp.ne.s32.totalorder %s415, %s416
    %p428 = scmp.eq.s32.totalorder %s34, 1
    %p429 = por %p427, %p428
    %p431 = scmp.ne.s32.totalorder %s416, %s430
    %p432 = scmp.eq.s32.totalorder %s34, 0
    %p433 = por %p431, %p432
    %s435 = sadd.s32 %s434, 1
    %p438 = scmp.eq.s32.totalorder %s28, 1
    %p439 = scmp.ne.s32.totalorder %s434, %s436
    %p440 = scmp.eq.s32.totalorder %s28, 0
    %p441 = por %p439, %p440
    %p442 = scmp.ne.s32.totalorder %s434, %s436
    %p443 = scmp.eq.s32.totalorder %s33, 1
    %p444 = por %p442, %p443
    %p445 = scmp.ne.s32.totalorder %s436, %s437
    %p446 = scmp.eq.s32.totalorder %s33, 0
    %p447 = por %p445, %p446
    %p448 = scmp.ne.s32.totalorder %s436, %s437
    %p449 = scmp.eq.s32.totalorder %s34, 1
    %p450 = por %p448, %p449
    %p452 = scmp.ne.s32.totalorder %s437, %s451
    %p453 = scmp.eq.s32.totalorder %s34, 0
    %p454 = por %p452, %p453
    %s456 = sadd.s32 %s455, 1
    %p459 = scmp.eq.s32.totalorder %s28, 1
    %p460 = scmp.ne.s32.totalorder %s455, %s457
    %p461 = scmp.eq.s32.totalorder %s28, 0
    %p462 = por %p460, %p461
    %p463 = scmp.ne.s32.totalorder %s455, %s457
    %p464 = scmp.eq.s32.totalorder %s33, 1
    %p465 = por %p463, %p464
    %p466 = scmp.ne.s32.totalorder %s457, %s458
    %p467 = scmp.eq.s32.totalorder %s33, 0
    %p468 = por %p466, %p467
    %p469 = scmp.ne.s32.totalorder %s457, %s458
    %p470 = scmp.eq.s32.totalorder %s34, 1
    %p471 = por %p469, %p470
    %p473 = scmp.ne.s32.totalorder %s458, %s472
    %p474 = scmp.eq.s32.totalorder %s34, 0
    %p475 = por %p473, %p474
    %s477 = sadd.s32 %s476, 1
    %p480 = scmp.eq.s32.totalorder %s28, 1
    %p481 = scmp.ne.s32.totalorder %s476, %s478
    %p482 = scmp.eq.s32.totalorder %s28, 0
    %p483 = por %p481, %p482
    %p484 = scmp.ne.s32.totalorder %s476, %s478
    %p485 = scmp.eq.s32.totalorder %s33, 1
    %p486 = por %p484, %p485
    %p487 = scmp.ne.s32.totalorder %s478, %s479
    %p488 = scmp.eq.s32.totalorder %s33, 0
    %p489 = por %p487, %p488
    %p490 = scmp.ne.s32.totalorder %s478, %s479
    %p491 = scmp.eq.s32.totalorder %s34, 1
    %p492 = por %p490, %p491
    %p494 = scmp.ne.s32.totalorder %s479, %s493
    %p495 = scmp.eq.s32.totalorder %s34, 0
    %p496 = por %p494, %p495
    %s498 = sadd.s32 %s497, 1
    %p501 = scmp.eq.s32.totalorder %s28, 1
    %p502 = scmp.ne.s32.totalorder %s497, %s499
    %p503 = scmp.eq.s32.totalorder %s28, 0
    %p504 = por %p502, %p503
    %p505 = scmp.ne.s32.totalorder %s497, %s499
    %p506 = scmp.eq.s32.totalorder %s33, 1
    %p507 = por %p505, %p506
    %p508 = scmp.ne.s32.totalorder %s499, %s500
    %p509 = scmp.eq.s32.totalorder %s33, 0
    %p510 = por %p508, %p509
    %p511 = scmp.ne.s32.totalorder %s499, %s500
    %p512 = scmp.eq.s32.totalorder %s34, 1
    %p513 = por %p511, %p512
    %p515 = scmp.ne.s32.totalorder %s500, %s514
    %p516 = scmp.eq.s32.totalorder %s34, 0
    %p517 = por %p515, %p516
    %s518 = ssub.s32 %s28, %s35
    %p519 = scmp.eq.s32.totalorder %s518, 0
    %s521 = sadd.s32 %s520, 1
    %s522 = scalar_select %p519, %s520, %s521
    %p525 = pneg %p519
    %p526 = scmp.eq.s32.totalorder %s28, 1
    %p527 = por %p525, %p526
    %p528 = scmp.ne.s32.totalorder %s520, %s523
    %p529 = scmp.eq.s32.totalorder %s28, 0
    %p530 = por %p528, %p529
    %p531 = scmp.ne.s32.totalorder %s520, %s523
    %p532 = scmp.eq.s32.totalorder %s33, 1
    %p533 = por %p531, %p532
    %p534 = scmp.ne.s32.totalorder %s523, %s524
    %p535 = scmp.eq.s32.totalorder %s33, 0
    %p536 = por %p534, %p535
    %p537 = scmp.ne.s32.totalorder %s523, %s524
    %p538 = scmp.eq.s32.totalorder %s34, 1
    %p539 = por %p537, %p538
    %p541 = scmp.ne.s32.totalorder %s524, %s540
    %p542 = scmp.eq.s32.totalorder %s34, 0
    %p543 = por %p541, %p542
    %p544 = scmp.le.s32.totalorder 1, %s28
    %p545 = scmp.lt.s32.totalorder %s28, 3
    %p546 = pnand %p544, %p545
    %p547 = pneg %p546
    // Predicated region
    $region9: #{seq2seq_forward.7} parent=5 // pred_check
      _
    $region10: #{seq2seq_forward.7} parent=5 // pred_check_branch
      %549 = sbr.rel (%p546) target = $region12
    $region11: #{seq2seq_forward.7} parent=5 // pred_region
      %s550 = ssub.s32 %s28, 1
      // Predicated region
      $region13: #{seq2seq_forward.7} parent=11 // pred_check
        %p551 = pneg %p153
      $region14: #{seq2seq_forward.7} parent=11 // pred_check_branch
        %553 = sbr.rel (%p551) target = $region16
      $region15: #{seq2seq_forward.7} parent=11 // pred_region
        _
      $region16: #{seq2seq_forward.7} parent=11 // pred_fallthru
        _
      // Predicated region
      $region17: #{seq2seq_forward.7} parent=11 // pred_check
        %p554 = pneg %p174
      $region18: #{seq2seq_forward.7} parent=11 // pred_check_branch
        %556 = sbr.rel (%p554) target = $region20
      $region19: #{seq2seq_forward.7} parent=11 // pred_region
        _
      $region20: #{seq2seq_forward.7} parent=11 // pred_fallthru
        _
      // Predicated region
      $region21: #{seq2seq_forward.7} parent=11 // pred_check
        %p557 = pneg %p195
      $region22: #{seq2seq_forward.7} parent=11 // pred_check_branch
        %559 = sbr.rel (%p557) target = $region24
      $region23: #{seq2seq_forward.7} parent=11 // pred_region
        _
      $region24: #{seq2seq_forward.7} parent=11 // pred_fallthru
        _
      // Predicated region
      $region25: #{seq2seq_forward.7} parent=11 // pred_check
        %p560 = pneg %p216
      $region26: #{seq2seq_forward.7} parent=11 // pred_check_branch
        %562 = sbr.rel (%p560) target = $region28
      $region27: #{seq2seq_forward.7} parent=11 // pred_region
        _
      $region28: #{seq2seq_forward.7} parent=11 // pred_fallthru
        _
      // Predicated region
      $region29: #{seq2seq_forward.7} parent=11 // pred_check
        %p563 = pneg %p237
      $region30: #{seq2seq_forward.7} parent=11 // pred_check_branch
        %565 = sbr.rel (%p563) target = $region32
      $region31: #{seq2seq_forward.7} parent=11 // pred_region
        _
      $region32: #{seq2seq_forward.7} parent=11 // pred_fallthru
        _
      // Predicated region
      $region33: #{seq2seq_forward.7} parent=11 // pred_check
        %p566 = pneg %p258
      $region34: #{seq2seq_forward.7} parent=11 // pred_check_branch
        %568 = sbr.rel (%p566) target = $region36
      $region35: #{seq2seq_forward.7} parent=11 // pred_region
        _
      $region36: #{seq2seq_forward.7} parent=11 // pred_fallthru
        _
      // Predicated region
      $region37: #{seq2seq_forward.7} parent=11 // pred_check
        %p569 = pneg %p279
      $region38: #{seq2seq_forward.7} parent=11 // pred_check_branch
        %571 = sbr.rel (%p569) target = $region40
      $region39: #{seq2seq_forward.7} parent=11 // pred_region
        _
      $region40: #{seq2seq_forward.7} parent=11 // pred_fallthru
        _
      // Predicated region
      $region41: #{seq2seq_forward.7} parent=11 // pred_check
        %p572 = pneg %p300
      $region42: #{seq2seq_forward.7} parent=11 // pred_check_branch
        %574 = sbr.rel (%p572) target = $region44
      $region43: #{seq2seq_forward.7} parent=11 // pred_region
        _
      $region44: #{seq2seq_forward.7} parent=11 // pred_fallthru
        _
      // Predicated region
      $region45: #{seq2seq_forward.7} parent=11 // pred_check
        %p575 = pneg %p321
      $region46: #{seq2seq_forward.7} parent=11 // pred_check_branch
        %577 = sbr.rel (%p575) target = $region48
      $region47: #{seq2seq_forward.7} parent=11 // pred_region
        _
      $region48: #{seq2seq_forward.7} parent=11 // pred_fallthru
        _
      // Predicated region
      $region49: #{seq2seq_forward.7} parent=11 // pred_check
        %p578 = pneg %p342
      $region50: #{seq2seq_forward.7} parent=11 // pred_check_branch
        %580 = sbr.rel (%p578) target = $region52
      $region51: #{seq2seq_forward.7} parent=11 // pred_region
        _
      $region52: #{seq2seq_forward.7} parent=11 // pred_fallthru
        _
      // Predicated region
      $region53: #{seq2seq_forward.7} parent=11 // pred_check
        %p581 = pneg %p363
      $region54: #{seq2seq_forward.7} parent=11 // pred_check_branch
        %583 = sbr.rel (%p581) target = $region56
      $region55: #{seq2seq_forward.7} parent=11 // pred_region
        _
      $region56: #{seq2seq_forward.7} parent=11 // pred_fallthru
        _
      // Predicated region
      $region57: #{seq2seq_forward.7} parent=11 // pred_check
        %p584 = pneg %p384
      $region58: #{seq2seq_forward.7} parent=11 // pred_check_branch
        %586 = sbr.rel (%p584) target = $region60
      $region59: #{seq2seq_forward.7} parent=11 // pred_region
        _
      $region60: #{seq2seq_forward.7} parent=11 // pred_fallthru
        _
      // Predicated region
      $region61: #{seq2seq_forward.7} parent=11 // pred_check
        %p587 = pneg %p405
      $region62: #{seq2seq_forward.7} parent=11 // pred_check_branch
        %589 = sbr.rel (%p587) target = $region64
      $region63: #{seq2seq_forward.7} parent=11 // pred_region
        _
      $region64: #{seq2seq_forward.7} parent=11 // pred_fallthru
        _
      // Predicated region
      $region65: #{seq2seq_forward.7} parent=11 // pred_check
        %p590 = pneg %p426
      $region66: #{seq2seq_forward.7} parent=11 // pred_check_branch
        %592 = sbr.rel (%p590) target = $region68
      $region67: #{seq2seq_forward.7} parent=11 // pred_region
        _
      $region68: #{seq2seq_forward.7} parent=11 // pred_fallthru
        _
      // Predicated region
      $region69: #{seq2seq_forward.7} parent=11 // pred_check
        %p593 = pneg %p447
      $region70: #{seq2seq_forward.7} parent=11 // pred_check_branch
        %595 = sbr.rel (%p593) target = $region72
      $region71: #{seq2seq_forward.7} parent=11 // pred_region
        _
      $region72: #{seq2seq_forward.7} parent=11 // pred_fallthru
        _
      // Predicated region
      $region73: #{seq2seq_forward.7} parent=11 // pred_check
        %p596 = pneg %p468
      $region74: #{seq2seq_forward.7} parent=11 // pred_check_branch
        %598 = sbr.rel (%p596) target = $region76
      $region75: #{seq2seq_forward.7} parent=11 // pred_region
        _
      $region76: #{seq2seq_forward.7} parent=11 // pred_fallthru
        _
      // Predicated region
      $region77: #{seq2seq_forward.7} parent=11 // pred_check
        %p599 = pneg %p489
      $region78: #{seq2seq_forward.7} parent=11 // pred_check_branch
        %601 = sbr.rel (%p599) target = $region80
      $region79: #{seq2seq_forward.7} parent=11 // pred_region
        _
      $region80: #{seq2seq_forward.7} parent=11 // pred_fallthru
        _
      // Predicated region
      $region81: #{seq2seq_forward.7} parent=11 // pred_check
        %p602 = pneg %p510
      $region82: #{seq2seq_forward.7} parent=11 // pred_check_branch
        %604 = sbr.rel (%p602) target = $region84
      $region83: #{seq2seq_forward.7} parent=11 // pred_region
        _
      $region84: #{seq2seq_forward.7} parent=11 // pred_fallthru
        _
    $region12: #{seq2seq_forward.7} parent=5 // pred_fallthru
      _
    %p605 = scmp.lt.s32.totalorder %s28, 2
    // Predicated region
    $region85: #{seq2seq_forward.7} parent=5 // pred_check
      %p606 = pneg %p605
    $region86: #{seq2seq_forward.7} parent=5 // pred_check_branch
      %608 = sbr.rel (%p606) target = $region88
    $region87: #{seq2seq_forward.7} parent=5 // pred_region
      // Predicated region
      $region89: #{seq2seq_forward.7} parent=87 // pred_check
        %p609 = pneg %p48
      $region90: #{seq2seq_forward.7} parent=87 // pred_check_branch
        %611 = sbr.rel (%p609) target = $region92
      $region91: #{seq2seq_forward.7} parent=87 // pred_region
        %p612 = scmp.lt.s32.totalorder %s28, 1
        %s613 = scalar_select %p612, %s28, 1
        %s614 = smul.addr %s613, 8
        %s615 = scalar_lea.vmem %s0, %s614
      $region92: #{seq2seq_forward.7} parent=87 // pred_fallthru
        _
      // Predicated region
      $region93: #{seq2seq_forward.7} parent=87 // pred_check
        %p616 = pneg %p74
      $region94: #{seq2seq_forward.7} parent=87 // pred_check_branch
        %618 = sbr.rel (%p616) target = $region96
      $region95: #{seq2seq_forward.7} parent=87 // pred_region
        %p619 = scmp.lt.s32.totalorder %s28, 1
        %s620 = scalar_select %p619, %s28, 1
        %s621 = smul.addr %s620, 8
        %s622 = scalar_lea.vmem %s1, %s621
      $region96: #{seq2seq_forward.7} parent=87 // pred_fallthru
        _
      // Predicated region
      $region97: #{seq2seq_forward.7} parent=87 // pred_check
        %p623 = pneg %p100
      $region98: #{seq2seq_forward.7} parent=87 // pred_check_branch
        %625 = sbr.rel (%p623) target = $region100
      $region99: #{seq2seq_forward.7} parent=87 // pred_region
        %p626 = scmp.lt.s32.totalorder %s28, 1
        %s627 = scalar_select %p626, %s28, 1
        %s628 = smul.addr %s627, 2
        %s629 = scalar_lea.vmem %s2, %s628
      $region100: #{seq2seq_forward.7} parent=87 // pred_fallthru
        _
      // Predicated region
      $region101: #{seq2seq_forward.7} parent=87 // pred_check
        %p630 = pneg %p126
      $region102: #{seq2seq_forward.7} parent=87 // pred_check_branch
        %632 = sbr.rel (%p630) target = $region104
      $region103: #{seq2seq_forward.7} parent=87 // pred_region
        %p633 = scmp.lt.s32.totalorder %s28, 1
        %s634 = scalar_select %p633, %s28, 1
        %s635 = smul.addr %s634, 2
        %s636 = scalar_lea.vmem %s3, %s635
      $region104: #{seq2seq_forward.7} parent=87 // pred_fallthru
        _
    $region88: #{seq2seq_forward.7} parent=5 // pred_fallthru
      _
    %p637 = scmp.le.s32.totalorder 1, %s28
    %p638 = scmp.lt.s32.totalorder %s28, 3
    %p639 = pnand %p637, %p638
    %p640 = pneg %p639
    // Predicated region
    $region105: #{seq2seq_forward.7} parent=5 // pred_check
      _
    $region106: #{seq2seq_forward.7} parent=5 // pred_check_branch
      %642 = sbr.rel (%p639) target = $region108
    $region107: #{seq2seq_forward.7} parent=5 // pred_region
      %s643 = ssub.s32 %s28, 1
      %p644 = scmp.lt.s32.totalorder %s33, 1
      %s645 = scalar_select %p644, %s33, 1
      %s646 = smul.addr %s645, 8
      %s647 = scalar_lea.vmem %s0, %s646
      %p648 = pneg %p54
      %p649 = pneg %p51
      %p650 = scmp.lt.s32.totalorder %s33, 1
      %s651 = scalar_select %p650, %s33, 1
      %s652 = smul.addr %s651, 8
      %s653 = scalar_lea.vmem %s1, %s652
      %p654 = pneg %p80
      %p655 = pneg %p77
      %p656 = scmp.lt.s32.totalorder %s33, 1
      %s657 = scalar_select %p656, %s33, 1
      %s658 = smul.addr %s657, 2
      %s659 = scalar_lea.vmem %s2, %s658
      %p660 = pneg %p106
      %p661 = pneg %p103
      %p662 = scmp.lt.s32.totalorder %s33, 1
      %s663 = scalar_select %p662, %s33, 1
      %s664 = smul.addr %s663, 2
      %s665 = scalar_lea.vmem %s3, %s664
      %p666 = pneg %p132
      %p667 = pneg %p129
      %p668 = pneg %p153
      %p669 = pneg %p150
      %p670 = pneg %p174
      %p671 = pneg %p171
      %p672 = pneg %p195
      %p673 = pneg %p192
      %p674 = pneg %p216
      %p675 = pneg %p213
      %p676 = pneg %p237
      %p677 = pneg %p234
      %p678 = pneg %p258
      %p679 = pneg %p255
      %p680 = pneg %p279
      %p681 = pneg %p276
      %p682 = pneg %p300
      %p683 = pneg %p297
      %p684 = pneg %p321
      %p685 = pneg %p318
      %p686 = pneg %p342
      %p687 = pneg %p339
      %p688 = pneg %p363
      %p689 = pneg %p360
      %p690 = pneg %p384
      %p691 = pneg %p381
      %p692 = pneg %p405
      %p693 = pneg %p402
      %p694 = pneg %p426
      %p695 = pneg %p423
      %p696 = pneg %p447
      %p697 = pneg %p444
      %p698 = pneg %p468
      %p699 = pneg %p465
      %p700 = pneg %p489
      %p701 = pneg %p486
      %p702 = pneg %p510
      %p703 = pneg %p507
      %p704 = pneg %p536
      %p705 = pneg %p533
      %p706 = scmp.lt.s32.totalorder %s33, 1
      %s707 = scalar_select %p706, %s33, 1
      %s708 = smul.addr %s707, 8
      %s709 = scalar_lea.vmem %s22, %s708
      %p710 = scmp.lt.s32.totalorder %s33, 1
      %s711 = scalar_select %p710, %s33, 1
      %s712 = smul.addr %s711, 8
      %s713 = scalar_lea.vmem %s0, %s712
      %p714 = scmp.lt.s32.totalorder %s33, 1
      %s715 = scalar_select %p714, %s33, 1
      %s716 = smul.addr %s715, 8
      %s717 = scalar_lea.vmem %s1, %s716
      %p718 = scmp.lt.s32.totalorder %s33, 1
      %s719 = scalar_select %p718, %s33, 1
      %s720 = smul.addr %s719, 2
      %s721 = scalar_lea.vmem %s2, %s720
      %p722 = scmp.lt.s32.totalorder %s33, 1
      %s723 = scalar_select %p722, %s33, 1
      %s724 = smul.addr %s723, 2
      %s725 = scalar_lea.vmem %s3, %s724
      %p726 = scmp.lt.s32.totalorder %s33, 1
      %s727 = scalar_select %p726, %s33, 1
      %s728 = smul.addr %s727, 8
      %s729 = scalar_lea.vmem %s22, %s728
      %v733 = vld [vmem:[%s713] sm:$0xff]
      %v734 = vld [vmem:[%s717] sm:$0xff]
      %v735 = vpack.c.bf16 %v733, %v733
      %v736 = vld [vmem:[%s4] sm:$0xf]
      %v737 = vld [vmem:[%s4 + $0x4] sm:$0xf]
      %v738 = vld [vmem:[%s4 + $0x8] sm:$0xf]
      %v739 = vld [vmem:[%s4 + $0xc] sm:$0xf]
      %v740 = vld [vmem:[%s5] sm:$0x1]
      %v742 = vperm.slane %v740, 0
      %v748 = vunpack.c.l.b16 %v736
      %v749 = vunpack.c.l.b16 %v737
      %v750 = vunpack.c.l.b16 %v738
      %v751 = vunpack.c.l.b16 %v739
      %v752 = vpack.c.b16 %v749, %v748
      %v753 = vpack.c.b16 %v751, %v750
      %vm756 = vcmask 261120
      %v758 = vsel %vm756, %v735, 0
      %760 = vmatpush.bf16.msra.mxu0 0
      %761 = vmatpush.bf16.msra.mxu0 0
      %762 = vmatpush.bf16.msra.mxu0 0
      %763 = vmatpush.bf16.msra.mxu0 0
      %764 = vmatpush.bf16.msra.mxu0 0
      %765 = vmatpush.bf16.msra.mxu0 0
      %766 = vmatpush.bf16.msra.mxu0 %v753
      %767 = vmatpush.bf16.msra.mxu0 %v752
      %768 = vmatmul.bf16.gmra.mxu0 %v758
      %v769 = vpop.f32.mrf.mxu0
      %v770 = vadd.f32 %v742, %v769
      %v771 = vpop.f32.mrf.mxu0
      %772 = vdwg.mxu0
      %v773 = vld [vmem:[%s721] sm:$0x3]
      %v774 = vpack.c.bf16 %v770, %v770
      %vm775 = vnez %v773
      %v777 = vunpack.c.l.b16 %v774
      %v778 = vpack.c.b16 %v777, %v777
      %779 = vrot.lane.b32.xlu0 %v778, 96
      %v780 = vpop.permute.xlu0 %779
      %vm781 = vcmask 64512
      %v783 = vsel %vm781, %v774, 0
      %v786 = vsel %vm781, %v780, 0
      %788 = vmatpush.bf16.xpose.msra.mxu0 0
      %789 = vmatpush.bf16.xpose.msra.mxu0 0
      %790 = vmatpush.bf16.xpose.msra.mxu0 0
      %791 = vmatpush.bf16.xpose.msra.mxu0 0
      %792 = vmatpush.bf16.xpose.msra.mxu0 0
      %793 = vmatpush.bf16.xpose.msra.mxu0 0
      %794 = vmatpush.bf16.xpose.msra.mxu0 0
      %795 = vmatpush.bf16.xpose.msra.mxu0 %v786
      %796 = vmatmul.bf16.gmra.mxu0 %v783
      %v797 = vpop.f32.mrf.mxu0
      %v798 = vadd.f32 0.0, %v797
      %v799 = vpop.f32.mrf.mxu0
      %800 = vdwg.mxu0
      %v801 = vmul.f32 %v798, 0.35355338
      %v802 = vsel %vm775, 16843009, 0
      %v803 = vunpack.c.0.s8 %v802
      %vm804 = vcmp.ne.s32.totalorder %v803, 0
      %v805 = vsel %vm804, %v801, -1e+10
      %v806 = vsel %vm781, %v805, -inf
      %807 = vmax.xlane.f32.xlu0 %v806
      %v808 = vpop.xlane.xlu0 %807
      %v809 = vsub.f32 %v805, %v808
      %v810 = vmul.f32 %v809, 1.442695
      %v811 = vpow.pop %v810
      %v812 = vsel %vm781, %v811, 0.0
      %813 = vadd.xlane.f32.xlu0 %v812
      %v814 = vpop.xlane.xlu0 %813
      %v815 = vrcp.pop %v814
      %v816 = vmul.f32 %v811, %v815
      %v817 = vpack.c.bf16 %v816, %v816
      %818 = vrot.lane.b32.xlu0 %v778, 64
      %v819 = vpop.permute.xlu0 %818
      %v821 = vsel %vm781, %v817, 0
      %vm823 = vcmask 1043456
      %v825 = vsel %vm823, %v819, 0
      %827 = vmatpush.bf16.msra.mxu0 0
      %828 = vmatpush.bf16.msra.mxu0 0
      %829 = vmatpush.bf16.msra.mxu0 0
      %830 = vmatpush.bf16.msra.mxu0 0
      %831 = vmatpush.bf16.msra.mxu0 0
      %832 = vmatpush.bf16.msra.mxu0 0
      %833 = vmatpush.bf16.msra.mxu0 0
      %834 = vmatpush.bf16.msra.mxu0 %v825
      %835 = vmatmul.bf16.gmra.mxu0 %v821
      %v836 = vpop.f32.mrf.mxu0
      %v837 = vadd.f32 0.0, %v836
      %v838 = vpop.f32.mrf.mxu0
      %839 = vdwg.mxu0
      %840 = vrot.lane.b32.xlu0 %v778, 120
      %v841 = vpop.permute.xlu0 %840
      %842 = vrot.lane.b32.xlu0 %v778, 88
      %v843 = vpop.permute.xlu0 %842
      %v845 = vsel %vm781, %v841, 0
      %v848 = vsel %vm781, %v843, 0
      %850 = vmatpush.bf16.xpose.msra.mxu0 0
      %851 = vmatpush.bf16.xpose.msra.mxu0 0
      %852 = vmatpush.bf16.xpose.msra.mxu0 0
      %853 = vmatpush.bf16.xpose.msra.mxu0 0
      %854 = vmatpush.bf16.xpose.msra.mxu0 0
      %855 = vmatpush.bf16.xpose.msra.mxu0 0
      %856 = vmatpush.bf16.xpose.msra.mxu0 0
      %857 = vmatpush.bf16.xpose.msra.mxu0 %v848
      %858 = vmatmul.bf16.gmra.mxu0 %v845
      %v859 = vpop.f32.mrf.mxu0
      %v860 = vadd.f32 0.0, %v859
      %v861 = vpop.f32.mrf.mxu0
      %862 = vdwg.mxu0
      %v863 = vmul.f32 %v860, 0.35355338
      %v864 = vsel %vm804, %v863, -1e+10
      %v865 = vsel %vm781, %v864, -inf
      %866 = vmax.xlane.f32.xlu0 %v865
      %v867 = vpop.xlane.xlu0 %866
      %v868 = vsub.f32 %v864, %v867
      %v869 = vmul.f32 %v868, 1.442695
      %v870 = vpow.pop %v869
      %v871 = vsel %vm781, %v870, 0.0
      %872 = vadd.xlane.f32.xlu0 %v871
      %v873 = vpop.xlane.xlu0 %872
      %v874 = vrcp.pop %v873
      %v875 = vmul.f32 %v870, %v874
      %v876 = vpack.c.bf16 %v875, %v875
      %877 = vrot.lane.b32.xlu0 %v778, 56
      %v878 = vpop.permute.xlu0 %877
      %v880 = vsel %vm781, %v876, 0
      %v883 = vsel %vm823, %v878, 0
      %885 = vmatpush.bf16.msra.mxu0 0
      %886 = vmatpush.bf16.msra.mxu0 0
      %887 = vmatpush.bf16.msra.mxu0 0
      %888 = vmatpush.bf16.msra.mxu0 0
      %889 = vmatpush.bf16.msra.mxu0 0
      %890 = vmatpush.bf16.msra.mxu0 0
      %891 = vmatpush.bf16.msra.mxu0 0
      %892 = vmatpush.bf16.msra.mxu0 %v883
      %893 = vmatmul.bf16.gmra.mxu0 %v880
      %v894 = vpop.f32.mrf.mxu0
      %v895 = vadd.f32 0.0, %v894
      %v896 = vpop.f32.mrf.mxu0
      %897 = vdwg.mxu0
      %898 = vrot.lane.b32.xlu0 %v778, 112
      %v899 = vpop.permute.xlu0 %898
      %900 = vrot.lane.b32.xlu0 %v778, 80
      %v901 = vpop.permute.xlu0 %900
      %v903 = vsel %vm781, %v899, 0
      %v906 = vsel %vm781, %v901, 0
      %908 = vmatpush.bf16.xpose.msra.mxu0 0
      %909 = vmatpush.bf16.xpose.msra.mxu0 0
      %910 = vmatpush.bf16.xpose.msra.mxu0 0
      %911 = vmatpush.bf16.xpose.msra.mxu0 0
      %912 = vmatpush.bf16.xpose.msra.mxu0 0
      %913 = vmatpush.bf16.xpose.msra.mxu0 0
      %914 = vmatpush.bf16.xpose.msra.mxu0 0
      %915 = vmatpush.bf16.xpose.msra.mxu0 %v906
      %916 = vmatmul.bf16.gmra.mxu0 %v903
      %v917 = vpop.f32.mrf.mxu0
      %v918 = vadd.f32 0.0, %v917
      %v919 = vpop.f32.mrf.mxu0
      %920 = vdwg.mxu0
      %v921 = vmul.f32 %v918, 0.35355338
      %v922 = vsel %vm804, %v921, -1e+10
      %v923 = vsel %vm781, %v922, -inf
      %924 = vmax.xlane.f32.xlu0 %v923
      %v925 = vpop.xlane.xlu0 %924
      %v926 = vsub.f32 %v922, %v925
      %v927 = vmul.f32 %v926, 1.442695
      %v928 = vpow.pop %v927
      %v929 = vsel %vm781, %v928, 0.0
      %930 = vadd.xlane.f32.xlu0 %v929
      %v931 = vpop.xlane.xlu0 %930
      %v932 = vrcp.pop %v931
      %v933 = vmul.f32 %v928, %v932
      %v934 = vpack.c.bf16 %v933, %v933
      %935 = vrot.lane.b32.xlu0 %v778, 48
      %v936 = vpop.permute.xlu0 %935
      %v938 = vsel %vm781, %v934, 0
      %v941 = vsel %vm823, %v936, 0
      %943 = vmatpush.bf16.msra.mxu0 0
      %944 = vmatpush.bf16.msra.mxu0 0
      %945 = vmatpush.bf16.msra.mxu0 0
      %946 = vmatpush.bf16.msra.mxu0 0
      %947 = vmatpush.bf16.msra.mxu0 0
      %948 = vmatpush.bf16.msra.mxu0 0
      %949 = vmatpush.bf16.msra.mxu0 0
      %950 = vmatpush.bf16.msra.mxu0 %v941
      %951 = vmatmul.bf16.gmra.mxu0 %v938
      %v952 = vpop.f32.mrf.mxu0
      %v953 = vadd.f32 0.0, %v952
      %v954 = vpop.f32.mrf.mxu0
      %955 = vdwg.mxu0
      %956 = vrot.lane.b32.xlu0 %v778, 104
      %v957 = vpop.permute.xlu0 %956
      %958 = vrot.lane.b32.xlu0 %v778, 72
      %v959 = vpop.permute.xlu0 %958
      %v961 = vsel %vm781, %v957, 0
      %v964 = vsel %vm781, %v959, 0
      %966 = vmatpush.bf16.xpose.msra.mxu0 0
      %967 = vmatpush.bf16.xpose.msra.mxu0 0
      %968 = vmatpush.bf16.xpose.msra.mxu0 0
      %969 = vmatpush.bf16.xpose.msra.mxu0 0
      %970 = vmatpush.bf16.xpose.msra.mxu0 0
      %971 = vmatpush.bf16.xpose.msra.mxu0 0
      %972 = vmatpush.bf16.xpose.msra.mxu0 0
      %973 = vmatpush.bf16.xpose.msra.mxu0 %v964
      %974 = vmatmul.bf16.gmra.mxu0 %v961
      %v975 = vpop.f32.mrf.mxu0
      %v976 = vadd.f32 0.0, %v975
      %v977 = vpop.f32.mrf.mxu0
      %978 = vdwg.mxu0
      %v979 = vmul.f32 %v976, 0.35355338
      %v980 = vsel %vm804, %v979, -1e+10
      %v981 = vsel %vm781, %v980, -inf
      %982 = vmax.xlane.f32.xlu0 %v981
      %v983 = vpop.xlane.xlu0 %982
      %v984 = vsub.f32 %v980, %v983
      %v985 = vmul.f32 %v984, 1.442695
      %v986 = vpow.pop %v985
      %v987 = vsel %vm781, %v986, 0.0
      %988 = vadd.xlane.f32.xlu0 %v987
      %v989 = vpop.xlane.xlu0 %988
      %v990 = vrcp.pop %v989
      %v991 = vmul.f32 %v986, %v990
      %v992 = vpack.c.bf16 %v991, %v991
      %993 = vrot.lane.b32.xlu0 %v778, 40
      %v994 = vpop.permute.xlu0 %993
      %v996 = vsel %vm781, %v992, 0
      %v999 = vsel %vm823, %v994, 0
      %1001 = vmatpush.bf16.msra.mxu0 0
      %1002 = vmatpush.bf16.msra.mxu0 0
      %1003 = vmatpush.bf16.msra.mxu0 0
      %1004 = vmatpush.bf16.msra.mxu0 0
      %1005 = vmatpush.bf16.msra.mxu0 0
      %1006 = vmatpush.bf16.msra.mxu0 0
      %1007 = vmatpush.bf16.msra.mxu0 0
      %1008 = vmatpush.bf16.msra.mxu0 %v999
      %1009 = vmatmul.bf16.gmra.mxu0 %v996
      %v1010 = vpop.f32.mrf.mxu0
      %v1011 = vadd.f32 0.0, %v1010
      %v1012 = vpop.f32.mrf.mxu0
      %1013 = vdwg.mxu0
      %1015 = vrot.lane.b32.xlu0 %v895, 8
      %v1016 = vpop.permute.xlu0 %1015
      %1019 = vrot.lane.b32.xlu0 %v953, 16
      %v1020 = vpop.permute.xlu0 %1019
      %1023 = vrot.lane.b32.xlu0 %v1011, 24
      %v1024 = vpop.permute.xlu0 %1023
      %v1026 = vsel %vm781, %v837, %v1016
      %vm1027 = vcmask 130048
      %v1028 = vsel %vm1027, %v1026, %v1020
      %vm1029 = vcmask 195584
      %v1030 = vsel %vm1029, %v1028, %v1024
      %v1031 = vpack.c.bf16 %v1030, %v1030
      %v1032 = vld [vmem:[%s6] sm:$0xf]
      %v1033 = vld [vmem:[%s6 + $0x4] sm:$0xf]
      %v1034 = vld [vmem:[%s6 + $0x8] sm:$0xf]
      %v1035 = vld [vmem:[%s6 + $0xc] sm:$0xf]
      %v1036 = vld [vmem:[%s7] sm:$0x1]
      %v1038 = vperm.slane %v1036, 0
      %v1044 = vunpack.c.l.b16 %v1032
      %v1045 = vunpack.c.l.b16 %v1033
      %v1046 = vunpack.c.l.b16 %v1034
      %v1047 = vunpack.c.l.b16 %v1035
      %v1048 = vpack.c.b16 %v1045, %v1044
      %v1049 = vpack.c.b16 %v1047, %v1046
      %v1053 = vsel %vm756, %v1031, 0
      %1055 = vmatpush.bf16.msra.mxu0 0
      %1056 = vmatpush.bf16.msra.mxu0 0
      %1057 = vmatpush.bf16.msra.mxu0 0
      %1058 = vmatpush.bf16.msra.mxu0 0
      %1059 = vmatpush.bf16.msra.mxu0 0
      %1060 = vmatpush.bf16.msra.mxu0 0
      %1061 = vmatpush.bf16.msra.mxu0 %v1049
      %1062 = vmatpush.bf16.msra.mxu0 %v1048
      %1063 = vmatmul.bf16.gmra.mxu0 %v1053
      %v1064 = vpop.f32.mrf.mxu0
      %v1065 = vadd.f32 %v1038, %v1064
      %v1066 = vpop.f32.mrf.mxu0
      %1067 = vdwg.mxu0
      %v1068 = vld [vmem:[%s8] sm:$0x1]
      %v1069 = vld [vmem:[%s9] sm:$0x1]
      %v1070 = vadd.f32 %v733, %v1065
      %v1071 = vsel %vm756, %v1070, 0.0
      %1072 = vadd.xlane.f32.xlu0 %v1071
      %v1073 = vpop.xlane.xlu0 %1072
      %v1074 = vrcp.pop 32.0
      %v1075 = vmul.f32 32.0, %v1074
      %v1076 = vsub.f32 1.0, %v1075
      %v1077 = vmul.f32 %v1074, %v1076
      %v1078 = vadd.f32 %v1074, %v1077
      %vm1079 = vweird.f32 %v1074
      %v1080 = vsel %vm1079, %v1074, %v1078
      %v1081 = vmul.f32 %v1073, %v1080
      %v1082 = vsub.f32 %v1070, %v1081
      %v1083 = vmul.f32 %v1082, %v1082
      %v1084 = vsel %vm756, %v1083, 0.0
      %1085 = vadd.xlane.f32.xlu0 %v1084
      %v1086 = vpop.xlane.xlu0 %1085
      %v1087 = vmul.f32 %v1086, %v1080
      %v1088 = vadd.f32 %v1087, 1e-05
      %v1089 = vrsqrt.pop %v1088
      %v1090 = vmul.f32 %v1089, %v1088
      %v1091 = vmul.f32 %v1090, %v1089
      %v1092 = vmul.f32 0.5, %v1091
      %v1093 = vsub.f32 1.5, %v1092
      %v1094 = vmul.f32 %v1089, %v1093
      %vm1095 = vweird.f32 %v1088
      %vm1096 = vweird.f32 %v1089
      %vm1097 = vmor %vm1095, %vm1096
      %v1098 = vsel %vm1097, %v1089, %v1094
      %v1099 = vmul.f32 %v1082, %v1098
      %v1101 = vperm.slane %v1068, 0
      %v1103 = vmul.f32 %v1099, %v1101
      %v1105 = vperm.slane %v1069, 0
      %v1107 = vadd.f32 %v1103, %v1105
      %v1108 = vpack.c.bf16 %v1107, %v1107
      %v1109 = vld [vmem:[%s10] sm:$0xf]
      %v1110 = vld [vmem:[%s10 + $0x4] sm:$0xf]
      %v1111 = vld [vmem:[%s10 + $0x8] sm:$0xf]
      %v1112 = vld [vmem:[%s10 + $0xc] sm:$0xf]
      %v1113 = vld [vmem:[%s11] sm:$0x1]
      %v1115 = vperm.slane %v1113, 0
      %v1121 = vunpack.c.l.b16 %v1109
      %v1122 = vunpack.c.l.b16 %v1110
      %v1123 = vunpack.c.l.b16 %v1111
      %v1124 = vunpack.c.l.b16 %v1112
      %v1125 = vpack.c.b16 %v1122, %v1121
      %v1126 = vpack.c.b16 %v1124, %v1123
      %v1130 = vsel %vm756, %v1108, 0
      %1132 = vmatpush.bf16.msra.mxu0 0
      %1133 = vmatpush.bf16.msra.mxu0 0
      %1134 = vmatpush.bf16.msra.mxu0 0
      %1135 = vmatpush.bf16.msra.mxu0 0
      %1136 = vmatpush.bf16.msra.mxu0 0
      %1137 = vmatpush.bf16.msra.mxu0 0
      %1138 = vmatpush.bf16.msra.mxu0 %v1126
      %1139 = vmatpush.bf16.msra.mxu0 %v1125
      %1140 = vmatmul.bf16.gmra.mxu0 %v1130
      %v1141 = vpop.f32.mrf.mxu0
      %v1142 = vadd.f32 %v1115, %v1141
      %v1143 = vpop.f32.mrf.mxu0
      %1144 = vdwg.mxu0
      %v1145 = vpack.c.bf16 %v734, %v734
      %v1147 = vsel %vm756, %v1145, 0
      %1149 = vmatpush.bf16.msra.mxu0 0
      %1150 = vmatpush.bf16.msra.mxu0 0
      %1151 = vmatpush.bf16.msra.mxu0 0
      %1152 = vmatpush.bf16.msra.mxu0 0
      %1153 = vmatpush.bf16.msra.mxu0 0
      %1154 = vmatpush.bf16.msra.mxu0 0
      %1155 = vmatpush.bf16.msra.mxu0 %v1126
      %1156 = vmatpush.bf16.msra.mxu0 %v1125
      %1157 = vmatmul.bf16.gmra.mxu0 %v1147
      %v1158 = vpop.f32.mrf.mxu0
      %v1159 = vadd.f32 %v1115, %v1158
      %v1160 = vpop.f32.mrf.mxu0
      %1161 = vdwg.mxu0
      %v1162 = vld [vmem:[%s725] sm:$0x3]
      %v1163 = vpack.c.bf16 %v1142, %v1142
      %v1164 = vpack.c.bf16 %v1159, %v1159
      %vm1165 = vnez %v1162
      %v1167 = vunpack.c.l.b16 %v1164
      %v1168 = vpack.c.b16 %v1167, %v1167
      %1169 = vrot.lane.b32.xlu0 %v1168, 96
      %v1170 = vpop.permute.xlu0 %1169
      %v1172 = vsel %vm781, %v1163, 0
      %v1175 = vsel %vm781, %v1170, 0
      %1177 = vmatpush.bf16.xpose.msra.mxu0 0
      %1178 = vmatpush.bf16.xpose.msra.mxu0 0
      %1179 = vmatpush.bf16.xpose.msra.mxu0 0
      %1180 = vmatpush.bf16.xpose.msra.mxu0 0
      %1181 = vmatpush.bf16.xpose.msra.mxu0 0
      %1182 = vmatpush.bf16.xpose.msra.mxu0 0
      %1183 = vmatpush.bf16.xpose.msra.mxu0 0
      %1184 = vmatpush.bf16.xpose.msra.mxu0 %v1175
      %1185 = vmatmul.bf16.gmra.mxu0 %v1172
      %v1186 = vpop.f32.mrf.mxu0
      %v1187 = vadd.f32 0.0, %v1186
      %v1188 = vpop.f32.mrf.mxu0
      %1189 = vdwg.mxu0
      %v1190 = vmul.f32 %v1187, 0.35355338
      %v1191 = vsel %vm1165, 16843009, 0
      %v1192 = vunpack.c.0.s8 %v1191
      %vm1193 = vcmp.ne.s32.totalorder %v1192, 0
      %v1194 = vsel %vm1193, %v1190, -1e+10
      %v1195 = vsel %vm781, %v1194, -inf
      %1196 = vmax.xlane.f32.xlu0 %v1195
      %v1197 = vpop.xlane.xlu0 %1196
      %v1198 = vsub.f32 %v1194, %v1197
      %v1199 = vmul.f32 %v1198, 1.442695
      %v1200 = vpow.pop %v1199
      %v1201 = vsel %vm781, %v1200, 0.0
      %1202 = vadd.xlane.f32.xlu0 %v1201
      %v1203 = vpop.xlane.xlu0 %1202
      %v1204 = vrcp.pop %v1203
      %v1205 = vmul.f32 %v1200, %v1204
      %v1206 = vpack.c.bf16 %v1205, %v1205
      %1207 = vrot.lane.b32.xlu0 %v1168, 64
      %v1208 = vpop.permute.xlu0 %1207
      %v1210 = vsel %vm781, %v1206, 0
      %v1213 = vsel %vm823, %v1208, 0
      %1215 = vmatpush.bf16.msra.mxu0 0
      %1216 = vmatpush.bf16.msra.mxu0 0
      %1217 = vmatpush.bf16.msra.mxu0 0
      %1218 = vmatpush.bf16.msra.mxu0 0
      %1219 = vmatpush.bf16.msra.mxu0 0
      %1220 = vmatpush.bf16.msra.mxu0 0
      %1221 = vmatpush.bf16.msra.mxu0 0
      %1222 = vmatpush.bf16.msra.mxu0 %v1213
      %1223 = vmatmul.bf16.gmra.mxu0 %v1210
      %v1224 = vpop.f32.mrf.mxu0
      %v1225 = vadd.f32 0.0, %v1224
      %v1226 = vpop.f32.mrf.mxu0
      %1227 = vdwg.mxu0
      %v1229 = vunpack.c.l.b16 %v1163
      %v1230 = vpack.c.b16 %v1229, %v1229
      %1231 = vrot.lane.b32.xlu0 %v1230, 120
      %v1232 = vpop.permute.xlu0 %1231
      %1233 = vrot.lane.b32.xlu0 %v1168, 88
      %v1234 = vpop.permute.xlu0 %1233
      %v1236 = vsel %vm781, %v1232, 0
      %v1239 = vsel %vm781, %v1234, 0
      %1241 = vmatpush.bf16.xpose.msra.mxu0 0
      %1242 = vmatpush.bf16.xpose.msra.mxu0 0
      %1243 = vmatpush.bf16.xpose.msra.mxu0 0
      %1244 = vmatpush.bf16.xpose.msra.mxu0 0
      %1245 = vmatpush.bf16.xpose.msra.mxu0 0
      %1246 = vmatpush.bf16.xpose.msra.mxu0 0
      %1247 = vmatpush.bf16.xpose.msra.mxu0 0
      %1248 = vmatpush.bf16.xpose.msra.mxu0 %v1239
      %1249 = vmatmul.bf16.gmra.mxu0 %v1236
      %v1250 = vpop.f32.mrf.mxu0
      %v1251 = vadd.f32 0.0, %v1250
      %v1252 = vpop.f32.mrf.mxu0
      %1253 = vdwg.mxu0
      %v1254 = vmul.f32 %v1251, 0.35355338
      %v1255 = vsel %vm1193, %v1254, -1e+10
      %v1256 = vsel %vm781, %v1255, -inf
      %1257 = vmax.xlane.f32.xlu0 %v1256
      %v1258 = vpop.xlane.xlu0 %1257
      %v1259 = vsub.f32 %v1255, %v1258
      %v1260 = vmul.f32 %v1259, 1.442695
      %v1261 = vpow.pop %v1260
      %v1262 = vsel %vm781, %v1261, 0.0
      %1263 = vadd.xlane.f32.xlu0 %v1262
      %v1264 = vpop.xlane.xlu0 %1263
      %v1265 = vrcp.pop %v1264
      %v1266 = vmul.f32 %v1261, %v1265
      %v1267 = vpack.c.bf16 %v1266, %v1266
      %1268 = vrot.lane.b32.xlu0 %v1168, 56
      %v1269 = vpop.permute.xlu0 %1268
      %v1271 = vsel %vm781, %v1267, 0
      %v1274 = vsel %vm823, %v1269, 0
      %1276 = vmatpush.bf16.msra.mxu0 0
      %1277 = vmatpush.bf16.msra.mxu0 0
      %1278 = vmatpush.bf16.msra.mxu0 0
      %1279 = vmatpush.bf16.msra.mxu0 0
      %1280 = vmatpush.bf16.msra.mxu0 0
      %1281 = vmatpush.bf16.msra.mxu0 0
      %1282 = vmatpush.bf16.msra.mxu0 0
      %1283 = vmatpush.bf16.msra.mxu0 %v1274
      %1284 = vmatmul.bf16.gmra.mxu0 %v1271
      %v1285 = vpop.f32.mrf.mxu0
      %v1286 = vadd.f32 0.0, %v1285
      %v1287 = vpop.f32.mrf.mxu0
      %1288 = vdwg.mxu0
      %1289 = vrot.lane.b32.xlu0 %v1230, 112
      %v1290 = vpop.permute.xlu0 %1289
      %1291 = vrot.lane.b32.xlu0 %v1168, 80
      %v1292 = vpop.permute.xlu0 %1291
      %v1294 = vsel %vm781, %v1290, 0
      %v1297 = vsel %vm781, %v1292, 0
      %1299 = vmatpush.bf16.xpose.msra.mxu0 0
      %1300 = vmatpush.bf16.xpose.msra.mxu0 0
      %1301 = vmatpush.bf16.xpose.msra.mxu0 0
      %1302 = vmatpush.bf16.xpose.msra.mxu0 0
      %1303 = vmatpush.bf16.xpose.msra.mxu0 0
      %1304 = vmatpush.bf16.xpose.msra.mxu0 0
      %1305 = vmatpush.bf16.xpose.msra.mxu0 0
      %1306 = vmatpush.bf16.xpose.msra.mxu0 %v1297
      %1307 = vmatmul.bf16.gmra.mxu0 %v1294
      %v1308 = vpop.f32.mrf.mxu0
      %v1309 = vadd.f32 0.0, %v1308
      %v1310 = vpop.f32.mrf.mxu0
      %1311 = vdwg.mxu0
      %v1312 = vmul.f32 %v1309, 0.35355338
      %v1313 = vsel %vm1193, %v1312, -1e+10
      %v1314 = vsel %vm781, %v1313, -inf
      %1315 = vmax.xlane.f32.xlu0 %v1314
      %v1316 = vpop.xlane.xlu0 %1315
      %v1317 = vsub.f32 %v1313, %v1316
      %v1318 = vmul.f32 %v1317, 1.442695
      %v1319 = vpow.pop %v1318
      %v1320 = vsel %vm781, %v1319, 0.0
      %1321 = vadd.xlane.f32.xlu0 %v1320
      %v1322 = vpop.xlane.xlu0 %1321
      %v1323 = vrcp.pop %v1322
      %v1324 = vmul.f32 %v1319, %v1323
      %v1325 = vpack.c.bf16 %v1324, %v1324
      %1326 = vrot.lane.b32.xlu0 %v1168, 48
      %v1327 = vpop.permute.xlu0 %1326
      %v1329 = vsel %vm781, %v1325, 0
      %v1332 = vsel %vm823, %v1327, 0
      %1334 = vmatpush.bf16.msra.mxu0 0
      %1335 = vmatpush.bf16.msra.mxu0 0
      %1336 = vmatpush.bf16.msra.mxu0 0
      %1337 = vmatpush.bf16.msra.mxu0 0
      %1338 = vmatpush.bf16.msra.mxu0 0
      %1339 = vmatpush.bf16.msra.mxu0 0
      %1340 = vmatpush.bf16.msra.mxu0 0
      %1341 = vmatpush.bf16.msra.mxu0 %v1332
      %1342 = vmatmul.bf16.gmra.mxu0 %v1329
      %v1343 = vpop.f32.mrf.mxu0
      %v1344 = vadd.f32 0.0, %v1343
      %v1345 = vpop.f32.mrf.mxu0
      %1346 = vdwg.mxu0
      %1347 = vrot.lane.b32.xlu0 %v1230, 104
      %v1348 = vpop.permute.xlu0 %1347
      %1349 = vrot.lane.b32.xlu0 %v1168, 72
      %v1350 = vpop.permute.xlu0 %1349
      %v1352 = vsel %vm781, %v1348, 0
      %v1355 = vsel %vm781, %v1350, 0
      %1357 = vmatpush.bf16.xpose.msra.mxu0 0
      %1358 = vmatpush.bf16.xpose.msra.mxu0 0
      %1359 = vmatpush.bf16.xpose.msra.mxu0 0
      %1360 = vmatpush.bf16.xpose.msra.mxu0 0
      %1361 = vmatpush.bf16.xpose.msra.mxu0 0
      %1362 = vmatpush.bf16.xpose.msra.mxu0 0
      %1363 = vmatpush.bf16.xpose.msra.mxu0 0
      %1364 = vmatpush.bf16.xpose.msra.mxu0 %v1355
      %1365 = vmatmul.bf16.gmra.mxu0 %v1352
      %v1366 = vpop.f32.mrf.mxu0
      %v1367 = vadd.f32 0.0, %v1366
      %v1368 = vpop.f32.mrf.mxu0
      %1369 = vdwg.mxu0
      %v1370 = vmul.f32 %v1367, 0.35355338
      %v1371 = vsel %vm1193, %v1370, -1e+10
      %v1372 = vsel %vm781, %v1371, -inf
      %1373 = vmax.xlane.f32.xlu0 %v1372
      %v1374 = vpop.xlane.xlu0 %1373
      %v1375 = vsub.f32 %v1371, %v1374
      %v1376 = vmul.f32 %v1375, 1.442695
      %v1377 = vpow.pop %v1376
      %v1378 = vsel %vm781, %v1377, 0.0
      %1379 = vadd.xlane.f32.xlu0 %v1378
      %v1380 = vpop.xlane.xlu0 %1379
      %v1381 = vrcp.pop %v1380
      %v1382 = vmul.f32 %v1377, %v1381
      %v1383 = vpack.c.bf16 %v1382, %v1382
      %1384 = vrot.lane.b32.xlu0 %v1168, 40
      %v1385 = vpop.permute.xlu0 %1384
      %v1387 = vsel %vm781, %v1383, 0
      %v1390 = vsel %vm823, %v1385, 0
      %1392 = vmatpush.bf16.msra.mxu0 0
      %1393 = vmatpush.bf16.msra.mxu0 0
      %1394 = vmatpush.bf16.msra.mxu0 0
      %1395 = vmatpush.bf16.msra.mxu0 0
      %1396 = vmatpush.bf16.msra.mxu0 0
      %1397 = vmatpush.bf16.msra.mxu0 0
      %1398 = vmatpush.bf16.msra.mxu0 0
      %1399 = vmatpush.bf16.msra.mxu0 %v1390
      %1400 = vmatmul.bf16.gmra.mxu0 %v1387
      %v1401 = vpop.f32.mrf.mxu0
      %v1402 = vadd.f32 0.0, %v1401
      %v1403 = vpop.f32.mrf.mxu0
      %1404 = vdwg.mxu0
      %1406 = vrot.lane.b32.xlu0 %v1286, 8
      %v1407 = vpop.permute.xlu0 %1406
      %1410 = vrot.lane.b32.xlu0 %v1344, 16
      %v1411 = vpop.permute.xlu0 %1410
      %1414 = vrot.lane.b32.xlu0 %v1402, 24
      %v1415 = vpop.permute.xlu0 %1414
      %v1417 = vsel %vm781, %v1225, %v1407
      %v1418 = vsel %vm1027, %v1417, %v1411
      %v1419 = vsel %vm1029, %v1418, %v1415
      %v1420 = vpack.c.bf16 %v1419, %v1419
      %v1421 = vld [vmem:[%s12] sm:$0xf]
      %v1422 = vld [vmem:[%s12 + $0x4] sm:$0xf]
      %v1423 = vld [vmem:[%s12 + $0x8] sm:$0xf]
      %v1424 = vld [vmem:[%s12 + $0xc] sm:$0xf]
      %v1425 = vld [vmem:[%s13] sm:$0x1]
      %v1427 = vperm.slane %v1425, 0
      %v1433 = vunpack.c.l.b16 %v1421
      %v1434 = vunpack.c.l.b16 %v1422
      %v1435 = vunpack.c.l.b16 %v1423
      %v1436 = vunpack.c.l.b16 %v1424
      %v1437 = vpack.c.b16 %v1434, %v1433
      %v1438 = vpack.c.b16 %v1436, %v1435
      %v1442 = vsel %vm756, %v1420, 0
      %1444 = vmatpush.bf16.msra.mxu0 0
      %1445 = vmatpush.bf16.msra.mxu0 0
      %1446 = vmatpush.bf16.msra.mxu0 0
      %1447 = vmatpush.bf16.msra.mxu0 0
      %1448 = vmatpush.bf16.msra.mxu0 0
      %1449 = vmatpush.bf16.msra.mxu0 0
      %1450 = vmatpush.bf16.msra.mxu0 %v1438
      %1451 = vmatpush.bf16.msra.mxu0 %v1437
      %1452 = vmatmul.bf16.gmra.mxu0 %v1442
      %v1453 = vpop.f32.mrf.mxu0
      %v1454 = vadd.f32 %v1427, %v1453
      %v1455 = vpop.f32.mrf.mxu0
      %1456 = vdwg.mxu0
      %v1457 = vld [vmem:[%s14] sm:$0x1]
      %v1458 = vld [vmem:[%s15] sm:$0x1]
      %v1459 = vadd.f32 %v1107, %v1454
      %v1460 = vsel %vm756, %v1459, 0.0
      %1461 = vadd.xlane.f32.xlu0 %v1460
      %v1462 = vpop.xlane.xlu0 %1461
      %v1463 = vmul.f32 %v1462, %v1080
      %v1464 = vsub.f32 %v1459, %v1463
      %v1465 = vmul.f32 %v1464, %v1464
      %v1466 = vsel %vm756, %v1465, 0.0
      %1467 = vadd.xlane.f32.xlu0 %v1466
      %v1468 = vpop.xlane.xlu0 %1467
      %v1469 = vmul.f32 %v1468, %v1080
      %v1470 = vadd.f32 %v1469, 1e-05
      %v1471 = vrsqrt.pop %v1470
      %v1472 = vmul.f32 %v1471, %v1470
      %v1473 = vmul.f32 %v1472, %v1471
      %v1474 = vmul.f32 0.5, %v1473
      %v1475 = vsub.f32 1.5, %v1474
      %v1476 = vmul.f32 %v1471, %v1475
      %vm1477 = vweird.f32 %v1470
      %vm1478 = vweird.f32 %v1471
      %vm1479 = vmor %vm1477, %vm1478
      %v1480 = vsel %vm1479, %v1471, %v1476
      %v1481 = vmul.f32 %v1464, %v1480
      %v1483 = vperm.slane %v1457, 0
      %v1485 = vmul.f32 %v1481, %v1483
      %v1487 = vperm.slane %v1458, 0
      %v1489 = vadd.f32 %v1485, %v1487
      %v1490 = vpack.c.bf16 %v1489, %v1489
      %v1491 = vld [vmem:[%s16] sm:$0xf]
      %v1492 = vld [vmem:[%s16 + $0x4] sm:$0xf]
      %v1493 = vld [vmem:[%s16 + $0x8] sm:$0xf]
      %v1494 = vld [vmem:[%s16 + $0xc] sm:$0xf]
      %v1495 = vld [vmem:[%s17] sm:$0x1]
      %v1497 = vperm.slane %v1495, 0
      %v1503 = vunpack.c.l.b16 %v1491
      %v1504 = vunpack.c.l.b16 %v1492
      %v1505 = vunpack.c.l.b16 %v1493
      %v1506 = vunpack.c.l.b16 %v1494
      %v1507 = vpack.c.b16 %v1504, %v1503
      %v1508 = vpack.c.b16 %v1506, %v1505
      %v1512 = vsel %vm756, %v1490, 0
      %1514 = vmatpush.bf16.msra.mxu0 0
      %1515 = vmatpush.bf16.msra.mxu0 0
      %1516 = vmatpush.bf16.msra.mxu0 0
      %1517 = vmatpush.bf16.msra.mxu0 0
      %1518 = vmatpush.bf16.msra.mxu0 0
      %1519 = vmatpush.bf16.msra.mxu0 0
      %1520 = vmatpush.bf16.msra.mxu0 %v1508
      %1521 = vmatpush.bf16.msra.mxu0 %v1507
      %1522 = vmatmul.bf16.gmra.mxu0 %v1512
      %v1523 = vpop.f32.mrf.mxu0
      %v1524 = vadd.f32 %v1497, %v1523
      %v1525 = vpop.f32.mrf.mxu0
      %1526 = vdwg.mxu0
      %v1527 = vmax.f32 %v1524, 0.0
      %v1528 = vpack.c.bf16 %v1527, %v1527
      %v1529 = vld [vmem:[%s18] sm:$0xf]
      %v1530 = vld [vmem:[%s18 + $0x4] sm:$0xf]
      %v1531 = vld [vmem:[%s18 + $0x8] sm:$0xf]
      %v1532 = vld [vmem:[%s18 + $0xc] sm:$0xf]
      %v1533 = vld [vmem:[%s18 + $0x10] sm:$0xf]
      %v1534 = vld [vmem:[%s18 + $0x14] sm:$0xf]
      %v1535 = vld [vmem:[%s18 + $0x18] sm:$0xf]
      %v1536 = vld [vmem:[%s18 + $0x1c] sm:$0xf]
      %v1537 = vld [vmem:[%s19] sm:$0x1]
      %v1539 = vperm.slane %v1537, 0
      %v1549 = vunpack.c.l.b16 %v1529
      %v1550 = vunpack.c.l.b16 %v1530
      %v1551 = vunpack.c.l.b16 %v1531
      %v1552 = vunpack.c.l.b16 %v1532
      %v1553 = vunpack.c.l.b16 %v1533
      %v1554 = vunpack.c.l.b16 %v1534
      %v1555 = vunpack.c.l.b16 %v1535
      %v1556 = vunpack.c.l.b16 %v1536
      %v1557 = vpack.c.b16 %v1550, %v1549
      %v1558 = vpack.c.b16 %v1552, %v1551
      %v1559 = vpack.c.b16 %v1554, %v1553
      %v1560 = vpack.c.b16 %v1556, %v1555
      %vm1565 = vcmask 523264
      %v1567 = vsel %vm1565, %v1528, 0
      %1569 = vmatpush.bf16.msra.mxu0 0
      %1570 = vmatpush.bf16.msra.mxu0 0
      %1571 = vmatpush.bf16.msra.mxu0 0
      %1572 = vmatpush.bf16.msra.mxu0 0
      %1573 = vmatpush.bf16.msra.mxu0 %v1560
      %1574 = vmatpush.bf16.msra.mxu0 %v1559
      %1575 = vmatpush.bf16.msra.mxu0 %v1558
      %1576 = vmatpush.bf16.msra.mxu0 %v1557
      %1577 = vmatmul.bf16.gmra.mxu0 %v1567
      %v1578 = vpop.f32.mrf.mxu0
      %v1579 = vadd.f32 %v1539, %v1578
      %v1580 = vpop.f32.mrf.mxu0
      %1581 = vdwg.mxu0
      %v1582 = vld [vmem:[%s20] sm:$0x1]
      %v1583 = vld [vmem:[%s21] sm:$0x1]
      %v1584 = vadd.f32 %v1489, %v1579
      %v1585 = vsel %vm756, %v1584, 0.0
      %1586 = vadd.xlane.f32.xlu0 %v1585
      %v1587 = vpop.xlane.xlu0 %1586
      %v1588 = vmul.f32 %v1587, %v1080
      %v1589 = vsub.f32 %v1584, %v1588
      %v1590 = vmul.f32 %v1589, %v1589
      %v1591 = vsel %vm756, %v1590, 0.0
      %1592 = vadd.xlane.f32.xlu0 %v1591
      %v1593 = vpop.xlane.xlu0 %1592
      %v1594 = vmul.f32 %v1593, %v1080
      %v1595 = vadd.f32 %v1594, 1e-05
      %v1596 = vrsqrt.pop %v1595
      %v1597 = vmul.f32 %v1596, %v1595
      %v1598 = vmul.f32 %v1597, %v1596
      %v1599 = vmul.f32 0.5, %v1598
      %v1600 = vsub.f32 1.5, %v1599
      %v1601 = vmul.f32 %v1596, %v1600
      %vm1602 = vweird.f32 %v1595
      %vm1603 = vweird.f32 %v1596
      %vm1604 = vmor %vm1602, %vm1603
      %v1605 = vsel %vm1604, %v1596, %v1601
      %v1606 = vmul.f32 %v1589, %v1605
      %v1608 = vperm.slane %v1582, 0
      %v1610 = vmul.f32 %v1606, %v1608
      %v1612 = vperm.slane %v1583, 0
      %v1614 = vadd.f32 %v1610, %v1612
      %1615 = vst.msk [vmem:[%s729] sm:$0xff] %vm756, %v1614
      %p1616 = scmp.lt.s32.totalorder %s33, 1
      %s1617 = scalar_select %p1616, %s33, 1
      %s1618 = smul.addr %s1617, 8
      %s1619 = scalar_lea.vmem %s22, %s1618
      // Predicated region
      $region109: #{seq2seq_forward.7} parent=107 // pred_check
        %p1620 = pneg %p533
      $region110: #{seq2seq_forward.7} parent=107 // pred_check_branch
        %1622 = sbr.rel (%p1620) target = $region112
      $region111: #{seq2seq_forward.7} parent=107 // pred_region
        _
      $region112: #{seq2seq_forward.7} parent=107 // pred_fallthru
        _
    $region108: #{seq2seq_forward.7} parent=5 // pred_fallthru
      _
    %p1623 = scmp.le.s32.totalorder 2, %s28
    // Predicated region
    $region113: #{seq2seq_forward.7} parent=5 // pred_check
      %p1624 = pneg %p1623
    $region114: #{seq2seq_forward.7} parent=5 // pred_check_branch
      %1626 = sbr.rel (%p1624) target = $region116
    $region115: #{seq2seq_forward.7} parent=5 // pred_region
      %s1627 = ssub.s32 %s28, 2
      // Predicated region
      $region117: #{seq2seq_forward.7} parent=115 // pred_check
        %p1628 = pneg %p539
      $region118: #{seq2seq_forward.7} parent=115 // pred_check_branch
        %1630 = sbr.rel (%p1628) target = $region120
      $region119: #{seq2seq_forward.7} parent=115 // pred_region
        %p1631 = scmp.lt.s32.totalorder %s34, 1
        %s1632 = scalar_select %p1631, %s34, 1
        %s1633 = smul.addr %s1632, 8
        %s1634 = scalar_lea.vmem %s22, %s1633
      $region120: #{seq2seq_forward.7} parent=115 // pred_fallthru
        _
    $region116: #{seq2seq_forward.7} parent=5 // pred_fallthru
      _
  $region6: #{seq2seq_forward.7} parent=0 // loop_footer
    %s32 = sadd.s32 1, %s28
  $region7: #{seq2seq_forward.7} parent=0 // loop_footer_branch
    %27 = sbr.rel target = $region3
  $region8: #{seq2seq_forward.7} parent=0 // loop_exit
    _

</llo_original>
